<compile_context>
chip_gen: v7x
topology: tpu7x:2x2x1
jax: 0.10.0
libtpu: 0.0.40
codegen_flags: <defaults>
</compile_context>

<pallas_src>
import numpy as np
import jax
import jax.numpy as jnp
from jax.experimental import pallas as pl
from jax.experimental.pallas import tpu as pltpu

# ---------------- constants matching MelSpectrogram_gpu ----------------
SR = 16000
N_FFT = 1024
WIN_LENGTH = 1024
HOP = 256
N_MELS = 24
N_FREQ = 1 + N_FFT // 2          # 513
F_USE = N_FFT // 2               # 512: Nyquist bin dropped (mel weight == 0)
M_PAD = 128                      # mel/output axis padded to a full lane group
TAIL = 16                        # lookahead hop rows per tile (>= N_FFT/HOP - 1)
TARGET_FRAMES = 512              # frames per grid step (MXU-friendly, ~12 MiB VMEM)


# ---------------- librosa.filters.mel (slaney) re-implementation ----------------
def _hz_to_mel(freqs):
    freqs = np.asarray(freqs, dtype=np.float64)
    f_sp = 200.0 / 3
    mels = freqs / f_sp
    min_log_hz = 1000.0
    min_log_mel = min_log_hz / f_sp
    logstep = np.log(6.4) / 27.0
    return np.where(freqs >= min_log_hz,
                    min_log_mel + np.log(np.maximum(freqs, 1e-12) / min_log_hz) / logstep,
                    mels)


def _mel_to_hz(mels):
    mels = np.asarray(mels, dtype=np.float64)
    f_sp = 200.0 / 3
    freqs = f_sp * mels
    min_log_hz = 1000.0
    min_log_mel = min_log_hz / f_sp
    logstep = np.log(6.4) / 27.0
    return np.where(mels >= min_log_mel,
                    min_log_hz * np.exp(logstep * (mels - min_log_mel)),
                    freqs)


def mel_filterbank(sr=SR, n_fft=N_FFT, n_mels=N_MELS, fmin=0.0, fmax=None):
    if fmax is None:
        fmax = sr / 2.0
    n_freq = 1 + n_fft // 2
    fftfreqs = np.linspace(0.0, sr / 2.0, n_freq)
    mel_pts = _mel_to_hz(np.linspace(_hz_to_mel(fmin), _hz_to_mel(fmax), n_mels + 2))
    fdiff = np.diff(mel_pts)
    ramps = mel_pts[:, None] - fftfreqs[None, :]
    weights = np.zeros((n_mels, n_freq), dtype=np.float64)
    for i in range(n_mels):
        lower = -ramps[i] / fdiff[i]
        upper = ramps[i + 2] / fdiff[i + 1]
        weights[i] = np.maximum(0.0, np.minimum(lower, upper))
    enorm = 2.0 / (mel_pts[2:n_mels + 2] - mel_pts[:n_mels])   # slaney norm
    weights *= enorm[:, None]
    return weights.astype(np.float32)                           # [n_mels, n_freq]


# ---------------- windowed real-DFT basis, cos|sin fused, Nyquist dropped ----------------
def dft_basis_combined():
    n = np.arange(N_FFT, dtype=np.float64)[:, None]              # [N_FFT, 1]
    f = np.arange(F_USE, dtype=np.float64)[None, :]              # [1, F_USE]
    ang = 2.0 * np.pi * n * f / N_FFT
    window = 0.5 * (1.0 - np.cos(2.0 * np.pi * np.arange(N_FFT) / N_FFT))  # hann, periodic
    wc = window[:, None] * np.cos(ang)
    ws = window[:, None] * (-np.sin(ang))
    return np.concatenate([wc, ws], axis=1).astype(np.float32)   # [N_FFT, 2*F_USE]


# ---------------- Pallas kernel: one (BB batches x TILE_T frames) tile ----------------
def uap_melspec_kernel(hop_ref, tail_ref, w_ref, melT_ref, o_ref):
    bb, tile_t, _ = hop_ref.shape
    # hop-row window covering this tile's frames: [BB, TILE_T + TAIL, HOP]
    hops = jnp.concatenate([hop_ref[...], tail_ref[...]], axis=1)
    w = w_ref[...]                                    # [N_FFT, 2*F_USE] bf16 ([cos | -sin])

    def lhs(p):                                       # p-th hop chunk of every frame
        return hops[:, p:p + tile_t, :].reshape(bb * tile_t, HOP)

    # hop-decomposed windowed real DFT: frame t = hops[t .. t+3] flattened
    acc = jnp.dot(lhs(0), w[:HOP, :], preferred_element_type=jnp.float32)
    for p in range(1, N_FFT // HOP):                  # 4 static accumulation steps
        acc = acc + jnp.dot(lhs(p), w[p * HOP:(p + 1) * HOP, :],
                            preferred_element_type=jnp.float32)

    re = acc[:, :F_USE]                               # lane-aligned split (512 % 128 == 0)
    im = acc[:, F_USE:]
    spec = jnp.sqrt(re * re + im * im)                # f32 magnitude

    # mel projection (mel_basis @ spec, expressed as spec @ mel_basis.T), bf16 MXU / f32 acc
    mel = jnp.dot(spec.astype(jnp.bfloat16), melT_ref[...],
                  preferred_element_type=jnp.float32)     # [BB*TILE_T, M_PAD]

    # power_to_db; padded mel lanes are exactly 0 -> constant -100 dB, sliced in glue
    o_ref[...] = (20.0 * jnp.log10(mel + 1e-5)).reshape(bb, tile_t, M_PAD)


# ---------------- glue: reflect pad + hop blocking + pallas_call + normalization ----------------
def _round_up(v, m):
    return ((v + m - 1) // m) * m


def uap_forward(x, uap, w_comb, mel_T):
    """x: [B, L] float32, uap: [L] float32 -> [B, N_MELS, T] float32, T = 1 + L // HOP."""
    B, L = x.shape
    assert L > N_FFT // 2, "torch.stft(center=True) reflect pad needs L > n_fft // 2"

    # UAP add (exact, pre-framing), then bf16 before any expansion
    adv = (x + uap[None, :]).astype(jnp.bfloat16)

    pad = N_FFT // 2
    xp = jnp.pad(adv, ((0, 0), (pad, pad)), mode="reflect")       # [B, Lp]
    Lp = L + N_FFT
    T = 1 + (Lp - N_FFT) // HOP                                   # == 1 + L // HOP

    # ---- tile choice: ~TARGET_FRAMES frames per grid step; >= 2 steps when B >= 2 (v7x)
    TILE_T = min(TARGET_FRAMES, _round_up(T, TAIL))               # multiple of TAIL (=16)
    T_pad = _round_up(T, TILE_T)
    n_tiles = T_pad // TILE_T
    BB = max(1, min(B, TARGET_FRAMES // TILE_T))                  # batches per grid step
    if B >= 2 and (-(-B // BB)) * n_tiles < 2:
        BB = max(1, B // 2)
    B_pad = _round_up(B, BB)

    # non-overlapping hop blocks [B_pad, T_pad + TAIL, HOP]; zero-padded rows only
    # ever feed frames >= T (sliced away below), real frames see only real samples.
    n_hops = T_pad + TAIL
    xp = jnp.pad(xp, ((0, 0), (0, n_hops * HOP - Lp)))
    hops = xp.reshape(B, n_hops, HOP)
    if B_pad != B:
        hops = jnp.pad(hops, ((0, B_pad - B), (0, 0), (0, 0)))

    db_pad = pl.pallas_call(
        uap_melspec_kernel,
        out_shape=jax.ShapeDtypeStruct((B_pad, T_pad, M_PAD), jnp.float32),
        grid=(B_pad // BB, n_tiles),
        in_specs=[
            # main hop rows of the tile (streamed, auto double-buffered)
            pl.BlockSpec((BB, TILE_T, HOP), lambda b, i: (b, i, 0)),
            # 16-row lookahead "tail": frames near the tile edge need hops t..t+3
            pl.BlockSpec((BB, TAIL, HOP),
                         lambda b, i: (b, (i + 1) * (TILE_T // TAIL), 0)),
            # VMEM-resident weights (constant index maps)
            pl.BlockSpec((N_FFT, 2 * F_USE), lambda b, i: (0, 0)),
            pl.BlockSpec((F_USE, M_PAD), lambda b, i: (0, 0)),
        ],
        out_specs=pl.BlockSpec((BB, TILE_T, M_PAD), lambda b, i: (b, i, 0)),
        compiler_params=pltpu.CompilerParams(
            dimension_semantics=("parallel", "parallel")),
    )(hops, hops, w_comb, mel_T)

    # valid region -> torch layout [B, n_mels, T]
    db = db_pad[:B, :T, :N_MELS].transpose(0, 2, 1)

    # epilogue: global mean / unbiased std normalization (touches only B*T*24 floats)
    n = db.size
    mean = jnp.mean(db)
    var = jnp.sum((db - mean) * (db - mean)) / (n - 1)
    return (db - mean) / jnp.sqrt(var)


if __name__ == "__main__":
    B, L = 2, 4096                                   # small waveform batch

    key = jax.random.PRNGKey(0)
    x = jax.random.normal(key, (B, L), dtype=jnp.float32)

    # UAP parameter: module __init__ uses torch.zeros(shape)
    uap = jnp.zeros((L,), dtype=jnp.float32)

    # constant (buffer-like) weights, built deterministically in-script
    w_np = dft_basis_combined()                      # [N_FFT, 2*F_USE] hann-windowed [cos|-sin]
    mel_np = mel_filterbank()                        # [N_MELS, N_FREQ]
    melT_np = np.zeros((F_USE, M_PAD), dtype=np.float32)
    melT_np[:, :N_MELS] = mel_np[:, :F_USE].T        # Nyquist column dropped (weight == 0)

    w_comb = jnp.asarray(w_np, dtype=jnp.bfloat16)   # bf16 MXU operands
    mel_T = jnp.asarray(melT_np, dtype=jnp.bfloat16)

    fwd = jax.jit(uap_forward)
    out = jax.block_until_ready(fwd(x, uap, w_comb, mel_T))

    assert out.shape == (B, N_MELS, 1 + L // HOP)
    assert bool(jnp.all(jnp.isfinite(out)))
    print("KERNEL_OK")
</pallas_src>

<mosaic_0001>
module attributes {stable_mosaic.version = 11 : i64} {
  func.func @uap_melspec_kernel(%arg0: i32, %arg1: i32, %arg2: memref<1x32x256xbf16, #tpu.memory_space<vmem>>, %arg3: memref<1x16x256xbf16, #tpu.memory_space<vmem>>, %arg4: memref<1024x1024xbf16, #tpu.memory_space<vmem>>, %arg5: memref<512x128xbf16, #tpu.memory_space<vmem>>, %arg6: memref<1x32x128xf32, #tpu.memory_space<vmem>>) attributes {dimension_semantics = [#tpu.dimension_semantics<parallel>, #tpu.dimension_semantics<parallel>], iteration_bounds = array<i64: 2, 1>, scalar_prefetch = 0 : i64, scratch_operands = 0 : i64, tpu.core_type = #tpu.core_type<tc>, window_params = [{transform_indices = @transform_0, window_bounds = array<i64: 1, 32, 256>}, {transform_indices = @transform_1, window_bounds = array<i64: 1, 16, 256>}, {pipeline_mode = #tpu.pipeline_mode<synchronous>, transform_indices = @transform_2, window_bounds = array<i64: 1024, 1024>}, {pipeline_mode = #tpu.pipeline_mode<synchronous>, transform_indices = @transform_3, window_bounds = array<i64: 512, 128>}, {transform_indices = @transform_4, window_bounds = array<i64: 1, 32, 128>}]} {
    %c0 = arith.constant 0 : index
    %c0_0 = arith.constant 0 : index
    %c0_1 = arith.constant 0 : index
    %0 = vector.load %arg2[%c0, %c0_0, %c0_1] : memref<1x32x256xbf16, #tpu.memory_space<vmem>>, vector<1x32x256xbf16>
    %c0_2 = arith.constant 0 : index
    %c0_3 = arith.constant 0 : index
    %c0_4 = arith.constant 0 : index
    %1 = vector.load %arg3[%c0_2, %c0_3, %c0_4] : memref<1x16x256xbf16, #tpu.memory_space<vmem>>, vector<1x16x256xbf16>
    %2 = tpu.concatenate %0, %1 in 1 : vector<1x32x256xbf16>, vector<1x16x256xbf16> -> vector<1x48x256xbf16>
    %c0_5 = arith.constant 0 : index
    %c0_6 = arith.constant 0 : index
    %3 = vector.load %arg4[%c0_5, %c0_6] : memref<1024x1024xbf16, #tpu.memory_space<vmem>>, vector<1024x1024xbf16>
    %4 = vector.extract_strided_slice %2 {offsets = [0, 0, 0], sizes = [1, 32, 256], strides = [1, 1, 1]} : vector<1x48x256xbf16> to vector<1x32x256xbf16>
    %5 = vector.shape_cast %4 : vector<1x32x256xbf16> to vector<32x256xbf16>
    %6 = vector.extract_strided_slice %3 {offsets = [0, 0], sizes = [256, 1024], strides = [1, 1]} : vector<1024x1024xbf16> to vector<256x1024xbf16>
    %cst = arith.constant dense<0.000000e+00> : vector<32x1024xf32>
    %7 = tpu.matmul %5, %6, %cst {dimension_numbers = #tpu.dot_dimension_numbers<[1], [0], [0], [1], [0, 0, 1, 1], [], []>} : vector<32x256xbf16>, vector<256x1024xbf16>, vector<32x1024xf32> -> vector<32x1024xf32>
    %8 = vector.extract_strided_slice %2 {offsets = [0, 1, 0], sizes = [1, 32, 256], strides = [1, 1, 1]} : vector<1x48x256xbf16> to vector<1x32x256xbf16>
    %9 = vector.shape_cast %8 : vector<1x32x256xbf16> to vector<32x256xbf16>
    %10 = vector.extract_strided_slice %3 {offsets = [256, 0], sizes = [256, 1024], strides = [1, 1]} : vector<1024x1024xbf16> to vector<256x1024xbf16>
    %cst_7 = arith.constant dense<0.000000e+00> : vector<32x1024xf32>
    %11 = tpu.matmul %9, %10, %cst_7 {dimension_numbers = #tpu.dot_dimension_numbers<[1], [0], [0], [1], [0, 0, 1, 1], [], []>} : vector<32x256xbf16>, vector<256x1024xbf16>, vector<32x1024xf32> -> vector<32x1024xf32>
    %12 = arith.addf %7, %11 : vector<32x1024xf32>
    %13 = vector.extract_strided_slice %2 {offsets = [0, 2, 0], sizes = [1, 32, 256], strides = [1, 1, 1]} : vector<1x48x256xbf16> to vector<1x32x256xbf16>
    %14 = vector.shape_cast %13 : vector<1x32x256xbf16> to vector<32x256xbf16>
    %15 = vector.extract_strided_slice %3 {offsets = [512, 0], sizes = [256, 1024], strides = [1, 1]} : vector<1024x1024xbf16> to vector<256x1024xbf16>
    %cst_8 = arith.constant dense<0.000000e+00> : vector<32x1024xf32>
    %16 = tpu.matmul %14, %15, %cst_8 {dimension_numbers = #tpu.dot_dimension_numbers<[1], [0], [0], [1], [0, 0, 1, 1], [], []>} : vector<32x256xbf16>, vector<256x1024xbf16>, vector<32x1024xf32> -> vector<32x1024xf32>
    %17 = arith.addf %12, %16 : vector<32x1024xf32>
    %18 = vector.extract_strided_slice %2 {offsets = [0, 3, 0], sizes = [1, 32, 256], strides = [1, 1, 1]} : vector<1x48x256xbf16> to vector<1x32x256xbf16>
    %19 = vector.shape_cast %18 : vector<1x32x256xbf16> to vector<32x256xbf16>
    %20 = vector.extract_strided_slice %3 {offsets = [768, 0], sizes = [256, 1024], strides = [1, 1]} : vector<1024x1024xbf16> to vector<256x1024xbf16>
    %cst_9 = arith.constant dense<0.000000e+00> : vector<32x1024xf32>
    %21 = tpu.matmul %19, %20, %cst_9 {dimension_numbers = #tpu.dot_dimension_numbers<[1], [0], [0], [1], [0, 0, 1, 1], [], []>} : vector<32x256xbf16>, vector<256x1024xbf16>, vector<32x1024xf32> -> vector<32x1024xf32>
    %22 = arith.addf %17, %21 : vector<32x1024xf32>
    %23 = vector.extract_strided_slice %22 {offsets = [0, 0], sizes = [32, 512], strides = [1, 1]} : vector<32x1024xf32> to vector<32x512xf32>
    %24 = vector.extract_strided_slice %22 {offsets = [0, 512], sizes = [32, 512], strides = [1, 1]} : vector<32x1024xf32> to vector<32x512xf32>
    %25 = arith.mulf %23, %23 : vector<32x512xf32>
    %26 = arith.mulf %24, %24 : vector<32x512xf32>
    %27 = arith.addf %25, %26 : vector<32x512xf32>
    %28 = math.sqrt %27 : vector<32x512xf32>
    %29 = arith.truncf %28 : vector<32x512xf32> to vector<32x512xbf16>
    %c0_10 = arith.constant 0 : index
    %c0_11 = arith.constant 0 : index
    %30 = vector.load %arg5[%c0_10, %c0_11] : memref<512x128xbf16, #tpu.memory_space<vmem>>, vector<512x128xbf16>
    %cst_12 = arith.constant dense<0.000000e+00> : vector<32x128xf32>
    %31 = tpu.matmul %29, %30, %cst_12 {dimension_numbers = #tpu.dot_dimension_numbers<[1], [0], [0], [1], [0, 0, 1, 1], [], []>} : vector<32x512xbf16>, vector<512x128xbf16>, vector<32x128xf32> -> vector<32x128xf32>
    %cst_13 = arith.constant 9.99999974E-6 : f32
    %32 = vector.broadcast %cst_13 : f32 to vector<32x128xf32>
    %33 = arith.addf %31, %32 : vector<32x128xf32>
    %34 = math.log %33 : vector<32x128xf32>
    %cst_14 = arith.constant 0.434294492 : f32
    %35 = vector.broadcast %cst_14 : f32 to vector<32x128xf32>
    %36 = arith.mulf %34, %35 : vector<32x128xf32>
    %cst_15 = arith.constant 2.000000e+01 : f32
    %37 = vector.broadcast %cst_15 : f32 to vector<32x128xf32>
    %38 = arith.mulf %37, %36 : vector<32x128xf32>
    %39 = vector.shape_cast %38 : vector<32x128xf32> to vector<1x32x128xf32>
    %c0_16 = arith.constant 0 : index
    %c0_17 = arith.constant 0 : index
    %c0_18 = arith.constant 0 : index
    %40 = vector.load %arg6[%c0_16, %c0_17, %c0_18] : memref<1x32x128xf32, #tpu.memory_space<vmem>>, vector<1x32x128xf32>
    tpu.vector_store %arg6[%c0_16, %c0_17, %c0_18], %39 {strides = array<i32>} : memref<1x32x128xf32, #tpu.memory_space<vmem>>, vector<1x32x128xf32>,
    return
  }
  func.func @transform_0(%arg0: i32, %arg1: i32) -> (i32, i32, i32) {
    %c0_i32 = arith.constant 0 : i32
    %c0_i32_0 = arith.constant 0 : i32
    return %arg0, %arg1, %c0_i32 : i32, i32, i32
  }
  func.func @transform_1(%arg0: i32, %arg1: i32) -> (i32, i32, i32) {
    %c1_i32 = arith.constant 1 : i32
    %0 = arith.addi %arg1, %c1_i32 : i32
    %c2_i32 = arith.constant 2 : i32
    %1 = arith.muli %0, %c2_i32 : i32
    %c0_i32 = arith.constant 0 : i32
    %c0_i32_0 = arith.constant 0 : i32
    return %arg0, %1, %c0_i32 : i32, i32, i32
  }
  func.func @transform_2(%arg0: i32, %arg1: i32) -> (i32, i32) {
    %c0_i32 = arith.constant 0 : i32
    %c0_i32_0 = arith.constant 0 : i32
    %c0_i32_1 = arith.constant 0 : i32
    return %c0_i32, %c0_i32_0 : i32, i32
  }
  func.func @transform_3(%arg0: i32, %arg1: i32) -> (i32, i32) {
    %c0_i32 = arith.constant 0 : i32
    %c0_i32_0 = arith.constant 0 : i32
    %c0_i32_1 = arith.constant 0 : i32
    return %c0_i32, %c0_i32_0 : i32, i32
  }
  func.func @transform_4(%arg0: i32, %arg1: i32) -> (i32, i32, i32) {
    %c0_i32 = arith.constant 0 : i32
    %c0_i32_0 = arith.constant 0 : i32
    return %arg0, %arg1, %c0_i32 : i32, i32, i32
  }
}

</mosaic_0001>

<llo_original>
// kernel: uap_forward.1
$region0: #{uap_forward.1}
  #allocation0 [shape = 'u32[]', space=smem, size = 0x4, offset = 0x4, fixed_abs, tag = 'smem constant byte address 0x4 - core index']
  #allocation1 [shape = 'u32[144,128]{1,0:T(1,128)}', space=vmem, size = 0x12000, scoped, tag = 'internal scratch']
  %s0 = inlined_call_operand.vmem [shape: bf16[2,48,256], index: 0, kind: input, shape index: {}, may-alias: {0,1}]
  %s1 = inlined_call_operand.vmem [shape: bf16[2,48,256], index: 1, kind: input, shape index: {}, may-alias: {0,1}]
  %s2 = inlined_call_operand.hbm [shape: bf16[1024,1024], index: 2, kind: input, shape index: {}]
  %s3 = inlined_call_operand.hbm [shape: bf16[512,128], index: 3, kind: input, shape index: {}]
  %s4 = inlined_call_operand.vmem [shape: f32[2,32,128], index: 4, kind: output, shape index: {}]
  %s5 = sld [smem:[#allocation0]]
  $region57: #{uap_forward.1} parent=0
    _
  %s7 = ssub.s32 1, %s5
  %s8 = scalar_select 0, %s7, %s5
  $region1: #{uap_forward.1} parent=0
    #allocation2 [shape = 'u8[2097152]{0}', space=vmem, size = 0x200000, scoped, tag = 'input window, operand 2, single buffered']
    #allocation3 [shape = 's32[2]{0}', space=sflag, size = 0x8, scoped, tag = 'scoped memory for uap_forward.1']
    #allocation4 [shape = 'u8[131072]{0}', space=vmem, size = 0x20000, scoped, tag = 'input window, operand 3, single buffered']
    #allocation5 [shape = 's32[1]{0}', space=sflag, size = 0x4, scoped, tag = 'scoped memory for uap_forward.1']
    %9 = vsyncpa [#allocation3], 0
    %10 = vsyncpa [#allocation5], 0
    loop: start=0, step=1, limit=4
    $region2: #{uap_forward.1} parent=1 // loop_pre_header
      _
    $region3: #{uap_forward.1} parent=1 // loop_header
      %s12 = sphi 0, %s16
      %p13 = scmp.ge.s32.totalorder %s12, 4
      %s19 = sphi 0, %s31
      %s20 = sphi 0, %s27
      %s21 = sphi 0, %s19
      %s22 = sphi 0, %s20
      %s23 = sphi 0, %s21
      %s24 = sphi 0, %s22
      %s36 = sphi 0, %s38
      %s39 = sphi 0, %s36
      %s40 = sphi 0, %s39
      %s56 = sphi 0, %s40
      %s68 = sphi 0, %s70
      %s71 = sphi 0, %s68
      %s72 = sphi 0, %s71
      %s88 = sphi 0, %s72
      %s92 = sphi 0, %s92
      %s94 = sphi 0, %s92
      %s95 = sphi 0, %s94
      %s109 = sphi 0, %s95
      %s113 = sphi 0, %s113
      %s115 = sphi 0, %s113
      %s116 = sphi 0, %s115
      %s130 = sphi 0, %s116
      %s138 = sphi 0, %s140
      %s141 = sphi 0, %s138
      %s142 = sphi 0, %s141
      %s158 = sphi 0, %s142
    $region4: #{uap_forward.1} parent=1 // loop_header_branch
      %15 = sbr.rel (%p13) target = $region8
    $region5: #{uap_forward.1} parent=1 // loop_body
      %s17 = ssub.s32 %s12, 1
      %s18 = ssub.s32 %s12, 2
      %s25 = sadd.s32 1, %s20
      %p26 = scmp.ge.s32.totalorder %s25, 1
      %s27 = scalar_select %p26, 0, %s25
      %s28 = sadd.s32 1, %s19
      %s29 = scalar_select %p26, %s28, %s19
      %p30 = scmp.ge.s32.totalorder %s29, 2
      %s31 = scalar_select %p30, 0, %s29
      %s32 = ssub.s32 %s19, %s31
      %s33 = ssub.s32 %s20, %s27
      %s34 = sor.u32 %s32, %s33
      %p35 = scmp.eq.s32.totalorder %s34, 0
      %s37 = sadd.s32 %s36, 1
      %s38 = scalar_select %p35, %s36, %s37
      %p41 = pneg %p35
      %p42 = scmp.eq.s32.totalorder %s12, 1
      %p43 = por %p41, %p42
      %p44 = scmp.ne.s32.totalorder %s36, %s39
      %p45 = scmp.eq.s32.totalorder %s12, 0
      %p46 = por %p44, %p45
      %p47 = scmp.ne.s32.totalorder %s36, %s39
      %p48 = scmp.eq.s32.totalorder %s17, 1
      %p49 = por %p47, %p48
      %p50 = scmp.ne.s32.totalorder %s39, %s40
      %p51 = scmp.eq.s32.totalorder %s17, 0
      %p52 = por %p50, %p51
      %p53 = scmp.ne.s32.totalorder %s39, %s40
      %p54 = scmp.eq.s32.totalorder %s18, 1
      %p55 = por %p53, %p54
      %p57 = scmp.ne.s32.totalorder %s40, %s56
      %p58 = scmp.eq.s32.totalorder %s18, 0
      %p59 = por %p57, %p58
      %s60 = sadd.s32 %s20, 1
      %s61 = smul.u32 %s60, 2
      %s62 = sadd.s32 %s27, 1
      %s63 = smul.u32 %s62, 2
      %s64 = ssub.s32 %s19, %s31
      %s65 = ssub.s32 %s61, %s63
      %s66 = sor.u32 %s64, %s65
      %p67 = scmp.eq.s32.totalorder %s66, 0
      %s69 = sadd.s32 %s68, 1
      %s70 = scalar_select %p67, %s68, %s69
      %p73 = pneg %p67
      %p74 = scmp.eq.s32.totalorder %s12, 1
      %p75 = por %p73, %p74
      %p76 = scmp.ne.s32.totalorder %s68, %s71
      %p77 = scmp.eq.s32.totalorder %s12, 0
      %p78 = por %p76, %p77
      %p79 = scmp.ne.s32.totalorder %s68, %s71
      %p80 = scmp.eq.s32.totalorder %s17, 1
      %p81 = por %p79, %p80
      %p82 = scmp.ne.s32.totalorder %s71, %s72
      %p83 = scmp.eq.s32.totalorder %s17, 0
      %p84 = por %p82, %p83
      %p85 = scmp.ne.s32.totalorder %s71, %s72
      %p86 = scmp.eq.s32.totalorder %s18, 1
      %p87 = por %p85, %p86
      %p89 = scmp.ne.s32.totalorder %s72, %s88
      %p90 = scmp.eq.s32.totalorder %s18, 0
      %p91 = por %p89, %p90
      %s93 = sadd.s32 %s92, 1
      %p96 = scmp.eq.s32.totalorder %s12, 1
      %p97 = scmp.ne.s32.totalorder %s92, %s94
      %p98 = scmp.eq.s32.totalorder %s12, 0
      %p99 = por %p97, %p98
      %p100 = scmp.ne.s32.totalorder %s92, %s94
      %p101 = scmp.eq.s32.totalorder %s17, 1
      %p102 = por %p100, %p101
      %p103 = scmp.ne.s32.totalorder %s94, %s95
      %p104 = scmp.eq.s32.totalorder %s17, 0
      %p105 = por %p103, %p104
      %p106 = scmp.ne.s32.totalorder %s94, %s95
      %p107 = scmp.eq.s32.totalorder %s18, 1
      %p108 = por %p106, %p107
      %p110 = scmp.ne.s32.totalorder %s95, %s109
      %p111 = scmp.eq.s32.totalorder %s18, 0
      %p112 = por %p110, %p111
      %s114 = sadd.s32 %s113, 1
      %p117 = scmp.eq.s32.totalorder %s12, 1
      %p118 = scmp.ne.s32.totalorder %s113, %s115
      %p119 = scmp.eq.s32.totalorder %s12, 0
      %p120 = por %p118, %p119
      %p121 = scmp.ne.s32.totalorder %s113, %s115
      %p122 = scmp.eq.s32.totalorder %s17, 1
      %p123 = por %p121, %p122
      %p124 = scmp.ne.s32.totalorder %s115, %s116
      %p125 = scmp.eq.s32.totalorder %s17, 0
      %p126 = por %p124, %p125
      %p127 = scmp.ne.s32.totalorder %s115, %s116
      %p128 = scmp.eq.s32.totalorder %s18, 1
      %p129 = por %p127, %p128
      %p131 = scmp.ne.s32.totalorder %s116, %s130
      %p132 = scmp.eq.s32.totalorder %s18, 0
      %p133 = por %p131, %p132
      %s134 = ssub.s32 %s19, %s31
      %s135 = ssub.s32 %s20, %s27
      %s136 = sor.u32 %s134, %s135
      %p137 = scmp.eq.s32.totalorder %s136, 0
      %s139 = sadd.s32 %s138, 1
      %s140 = scalar_select %p137, %s138, %s139
      %p143 = pneg %p137
      %p144 = scmp.eq.s32.totalorder %s12, 1
      %p145 = por %p143, %p144
      %p146 = scmp.ne.s32.totalorder %s138, %s141
      %p147 = scmp.eq.s32.totalorder %s12, 0
      %p148 = por %p146, %p147
      %p149 = scmp.ne.s32.totalorder %s138, %s141
      %p150 = scmp.eq.s32.totalorder %s17, 1
      %p151 = por %p149, %p150
      %p152 = scmp.ne.s32.totalorder %s141, %s142
      %p153 = scmp.eq.s32.totalorder %s17, 0
      %p154 = por %p152, %p153
      %p155 = scmp.ne.s32.totalorder %s141, %s142
      %p156 = scmp.eq.s32.totalorder %s18, 1
      %p157 = por %p155, %p156
      %p159 = scmp.ne.s32.totalorder %s142, %s158
      %p160 = scmp.eq.s32.totalorder %s18, 0
      %p161 = por %p159, %p160
      %p162 = scmp.le.s32.totalorder 1, %s12
      %p163 = scmp.lt.s32.totalorder %s12, 3
      %p164 = pnand %p162, %p163
      %p165 = pneg %p164
      // Predicated region
      $region9: #{uap_forward.1} parent=5 // pred_check
        _
      $region10: #{uap_forward.1} parent=5 // pred_check_branch
        %167 = sbr.rel (%p164) target = $region12
      $region11: #{uap_forward.1} parent=5 // pred_region
        %s168 = ssub.s32 %s12, 1
        // Predicated region
        $region13: #{uap_forward.1} parent=11 // pred_check
          %p169 = pneg %p105
        $region14: #{uap_forward.1} parent=11 // pred_check_branch
          %171 = sbr.rel (%p169) target = $region16
        $region15: #{uap_forward.1} parent=11 // pred_region
          %s173 = ssub.s32 65536, 65536
          %174 = vsyncadd [#allocation3], %s173
          %s175 = sshll.u32 [#allocation2], 4
          %s176 = int_to_ptr.vmem [resolvable:$true] %s175
          %181 = dma.hbm_to_vmem [thread:$0]  %s2, 65536, %s176, [#allocation3], 512, 512, 32
        $region16: #{uap_forward.1} parent=11 // pred_fallthru
          _
        // Predicated region
        $region17: #{uap_forward.1} parent=11 // pred_check
          %p182 = pneg %p126
        $region18: #{uap_forward.1} parent=11 // pred_check_branch
          %184 = sbr.rel (%p182) target = $region20
        $region19: #{uap_forward.1} parent=11 // pred_region
          %s186 = ssub.s32 4096, 4096
          %187 = vsyncadd [#allocation5], %s186
          %s188 = sshll.u32 [#allocation4], 4
          %s189 = int_to_ptr.vmem [resolvable:$true] %s188
          %194 = dma.hbm_to_vmem [thread:$0]  %s3, 4096, %s189, [#allocation5], 64, 64, 4
        $region20: #{uap_forward.1} parent=11 // pred_fallthru
          _
      $region12: #{uap_forward.1} parent=5 // pred_fallthru
        _
      %p195 = scmp.lt.s32.totalorder %s12, 2
      // Predicated region
      $region21: #{uap_forward.1} parent=5 // pred_check
        %p196 = pneg %p195
      $region22: #{uap_forward.1} parent=5 // pred_check_branch
        %198 = sbr.rel (%p196) target = $region24
      $region23: #{uap_forward.1} parent=5 // pred_region
        // Predicated region
        $region25: #{uap_forward.1} parent=23 // pred_check
          %p199 = pneg %p46
        $region26: #{uap_forward.1} parent=23 // pred_check_branch
          %201 = sbr.rel (%p199) target = $region28
        $region27: #{uap_forward.1} parent=23 // pred_region
          %s202 = smul.u32 4, %s20
          %s203 = ssub.s32 6, %s202
          %p204 = scmp.lt.s32.totalorder %s203, 4
          %s205 = scalar_select %p204, %s203, 4
          %s206 = smul.u32 64, %s205
          %s207 = smul.u32 %s206, 2
          %p208 = scmp.lt.s32.totalorder %s19, 1
          %s209 = scalar_select %p208, %s19, 1
          %p210 = scmp.lt.s32.totalorder %s202, 5
          %s211 = scalar_select %p210, %s202, 5
          %s212 = smul.addr %s211, 2
          %s213 = smul.addr %s209, 12
          %s214 = sadd.s32 %s212, %s213
          %s215 = smul.addr %s214, 4
          %s216 = scalar_lea.vmem %s0, %s215
          %s217 = smul.u32 4, %s20
          %s218 = ssub.s32 6, %s217
          %p219 = scmp.lt.s32.totalorder %s218, 4
          %s220 = scalar_select %p219, %s218, 4
          %s221 = smul.u32 64, %s220
          %s222 = smul.u32 %s221, 2
        $region28: #{uap_forward.1} parent=23 // pred_fallthru
          _
        // Predicated region
        $region29: #{uap_forward.1} parent=23 // pred_check
          %p223 = pneg %p78
        $region30: #{uap_forward.1} parent=23 // pred_check_branch
          %225 = sbr.rel (%p223) target = $region32
        $region31: #{uap_forward.1} parent=23 // pred_region
          %s226 = sadd.s32 %s20, 1
          %s227 = smul.u32 %s226, 2
          %s228 = smul.u32 2, %s227
          %p229 = scmp.lt.s32.totalorder %s19, 1
          %s230 = scalar_select %p229, %s19, 1
          %p231 = scmp.lt.s32.totalorder %s228, 5
          %s232 = scalar_select %p231, %s228, 5
          %s233 = smul.addr %s232, 2
          %s234 = smul.addr %s230, 12
          %s235 = sadd.s32 %s233, %s234
          %s236 = smul.addr %s235, 4
          %s237 = scalar_lea.vmem %s1, %s236
          %s238 = sadd.s32 %s20, 1
          %s239 = smul.u32 %s238, 2
          %s240 = smul.u32 2, %s239
        $region32: #{uap_forward.1} parent=23 // pred_fallthru
          _
      $region24: #{uap_forward.1} parent=5 // pred_fallthru
        _
      %p241 = scmp.le.s32.totalorder 1, %s12
      %p242 = scmp.lt.s32.totalorder %s12, 3
      %p243 = pnand %p241, %p242
      %p244 = pneg %p243
      // Predicated region
      $region33: #{uap_forward.1} parent=5 // pred_check
        _
      $region34: #{uap_forward.1} parent=5 // pred_check_branch
        %246 = sbr.rel (%p243) target = $region36
      $region35: #{uap_forward.1} parent=5 // pred_region
        %s247 = ssub.s32 %s12, 1
        // Predicated region
        $region37: #{uap_forward.1} parent=35 // pred_check
          %p248 = pneg %p105
        $region38: #{uap_forward.1} parent=35 // pred_check_branch
          %250 = sbr.rel (%p248) target = $region40
        $region39: #{uap_forward.1} parent=35 // pred_region
          %251 = dma.done [#allocation3], 65536
        $region40: #{uap_forward.1} parent=35 // pred_fallthru
          _
        // Predicated region
        $region41: #{uap_forward.1} parent=35 // pred_check
          %p252 = pneg %p126
        $region42: #{uap_forward.1} parent=35 // pred_check_branch
          %254 = sbr.rel (%p252) target = $region44
        $region43: #{uap_forward.1} parent=35 // pred_region
          %255 = dma.done [#allocation5], 4096
        $region44: #{uap_forward.1} parent=35 // pred_fallthru
          _
        %s256 = smul.u32 4, %s22
        %s257 = ssub.s32 6, %s256
        %p258 = scmp.lt.s32.totalorder %s257, 4
        %s259 = scalar_select %p258, %s257, 4
        %s260 = smul.u32 64, %s259
        %s261 = smul.u32 %s260, 2
        %p262 = scmp.lt.s32.totalorder %s21, 1
        %s263 = scalar_select %p262, %s21, 1
        %p264 = scmp.lt.s32.totalorder %s256, 5
        %s265 = scalar_select %p264, %s256, 5
        %s266 = smul.addr %s265, 2
        %s267 = smul.addr %s263, 12
        %s268 = sadd.s32 %s266, %s267
        %s269 = smul.addr %s268, 4
        %s270 = scalar_lea.vmem %s0, %s269
        %p271 = pneg %p52
        %p272 = pneg %p49
        %s273 = sadd.s32 %s22, 1
        %s274 = smul.u32 %s273, 2
        %s275 = smul.u32 2, %s274
        %p276 = scmp.lt.s32.totalorder %s21, 1
        %s277 = scalar_select %p276, %s21, 1
        %p278 = scmp.lt.s32.totalorder %s275, 5
        %s279 = scalar_select %p278, %s275, 5
        %s280 = smul.addr %s279, 2
        %s281 = smul.addr %s277, 12
        %s282 = sadd.s32 %s280, %s281
        %s283 = smul.addr %s282, 4
        %s284 = scalar_lea.vmem %s1, %s283
        %p285 = pneg %p84
        %p286 = pneg %p81
        %p287 = pneg %p105
        %p288 = pneg %p102
        %p289 = pneg %p126
        %p290 = pneg %p123
        %p291 = pneg %p154
        %p292 = pneg %p151
        %s293 = smul.u32 4, %s22
        %p294 = scmp.lt.s32.totalorder %s21, 1
        %s295 = scalar_select %p294, %s21, 1
        %p296 = scmp.lt.s32.totalorder %s293, 3
        %s297 = scalar_select %p296, %s293, 3
        %s298 = smul.addr %s295, 4
        %s299 = sadd.s32 %s297, %s298
        %s300 = smul.addr %s299, 8
        %s301 = scalar_lea.vmem %s4, %s300
        %s302 = smul.u32 4, %s22
        %s303 = ssub.s32 6, %s302
        %p304 = scmp.lt.s32.totalorder %s303, 4
        %s305 = scalar_select %p304, %s303, 4
        %s306 = smul.u32 64, %s305
        %s307 = smul.u32 %s306, 2
        %p308 = scmp.lt.s32.totalorder %s21, 1
        %s309 = scalar_select %p308, %s21, 1
        %p310 = scmp.lt.s32.totalorder %s302, 5
        %s311 = scalar_select %p310, %s302, 5
        %s312 = smul.addr %s311, 2
        %s313 = smul.addr %s309, 12
        %s314 = sadd.s32 %s312, %s313
        %s315 = smul.addr %s314, 4
        %s316 = scalar_lea.vmem %s0, %s315
        %s317 = smul.u32 4, %s22
        %s318 = ssub.s32 6, %s317
        %p319 = scmp.lt.s32.totalorder %s318, 4
        %s320 = scalar_select %p319, %s318, 4
        %s321 = smul.u32 64, %s320
        %s322 = smul.u32 %s321, 2
        %s323 = sadd.s32 %s22, 1
        %s324 = smul.u32 %s323, 2
        %s325 = smul.u32 2, %s324
        %p326 = scmp.lt.s32.totalorder %s21, 1
        %s327 = scalar_select %p326, %s21, 1
        %p328 = scmp.lt.s32.totalorder %s325, 5
        %s329 = scalar_select %p328, %s325, 5
        %s330 = smul.addr %s329, 2
        %s331 = smul.addr %s327, 12
        %s332 = sadd.s32 %s330, %s331
        %s333 = smul.addr %s332, 4
        %s334 = scalar_lea.vmem %s1, %s333
        %s335 = sadd.s32 %s22, 1
        %s336 = smul.u32 %s335, 2
        %s337 = smul.u32 2, %s336
        %s338 = smul.u32 4, %s22
        %p339 = scmp.lt.s32.totalorder %s21, 1
        %s340 = scalar_select %p339, %s21, 1
        %p341 = scmp.lt.s32.totalorder %s338, 3
        %s342 = scalar_select %p341, %s338, 3
        %s343 = smul.addr %s340, 4
        %s344 = sadd.s32 %s342, %s343
        %s345 = smul.addr %s344, 8
        %s346 = scalar_lea.vmem %s4, %s345
        %s347 = smul.u32 4, %s22
        %v349 = vld [vmem:[%s316] sm:$0xff]
        %v350 = vld [vmem:[%s316 + $0x8] sm:$0xff]
        %v351 = vld [vmem:[%s316 + $0x10] sm:$0xff]
        %v352 = vld [vmem:[%s316 + $0x18] sm:$0xff]
        %v353 = vld [vmem:[%s334] sm:$0xff]
        %v354 = vld [vmem:[%s334 + $0x8] sm:$0xff]
        %v359 = vunpack.c.l.b16 %v349
        %v360 = vunpack.c.h.b16 %v349
        %v361 = vunpack.c.l.b16 %v350
        %v362 = vunpack.c.h.b16 %v350
        %v363 = vunpack.c.l.b16 %v351
        %v364 = vunpack.c.h.b16 %v351
        %v365 = vunpack.c.l.b16 %v352
        %v366 = vunpack.c.h.b16 %v352
        %v367 = vpack.c.b16 %v361, %v359
        %v368 = vpack.c.b16 %v362, %v360
        %v369 = vpack.c.b16 %v365, %v363
        %v370 = vpack.c.b16 %v366, %v364
        %v377 = vunpack.c.l.b16 %v353
        %v378 = vunpack.c.h.b16 %v353
        %v379 = vunpack.c.l.b16 %v354
        %v380 = vunpack.c.h.b16 %v354
        %v381 = vpack.c.b16 %v379, %v377
        %v382 = vpack.c.b16 %v380, %v378
        %v383 = vld [vmem:[#allocation2] sm:$0xff]
        %v384 = vld [vmem:[#allocation2 + $0x8] sm:$0xff]
        %v385 = vld [vmem:[#allocation2 + $0x10] sm:$0xff]
        %v386 = vld [vmem:[#allocation2 + $0x18] sm:$0xff]
        %v387 = vld [vmem:[#allocation2 + $0x20] sm:$0xff]
        %v388 = vld [vmem:[#allocation2 + $0x28] sm:$0xff]
        %v389 = vld [vmem:[#allocation2 + $0x30] sm:$0xff]
        %v390 = vld [vmem:[#allocation2 + $0x38] sm:$0xff]
        %v391 = vld [vmem:[#allocation2 + $0x40] sm:$0xff]
        %v392 = vld [vmem:[#allocation2 + $0x48] sm:$0xff]
        %v393 = vld [vmem:[#allocation2 + $0x50] sm:$0xff]
        %v394 = vld [vmem:[#allocation2 + $0x58] sm:$0xff]
        %v395 = vld [vmem:[#allocation2 + $0x60] sm:$0xff]
        %v396 = vld [vmem:[#allocation2 + $0x68] sm:$0xff]
        %v397 = vld [vmem:[#allocation2 + $0x70] sm:$0xff]
        %v398 = vld [vmem:[#allocation2 + $0x78] sm:$0xff]
        %v399 = vld [vmem:[#allocation2 + $0x80] sm:$0xff]
        %v400 = vld [vmem:[#allocation2 + $0x88] sm:$0xff]
        %v401 = vld [vmem:[#allocation2 + $0x90] sm:$0xff]
        %v402 = vld [vmem:[#allocation2 + $0x98] sm:$0xff]
        %v403 = vld [vmem:[#allocation2 + $0xa0] sm:$0xff]
        %v404 = vld [vmem:[#allocation2 + $0xa8] sm:$0xff]
        %v405 = vld [vmem:[#allocation2 + $0xb0] sm:$0xff]
        %v406 = vld [vmem:[#allocation2 + $0xb8] sm:$0xff]
        %v407 = vld [vmem:[#allocation2 + $0xc0] sm:$0xff]
        %v408 = vld [vmem:[#allocation2 + $0xc8] sm:$0xff]
        %v409 = vld [vmem:[#allocation2 + $0xd0] sm:$0xff]
        %v410 = vld [vmem:[#allocation2 + $0xd8] sm:$0xff]
        %v411 = vld [vmem:[#allocation2 + $0xe0] sm:$0xff]
        %v412 = vld [vmem:[#allocation2 + $0xe8] sm:$0xff]
        %v413 = vld [vmem:[#allocation2 + $0xf0] sm:$0xff]
        %v414 = vld [vmem:[#allocation2 + $0xf8] sm:$0xff]
        %v415 = vld [vmem:[#allocation2 + $0x100] sm:$0xff]
        %v416 = vld [vmem:[#allocation2 + $0x108] sm:$0xff]
        %v417 = vld [vmem:[#allocation2 + $0x110] sm:$0xff]
        %v418 = vld [vmem:[#allocation2 + $0x118] sm:$0xff]
        %v419 = vld [vmem:[#allocation2 + $0x120] sm:$0xff]
        %v420 = vld [vmem:[#allocation2 + $0x128] sm:$0xff]
        %v421 = vld [vmem:[#allocation2 + $0x130] sm:$0xff]
        %v422 = vld [vmem:[#allocation2 + $0x138] sm:$0xff]
        %v423 = vld [vmem:[#allocation2 + $0x140] sm:$0xff]
        %v424 = vld [vmem:[#allocation2 + $0x148] sm:$0xff]
        %v425 = vld [vmem:[#allocation2 + $0x150] sm:$0xff]
        %v426 = vld [vmem:[#allocation2 + $0x158] sm:$0xff]
        %v427 = vld [vmem:[#allocation2 + $0x160] sm:$0xff]
        %v428 = vld [vmem:[#allocation2 + $0x168] sm:$0xff]
        %v429 = vld [vmem:[#allocation2 + $0x170] sm:$0xff]
        %v430 = vld [vmem:[#allocation2 + $0x178] sm:$0xff]
        %v431 = vld [vmem:[#allocation2 + $0x180] sm:$0xff]
        %v432 = vld [vmem:[#allocation2 + $0x188] sm:$0xff]
        %v433 = vld [vmem:[#allocation2 + $0x190] sm:$0xff]
        %v434 = vld [vmem:[#allocation2 + $0x198] sm:$0xff]
        %v435 = vld [vmem:[#allocation2 + $0x1a0] sm:$0xff]
        %v436 = vld [vmem:[#allocation2 + $0x1a8] sm:$0xff]
        %v437 = vld [vmem:[#allocation2 + $0x1b0] sm:$0xff]
        %v438 = vld [vmem:[#allocation2 + $0x1b8] sm:$0xff]
        %v439 = vld [vmem:[#allocation2 + $0x1c0] sm:$0xff]
        %v440 = vld [vmem:[#allocation2 + $0x1c8] sm:$0xff]
        %v441 = vld [vmem:[#allocation2 + $0x1d0] sm:$0xff]
        %v442 = vld [vmem:[#allocation2 + $0x1d8] sm:$0xff]
        %v443 = vld [vmem:[#allocation2 + $0x1e0] sm:$0xff]
        %v444 = vld [vmem:[#allocation2 + $0x1e8] sm:$0xff]
        %v445 = vld [vmem:[#allocation2 + $0x1f0] sm:$0xff]
        %v446 = vld [vmem:[#allocation2 + $0x1f8] sm:$0xff]
        %v447 = vld [vmem:[#allocation2 + $0x200] sm:$0xff]
        %v448 = vld [vmem:[#allocation2 + $0x208] sm:$0xff]
        %v449 = vld [vmem:[#allocation2 + $0x210] sm:$0xff]
        %v450 = vld [vmem:[#allocation2 + $0x218] sm:$0xff]
        %v451 = vld [vmem:[#allocation2 + $0x220] sm:$0xff]
        %v452 = vld [vmem:[#allocation2 + $0x228] sm:$0xff]
        %v453 = vld [vmem:[#allocation2 + $0x230] sm:$0xff]
        %v454 = vld [vmem:[#allocation2 + $0x238] sm:$0xff]
        %v455 = vld [vmem:[#allocation2 + $0x240] sm:$0xff]
        %v456 = vld [vmem:[#allocation2 + $0x248] sm:$0xff]
        %v457 = vld [vmem:[#allocation2 + $0x250] sm:$0xff]
        %v458 = vld [vmem:[#allocation2 + $0x258] sm:$0xff]
        %v459 = vld [vmem:[#allocation2 + $0x260] sm:$0xff]
        %v460 = vld [vmem:[#allocation2 + $0x268] sm:$0xff]
        %v461 = vld [vmem:[#allocation2 + $0x270] sm:$0xff]
        %v462 = vld [vmem:[#allocation2 + $0x278] sm:$0xff]
        %v463 = vld [vmem:[#allocation2 + $0x280] sm:$0xff]
        %v464 = vld [vmem:[#allocation2 + $0x288] sm:$0xff]
        %v465 = vld [vmem:[#allocation2 + $0x290] sm:$0xff]
        %v466 = vld [vmem:[#allocation2 + $0x298] sm:$0xff]
        %v467 = vld [vmem:[#allocation2 + $0x2a0] sm:$0xff]
        %v468 = vld [vmem:[#allocation2 + $0x2a8] sm:$0xff]
        %v469 = vld [vmem:[#allocation2 + $0x2b0] sm:$0xff]
        %v470 = vld [vmem:[#allocation2 + $0x2b8] sm:$0xff]
        %v471 = vld [vmem:[#allocation2 + $0x2c0] sm:$0xff]
        %v472 = vld [vmem:[#allocation2 + $0x2c8] sm:$0xff]
        %v473 = vld [vmem:[#allocation2 + $0x2d0] sm:$0xff]
        %v474 = vld [vmem:[#allocation2 + $0x2d8] sm:$0xff]
        %v475 = vld [vmem:[#allocation2 + $0x2e0] sm:$0xff]
        %v476 = vld [vmem:[#allocation2 + $0x2e8] sm:$0xff]
        %v477 = vld [vmem:[#allocation2 + $0x2f0] sm:$0xff]
        %v478 = vld [vmem:[#allocation2 + $0x2f8] sm:$0xff]
        %v479 = vld [vmem:[#allocation2 + $0x300] sm:$0xff]
        %v480 = vld [vmem:[#allocation2 + $0x308] sm:$0xff]
        %v481 = vld [vmem:[#allocation2 + $0x310] sm:$0xff]
        %v482 = vld [vmem:[#allocation2 + $0x318] sm:$0xff]
        %v483 = vld [vmem:[#allocation2 + $0x320] sm:$0xff]
        %v484 = vld [vmem:[#allocation2 + $0x328] sm:$0xff]
        %v485 = vld [vmem:[#allocation2 + $0x330] sm:$0xff]
        %v486 = vld [vmem:[#allocation2 + $0x338] sm:$0xff]
        %v487 = vld [vmem:[#allocation2 + $0x340] sm:$0xff]
        %v488 = vld [vmem:[#allocation2 + $0x348] sm:$0xff]
        %v489 = vld [vmem:[#allocation2 + $0x350] sm:$0xff]
        %v490 = vld [vmem:[#allocation2 + $0x358] sm:$0xff]
        %v491 = vld [vmem:[#allocation2 + $0x360] sm:$0xff]
        %v492 = vld [vmem:[#allocation2 + $0x368] sm:$0xff]
        %v493 = vld [vmem:[#allocation2 + $0x370] sm:$0xff]
        %v494 = vld [vmem:[#allocation2 + $0x378] sm:$0xff]
        %v495 = vld [vmem:[#allocation2 + $0x380] sm:$0xff]
        %v496 = vld [vmem:[#allocation2 + $0x388] sm:$0xff]
        %v497 = vld [vmem:[#allocation2 + $0x390] sm:$0xff]
        %v498 = vld [vmem:[#allocation2 + $0x398] sm:$0xff]
        %v499 = vld [vmem:[#allocation2 + $0x3a0] sm:$0xff]
        %v500 = vld [vmem:[#allocation2 + $0x3a8] sm:$0xff]
        %v501 = vld [vmem:[#allocation2 + $0x3b0] sm:$0xff]
        %v502 = vld [vmem:[#allocation2 + $0x3b8] sm:$0xff]
        %v503 = vld [vmem:[#allocation2 + $0x3c0] sm:$0xff]
        %v504 = vld [vmem:[#allocation2 + $0x3c8] sm:$0xff]
        %v505 = vld [vmem:[#allocation2 + $0x3d0] sm:$0xff]
        %v506 = vld [vmem:[#allocation2 + $0x3d8] sm:$0xff]
        %v507 = vld [vmem:[#allocation2 + $0x3e0] sm:$0xff]
        %v508 = vld [vmem:[#allocation2 + $0x3e8] sm:$0xff]
        %v509 = vld [vmem:[#allocation2 + $0x3f0] sm:$0xff]
        %v510 = vld [vmem:[#allocation2 + $0x3f8] sm:$0xff]
        %v511 = vld [vmem:[#allocation2 + $0x400] sm:$0xff]
        %v512 = vld [vmem:[#allocation2 + $0x408] sm:$0xff]
        %v513 = vld [vmem:[#allocation2 + $0x410] sm:$0xff]
        %v514 = vld [vmem:[#allocation2 + $0x418] sm:$0xff]
        %v515 = vld [vmem:[#allocation2 + $0x420] sm:$0xff]
        %v516 = vld [vmem:[#allocation2 + $0x428] sm:$0xff]
        %v517 = vld [vmem:[#allocation2 + $0x430] sm:$0xff]
        %v518 = vld [vmem:[#allocation2 + $0x438] sm:$0xff]
        %v519 = vld [vmem:[#allocation2 + $0x440] sm:$0xff]
        %v520 = vld [vmem:[#allocation2 + $0x448] sm:$0xff]
        %v521 = vld [vmem:[#allocation2 + $0x450] sm:$0xff]
        %v522 = vld [vmem:[#allocation2 + $0x458] sm:$0xff]
        %v523 = vld [vmem:[#allocation2 + $0x460] sm:$0xff]
        %v524 = vld [vmem:[#allocation2 + $0x468] sm:$0xff]
        %v525 = vld [vmem:[#allocation2 + $0x470] sm:$0xff]
        %v526 = vld [vmem:[#allocation2 + $0x478] sm:$0xff]
        %v527 = vld [vmem:[#allocation2 + $0x480] sm:$0xff]
        %v528 = vld [vmem:[#allocation2 + $0x488] sm:$0xff]
        %v529 = vld [vmem:[#allocation2 + $0x490] sm:$0xff]
        %v530 = vld [vmem:[#allocation2 + $0x498] sm:$0xff]
        %v531 = vld [vmem:[#allocation2 + $0x4a0] sm:$0xff]
        %v532 = vld [vmem:[#allocation2 + $0x4a8] sm:$0xff]
        %v533 = vld [vmem:[#allocation2 + $0x4b0] sm:$0xff]
        %v534 = vld [vmem:[#allocation2 + $0x4b8] sm:$0xff]
        %v535 = vld [vmem:[#allocation2 + $0x4c0] sm:$0xff]
        %v536 = vld [vmem:[#allocation2 + $0x4c8] sm:$0xff]
        %v537 = vld [vmem:[#allocation2 + $0x4d0] sm:$0xff]
        %v538 = vld [vmem:[#allocation2 + $0x4d8] sm:$0xff]
        %v539 = vld [vmem:[#allocation2 + $0x4e0] sm:$0xff]
        %v540 = vld [vmem:[#allocation2 + $0x4e8] sm:$0xff]
        %v541 = vld [vmem:[#allocation2 + $0x4f0] sm:$0xff]
        %v542 = vld [vmem:[#allocation2 + $0x4f8] sm:$0xff]
        %v543 = vld [vmem:[#allocation2 + $0x500] sm:$0xff]
        %v544 = vld [vmem:[#allocation2 + $0x508] sm:$0xff]
        %v545 = vld [vmem:[#allocation2 + $0x510] sm:$0xff]
        %v546 = vld [vmem:[#allocation2 + $0x518] sm:$0xff]
        %v547 = vld [vmem:[#allocation2 + $0x520] sm:$0xff]
        %v548 = vld [vmem:[#allocation2 + $0x528] sm:$0xff]
        %v549 = vld [vmem:[#allocation2 + $0x530] sm:$0xff]
        %v550 = vld [vmem:[#allocation2 + $0x538] sm:$0xff]
        %v551 = vld [vmem:[#allocation2 + $0x540] sm:$0xff]
        %v552 = vld [vmem:[#allocation2 + $0x548] sm:$0xff]
        %v553 = vld [vmem:[#allocation2 + $0x550] sm:$0xff]
        %v554 = vld [vmem:[#allocation2 + $0x558] sm:$0xff]
        %v555 = vld [vmem:[#allocation2 + $0x560] sm:$0xff]
        %v556 = vld [vmem:[#allocation2 + $0x568] sm:$0xff]
        %v557 = vld [vmem:[#allocation2 + $0x570] sm:$0xff]
        %v558 = vld [vmem:[#allocation2 + $0x578] sm:$0xff]
        %v559 = vld [vmem:[#allocation2 + $0x580] sm:$0xff]
        %v560 = vld [vmem:[#allocation2 + $0x588] sm:$0xff]
        %v561 = vld [vmem:[#allocation2 + $0x590] sm:$0xff]
        %v562 = vld [vmem:[#allocation2 + $0x598] sm:$0xff]
        %v563 = vld [vmem:[#allocation2 + $0x5a0] sm:$0xff]
        %v564 = vld [vmem:[#allocation2 + $0x5a8] sm:$0xff]
        %v565 = vld [vmem:[#allocation2 + $0x5b0] sm:$0xff]
        %v566 = vld [vmem:[#allocation2 + $0x5b8] sm:$0xff]
        %v567 = vld [vmem:[#allocation2 + $0x5c0] sm:$0xff]
        %v568 = vld [vmem:[#allocation2 + $0x5c8] sm:$0xff]
        %v569 = vld [vmem:[#allocation2 + $0x5d0] sm:$0xff]
        %v570 = vld [vmem:[#allocation2 + $0x5d8] sm:$0xff]
        %v571 = vld [vmem:[#allocation2 + $0x5e0] sm:$0xff]
        %v572 = vld [vmem:[#allocation2 + $0x5e8] sm:$0xff]
        %v573 = vld [vmem:[#allocation2 + $0x5f0] sm:$0xff]
        %v574 = vld [vmem:[#allocation2 + $0x5f8] sm:$0xff]
        %v575 = vld [vmem:[#allocation2 + $0x600] sm:$0xff]
        %v576 = vld [vmem:[#allocation2 + $0x608] sm:$0xff]
        %v577 = vld [vmem:[#allocation2 + $0x610] sm:$0xff]
        %v578 = vld [vmem:[#allocation2 + $0x618] sm:$0xff]
        %v579 = vld [vmem:[#allocation2 + $0x620] sm:$0xff]
        %v580 = vld [vmem:[#allocation2 + $0x628] sm:$0xff]
        %v581 = vld [vmem:[#allocation2 + $0x630] sm:$0xff]
        %v582 = vld [vmem:[#allocation2 + $0x638] sm:$0xff]
        %v583 = vld [vmem:[#allocation2 + $0x640] sm:$0xff]
        %v584 = vld [vmem:[#allocation2 + $0x648] sm:$0xff]
        %v585 = vld [vmem:[#allocation2 + $0x650] sm:$0xff]
        %v586 = vld [vmem:[#allocation2 + $0x658] sm:$0xff]
        %v587 = vld [vmem:[#allocation2 + $0x660] sm:$0xff]
        %v588 = vld [vmem:[#allocation2 + $0x668] sm:$0xff]
        %v589 = vld [vmem:[#allocation2 + $0x670] sm:$0xff]
        %v590 = vld [vmem:[#allocation2 + $0x678] sm:$0xff]
        %v591 = vld [vmem:[#allocation2 + $0x680] sm:$0xff]
        %v592 = vld [vmem:[#allocation2 + $0x688] sm:$0xff]
        %v593 = vld [vmem:[#allocation2 + $0x690] sm:$0xff]
        %v594 = vld [vmem:[#allocation2 + $0x698] sm:$0xff]
        %v595 = vld [vmem:[#allocation2 + $0x6a0] sm:$0xff]
        %v596 = vld [vmem:[#allocation2 + $0x6a8] sm:$0xff]
        %v597 = vld [vmem:[#allocation2 + $0x6b0] sm:$0xff]
        %v598 = vld [vmem:[#allocation2 + $0x6b8] sm:$0xff]
        %v599 = vld [vmem:[#allocation2 + $0x6c0] sm:$0xff]
        %v600 = vld [vmem:[#allocation2 + $0x6c8] sm:$0xff]
        %v601 = vld [vmem:[#allocation2 + $0x6d0] sm:$0xff]
        %v602 = vld [vmem:[#allocation2 + $0x6d8] sm:$0xff]
        %v603 = vld [vmem:[#allocation2 + $0x6e0] sm:$0xff]
        %v604 = vld [vmem:[#allocation2 + $0x6e8] sm:$0xff]
        %v605 = vld [vmem:[#allocation2 + $0x6f0] sm:$0xff]
        %v606 = vld [vmem:[#allocation2 + $0x6f8] sm:$0xff]
        %v607 = vld [vmem:[#allocation2 + $0x700] sm:$0xff]
        %v608 = vld [vmem:[#allocation2 + $0x708] sm:$0xff]
        %v609 = vld [vmem:[#allocation2 + $0x710] sm:$0xff]
        %v610 = vld [vmem:[#allocation2 + $0x718] sm:$0xff]
        %v611 = vld [vmem:[#allocation2 + $0x720] sm:$0xff]
        %v612 = vld [vmem:[#allocation2 + $0x728] sm:$0xff]
        %v613 = vld [vmem:[#allocation2 + $0x730] sm:$0xff]
        %v614 = vld [vmem:[#allocation2 + $0x738] sm:$0xff]
        %v615 = vld [vmem:[#allocation2 + $0x740] sm:$0xff]
        %v616 = vld [vmem:[#allocation2 + $0x748] sm:$0xff]
        %v617 = vld [vmem:[#allocation2 + $0x750] sm:$0xff]
        %v618 = vld [vmem:[#allocation2 + $0x758] sm:$0xff]
        %v619 = vld [vmem:[#allocation2 + $0x760] sm:$0xff]
        %v620 = vld [vmem:[#allocation2 + $0x768] sm:$0xff]
        %v621 = vld [vmem:[#allocation2 + $0x770] sm:$0xff]
        %v622 = vld [vmem:[#allocation2 + $0x778] sm:$0xff]
        %v623 = vld [vmem:[#allocation2 + $0x780] sm:$0xff]
        %v624 = vld [vmem:[#allocation2 + $0x788] sm:$0xff]
        %v625 = vld [vmem:[#allocation2 + $0x790] sm:$0xff]
        %v626 = vld [vmem:[#allocation2 + $0x798] sm:$0xff]
        %v627 = vld [vmem:[#allocation2 + $0x7a0] sm:$0xff]
        %v628 = vld [vmem:[#allocation2 + $0x7a8] sm:$0xff]
        %v629 = vld [vmem:[#allocation2 + $0x7b0] sm:$0xff]
        %v630 = vld [vmem:[#allocation2 + $0x7b8] sm:$0xff]
        %v631 = vld [vmem:[#allocation2 + $0x7c0] sm:$0xff]
        %v632 = vld [vmem:[#allocation2 + $0x7c8] sm:$0xff]
        %v633 = vld [vmem:[#allocation2 + $0x7d0] sm:$0xff]
        %v634 = vld [vmem:[#allocation2 + $0x7d8] sm:$0xff]
        %v635 = vld [vmem:[#allocation2 + $0x7e0] sm:$0xff]
        %v636 = vld [vmem:[#allocation2 + $0x7e8] sm:$0xff]
        %v637 = vld [vmem:[#allocation2 + $0x7f0] sm:$0xff]
        %v638 = vld [vmem:[#allocation2 + $0x7f8] sm:$0xff]
        %v639 = vld [vmem:[#allocation2 + $0x800] sm:$0xff]
        %v640 = vld [vmem:[#allocation2 + $0x808] sm:$0xff]
        %v641 = vld [vmem:[#allocation2 + $0x810] sm:$0xff]
        %v642 = vld [vmem:[#allocation2 + $0x818] sm:$0xff]
        %v643 = vld [vmem:[#allocation2 + $0x820] sm:$0xff]
        %v644 = vld [vmem:[#allocation2 + $0x828] sm:$0xff]
        %v645 = vld [vmem:[#allocation2 + $0x830] sm:$0xff]
        %v646 = vld [vmem:[#allocation2 + $0x838] sm:$0xff]
        %v647 = vld [vmem:[#allocation2 + $0x840] sm:$0xff]
        %v648 = vld [vmem:[#allocation2 + $0x848] sm:$0xff]
        %v649 = vld [vmem:[#allocation2 + $0x850] sm:$0xff]
        %v650 = vld [vmem:[#allocation2 + $0x858] sm:$0xff]
        %v651 = vld [vmem:[#allocation2 + $0x860] sm:$0xff]
        %v652 = vld [vmem:[#allocation2 + $0x868] sm:$0xff]
        %v653 = vld [vmem:[#allocation2 + $0x870] sm:$0xff]
        %v654 = vld [vmem:[#allocation2 + $0x878] sm:$0xff]
        %v655 = vld [vmem:[#allocation2 + $0x880] sm:$0xff]
        %v656 = vld [vmem:[#allocation2 + $0x888] sm:$0xff]
        %v657 = vld [vmem:[#allocation2 + $0x890] sm:$0xff]
        %v658 = vld [vmem:[#allocation2 + $0x898] sm:$0xff]
        %v659 = vld [vmem:[#allocation2 + $0x8a0] sm:$0xff]
        %v660 = vld [vmem:[#allocation2 + $0x8a8] sm:$0xff]
        %v661 = vld [vmem:[#allocation2 + $0x8b0] sm:$0xff]
        %v662 = vld [vmem:[#allocation2 + $0x8b8] sm:$0xff]
        %v663 = vld [vmem:[#allocation2 + $0x8c0] sm:$0xff]
        %v664 = vld [vmem:[#allocation2 + $0x8c8] sm:$0xff]
        %v665 = vld [vmem:[#allocation2 + $0x8d0] sm:$0xff]
        %v666 = vld [vmem:[#allocation2 + $0x8d8] sm:$0xff]
        %v667 = vld [vmem:[#allocation2 + $0x8e0] sm:$0xff]
        %v668 = vld [vmem:[#allocation2 + $0x8e8] sm:$0xff]
        %v669 = vld [vmem:[#allocation2 + $0x8f0] sm:$0xff]
        %v670 = vld [vmem:[#allocation2 + $0x8f8] sm:$0xff]
        %v671 = vld [vmem:[#allocation2 + $0x900] sm:$0xff]
        %v672 = vld [vmem:[#allocation2 + $0x908] sm:$0xff]
        %v673 = vld [vmem:[#allocation2 + $0x910] sm:$0xff]
        %v674 = vld [vmem:[#allocation2 + $0x918] sm:$0xff]
        %v675 = vld [vmem:[#allocation2 + $0x920] sm:$0xff]
        %v676 = vld [vmem:[#allocation2 + $0x928] sm:$0xff]
        %v677 = vld [vmem:[#allocation2 + $0x930] sm:$0xff]
        %v678 = vld [vmem:[#allocation2 + $0x938] sm:$0xff]
        %v679 = vld [vmem:[#allocation2 + $0x940] sm:$0xff]
        %v680 = vld [vmem:[#allocation2 + $0x948] sm:$0xff]
        %v681 = vld [vmem:[#allocation2 + $0x950] sm:$0xff]
        %v682 = vld [vmem:[#allocation2 + $0x958] sm:$0xff]
        %v683 = vld [vmem:[#allocation2 + $0x960] sm:$0xff]
        %v684 = vld [vmem:[#allocation2 + $0x968] sm:$0xff]
        %v685 = vld [vmem:[#allocation2 + $0x970] sm:$0xff]
        %v686 = vld [vmem:[#allocation2 + $0x978] sm:$0xff]
        %v687 = vld [vmem:[#allocation2 + $0x980] sm:$0xff]
        %v688 = vld [vmem:[#allocation2 + $0x988] sm:$0xff]
        %v689 = vld [vmem:[#allocation2 + $0x990] sm:$0xff]
        %v690 = vld [vmem:[#allocation2 + $0x998] sm:$0xff]
        %v691 = vld [vmem:[#allocation2 + $0x9a0] sm:$0xff]
        %v692 = vld [vmem:[#allocation2 + $0x9a8] sm:$0xff]
        %v693 = vld [vmem:[#allocation2 + $0x9b0] sm:$0xff]
        %v694 = vld [vmem:[#allocation2 + $0x9b8] sm:$0xff]
        %v695 = vld [vmem:[#allocation2 + $0x9c0] sm:$0xff]
        %v696 = vld [vmem:[#allocation2 + $0x9c8] sm:$0xff]
        %v697 = vld [vmem:[#allocation2 + $0x9d0] sm:$0xff]
        %v698 = vld [vmem:[#allocation2 + $0x9d8] sm:$0xff]
        %v699 = vld [vmem:[#allocation2 + $0x9e0] sm:$0xff]
        %v700 = vld [vmem:[#allocation2 + $0x9e8] sm:$0xff]
        %v701 = vld [vmem:[#allocation2 + $0x9f0] sm:$0xff]
        %v702 = vld [vmem:[#allocation2 + $0x9f8] sm:$0xff]
        %v703 = vld [vmem:[#allocation2 + $0xa00] sm:$0xff]
        %v704 = vld [vmem:[#allocation2 + $0xa08] sm:$0xff]
        %v705 = vld [vmem:[#allocation2 + $0xa10] sm:$0xff]
        %v706 = vld [vmem:[#allocation2 + $0xa18] sm:$0xff]
        %v707 = vld [vmem:[#allocation2 + $0xa20] sm:$0xff]
        %v708 = vld [vmem:[#allocation2 + $0xa28] sm:$0xff]
        %v709 = vld [vmem:[#allocation2 + $0xa30] sm:$0xff]
        %v710 = vld [vmem:[#allocation2 + $0xa38] sm:$0xff]
        %v711 = vld [vmem:[#allocation2 + $0xa40] sm:$0xff]
        %v712 = vld [vmem:[#allocation2 + $0xa48] sm:$0xff]
        %v713 = vld [vmem:[#allocation2 + $0xa50] sm:$0xff]
        %v714 = vld [vmem:[#allocation2 + $0xa58] sm:$0xff]
        %v715 = vld [vmem:[#allocation2 + $0xa60] sm:$0xff]
        %v716 = vld [vmem:[#allocation2 + $0xa68] sm:$0xff]
        %v717 = vld [vmem:[#allocation2 + $0xa70] sm:$0xff]
        %v718 = vld [vmem:[#allocation2 + $0xa78] sm:$0xff]
        %v719 = vld [vmem:[#allocation2 + $0xa80] sm:$0xff]
        %v720 = vld [vmem:[#allocation2 + $0xa88] sm:$0xff]
        %v721 = vld [vmem:[#allocation2 + $0xa90] sm:$0xff]
        %v722 = vld [vmem:[#allocation2 + $0xa98] sm:$0xff]
        %v723 = vld [vmem:[#allocation2 + $0xaa0] sm:$0xff]
        %v724 = vld [vmem:[#allocation2 + $0xaa8] sm:$0xff]
        %v725 = vld [vmem:[#allocation2 + $0xab0] sm:$0xff]
        %v726 = vld [vmem:[#allocation2 + $0xab8] sm:$0xff]
        %v727 = vld [vmem:[#allocation2 + $0xac0] sm:$0xff]
        %v728 = vld [vmem:[#allocation2 + $0xac8] sm:$0xff]
        %v729 = vld [vmem:[#allocation2 + $0xad0] sm:$0xff]
        %v730 = vld [vmem:[#allocation2 + $0xad8] sm:$0xff]
        %v731 = vld [vmem:[#allocation2 + $0xae0] sm:$0xff]
        %v732 = vld [vmem:[#allocation2 + $0xae8] sm:$0xff]
        %v733 = vld [vmem:[#allocation2 + $0xaf0] sm:$0xff]
        %v734 = vld [vmem:[#allocation2 + $0xaf8] sm:$0xff]
        %v735 = vld [vmem:[#allocation2 + $0xb00] sm:$0xff]
        %v736 = vld [vmem:[#allocation2 + $0xb08] sm:$0xff]
        %v737 = vld [vmem:[#allocation2 + $0xb10] sm:$0xff]
        %v738 = vld [vmem:[#allocation2 + $0xb18] sm:$0xff]
        %v739 = vld [vmem:[#allocation2 + $0xb20] sm:$0xff]
        %v740 = vld [vmem:[#allocation2 + $0xb28] sm:$0xff]
        %v741 = vld [vmem:[#allocation2 + $0xb30] sm:$0xff]
        %v742 = vld [vmem:[#allocation2 + $0xb38] sm:$0xff]
        %v743 = vld [vmem:[#allocation2 + $0xb40] sm:$0xff]
        %v744 = vld [vmem:[#allocation2 + $0xb48] sm:$0xff]
        %v745 = vld [vmem:[#allocation2 + $0xb50] sm:$0xff]
        %v746 = vld [vmem:[#allocation2 + $0xb58] sm:$0xff]
        %v747 = vld [vmem:[#allocation2 + $0xb60] sm:$0xff]
        %v748 = vld [vmem:[#allocation2 + $0xb68] sm:$0xff]
        %v749 = vld [vmem:[#allocation2 + $0xb70] sm:$0xff]
        %v750 = vld [vmem:[#allocation2 + $0xb78] sm:$0xff]
        %v751 = vld [vmem:[#allocation2 + $0xb80] sm:$0xff]
        %v752 = vld [vmem:[#allocation2 + $0xb88] sm:$0xff]
        %v753 = vld [vmem:[#allocation2 + $0xb90] sm:$0xff]
        %v754 = vld [vmem:[#allocation2 + $0xb98] sm:$0xff]
        %v755 = vld [vmem:[#allocation2 + $0xba0] sm:$0xff]
        %v756 = vld [vmem:[#allocation2 + $0xba8] sm:$0xff]
        %v757 = vld [vmem:[#allocation2 + $0xbb0] sm:$0xff]
        %v758 = vld [vmem:[#allocation2 + $0xbb8] sm:$0xff]
        %v759 = vld [vmem:[#allocation2 + $0xbc0] sm:$0xff]
        %v760 = vld [vmem:[#allocation2 + $0xbc8] sm:$0xff]
        %v761 = vld [vmem:[#allocation2 + $0xbd0] sm:$0xff]
        %v762 = vld [vmem:[#allocation2 + $0xbd8] sm:$0xff]
        %v763 = vld [vmem:[#allocation2 + $0xbe0] sm:$0xff]
        %v764 = vld [vmem:[#allocation2 + $0xbe8] sm:$0xff]
        %v765 = vld [vmem:[#allocation2 + $0xbf0] sm:$0xff]
        %v766 = vld [vmem:[#allocation2 + $0xbf8] sm:$0xff]
        %v767 = vld [vmem:[#allocation2 + $0xc00] sm:$0xff]
        %v768 = vld [vmem:[#allocation2 + $0xc08] sm:$0xff]
        %v769 = vld [vmem:[#allocation2 + $0xc10] sm:$0xff]
        %v770 = vld [vmem:[#allocation2 + $0xc18] sm:$0xff]
        %v771 = vld [vmem:[#allocation2 + $0xc20] sm:$0xff]
        %v772 = vld [vmem:[#allocation2 + $0xc28] sm:$0xff]
        %v773 = vld [vmem:[#allocation2 + $0xc30] sm:$0xff]
        %v774 = vld [vmem:[#allocation2 + $0xc38] sm:$0xff]
        %v775 = vld [vmem:[#allocation2 + $0xc40] sm:$0xff]
        %v776 = vld [vmem:[#allocation2 + $0xc48] sm:$0xff]
        %v777 = vld [vmem:[#allocation2 + $0xc50] sm:$0xff]
        %v778 = vld [vmem:[#allocation2 + $0xc58] sm:$0xff]
        %v779 = vld [vmem:[#allocation2 + $0xc60] sm:$0xff]
        %v780 = vld [vmem:[#allocation2 + $0xc68] sm:$0xff]
        %v781 = vld [vmem:[#allocation2 + $0xc70] sm:$0xff]
        %v782 = vld [vmem:[#allocation2 + $0xc78] sm:$0xff]
        %v783 = vld [vmem:[#allocation2 + $0xc80] sm:$0xff]
        %v784 = vld [vmem:[#allocation2 + $0xc88] sm:$0xff]
        %v785 = vld [vmem:[#allocation2 + $0xc90] sm:$0xff]
        %v786 = vld [vmem:[#allocation2 + $0xc98] sm:$0xff]
        %v787 = vld [vmem:[#allocation2 + $0xca0] sm:$0xff]
        %v788 = vld [vmem:[#allocation2 + $0xca8] sm:$0xff]
        %v789 = vld [vmem:[#allocation2 + $0xcb0] sm:$0xff]
        %v790 = vld [vmem:[#allocation2 + $0xcb8] sm:$0xff]
        %v791 = vld [vmem:[#allocation2 + $0xcc0] sm:$0xff]
        %v792 = vld [vmem:[#allocation2 + $0xcc8] sm:$0xff]
        %v793 = vld [vmem:[#allocation2 + $0xcd0] sm:$0xff]
        %v794 = vld [vmem:[#allocation2 + $0xcd8] sm:$0xff]
        %v795 = vld [vmem:[#allocation2 + $0xce0] sm:$0xff]
        %v796 = vld [vmem:[#allocation2 + $0xce8] sm:$0xff]
        %v797 = vld [vmem:[#allocation2 + $0xcf0] sm:$0xff]
        %v798 = vld [vmem:[#allocation2 + $0xcf8] sm:$0xff]
        %v799 = vld [vmem:[#allocation2 + $0xd00] sm:$0xff]
        %v800 = vld [vmem:[#allocation2 + $0xd08] sm:$0xff]
        %v801 = vld [vmem:[#allocation2 + $0xd10] sm:$0xff]
        %v802 = vld [vmem:[#allocation2 + $0xd18] sm:$0xff]
        %v803 = vld [vmem:[#allocation2 + $0xd20] sm:$0xff]
        %v804 = vld [vmem:[#allocation2 + $0xd28] sm:$0xff]
        %v805 = vld [vmem:[#allocation2 + $0xd30] sm:$0xff]
        %v806 = vld [vmem:[#allocation2 + $0xd38] sm:$0xff]
        %v807 = vld [vmem:[#allocation2 + $0xd40] sm:$0xff]
        %v808 = vld [vmem:[#allocation2 + $0xd48] sm:$0xff]
        %v809 = vld [vmem:[#allocation2 + $0xd50] sm:$0xff]
        %v810 = vld [vmem:[#allocation2 + $0xd58] sm:$0xff]
        %v811 = vld [vmem:[#allocation2 + $0xd60] sm:$0xff]
        %v812 = vld [vmem:[#allocation2 + $0xd68] sm:$0xff]
        %v813 = vld [vmem:[#allocation2 + $0xd70] sm:$0xff]
        %v814 = vld [vmem:[#allocation2 + $0xd78] sm:$0xff]
        %v815 = vld [vmem:[#allocation2 + $0xd80] sm:$0xff]
        %v816 = vld [vmem:[#allocation2 + $0xd88] sm:$0xff]
        %v817 = vld [vmem:[#allocation2 + $0xd90] sm:$0xff]
        %v818 = vld [vmem:[#allocation2 + $0xd98] sm:$0xff]
        %v819 = vld [vmem:[#allocation2 + $0xda0] sm:$0xff]
        %v820 = vld [vmem:[#allocation2 + $0xda8] sm:$0xff]
        %v821 = vld [vmem:[#allocation2 + $0xdb0] sm:$0xff]
        %v822 = vld [vmem:[#allocation2 + $0xdb8] sm:$0xff]
        %v823 = vld [vmem:[#allocation2 + $0xdc0] sm:$0xff]
        %v824 = vld [vmem:[#allocation2 + $0xdc8] sm:$0xff]
        %v825 = vld [vmem:[#allocation2 + $0xdd0] sm:$0xff]
        %v826 = vld [vmem:[#allocation2 + $0xdd8] sm:$0xff]
        %v827 = vld [vmem:[#allocation2 + $0xde0] sm:$0xff]
        %v828 = vld [vmem:[#allocation2 + $0xde8] sm:$0xff]
        %v829 = vld [vmem:[#allocation2 + $0xdf0] sm:$0xff]
        %v830 = vld [vmem:[#allocation2 + $0xdf8] sm:$0xff]
        %v831 = vld [vmem:[#allocation2 + $0xe00] sm:$0xff]
        %v832 = vld [vmem:[#allocation2 + $0xe08] sm:$0xff]
        %v833 = vld [vmem:[#allocation2 + $0xe10] sm:$0xff]
        %v834 = vld [vmem:[#allocation2 + $0xe18] sm:$0xff]
        %v835 = vld [vmem:[#allocation2 + $0xe20] sm:$0xff]
        %v836 = vld [vmem:[#allocation2 + $0xe28] sm:$0xff]
        %v837 = vld [vmem:[#allocation2 + $0xe30] sm:$0xff]
        %v838 = vld [vmem:[#allocation2 + $0xe38] sm:$0xff]
        %v839 = vld [vmem:[#allocation2 + $0xe40] sm:$0xff]
        %v840 = vld [vmem:[#allocation2 + $0xe48] sm:$0xff]
        %v841 = vld [vmem:[#allocation2 + $0xe50] sm:$0xff]
        %v842 = vld [vmem:[#allocation2 + $0xe58] sm:$0xff]
        %v843 = vld [vmem:[#allocation2 + $0xe60] sm:$0xff]
        %v844 = vld [vmem:[#allocation2 + $0xe68] sm:$0xff]
        %v845 = vld [vmem:[#allocation2 + $0xe70] sm:$0xff]
        %v846 = vld [vmem:[#allocation2 + $0xe78] sm:$0xff]
        %v847 = vld [vmem:[#allocation2 + $0xe80] sm:$0xff]
        %v848 = vld [vmem:[#allocation2 + $0xe88] sm:$0xff]
        %v849 = vld [vmem:[#allocation2 + $0xe90] sm:$0xff]
        %v850 = vld [vmem:[#allocation2 + $0xe98] sm:$0xff]
        %v851 = vld [vmem:[#allocation2 + $0xea0] sm:$0xff]
        %v852 = vld [vmem:[#allocation2 + $0xea8] sm:$0xff]
        %v853 = vld [vmem:[#allocation2 + $0xeb0] sm:$0xff]
        %v854 = vld [vmem:[#allocation2 + $0xeb8] sm:$0xff]
        %v855 = vld [vmem:[#allocation2 + $0xec0] sm:$0xff]
        %v856 = vld [vmem:[#allocation2 + $0xec8] sm:$0xff]
        %v857 = vld [vmem:[#allocation2 + $0xed0] sm:$0xff]
        %v858 = vld [vmem:[#allocation2 + $0xed8] sm:$0xff]
        %v859 = vld [vmem:[#allocation2 + $0xee0] sm:$0xff]
        %v860 = vld [vmem:[#allocation2 + $0xee8] sm:$0xff]
        %v861 = vld [vmem:[#allocation2 + $0xef0] sm:$0xff]
        %v862 = vld [vmem:[#allocation2 + $0xef8] sm:$0xff]
        %v863 = vld [vmem:[#allocation2 + $0xf00] sm:$0xff]
        %v864 = vld [vmem:[#allocation2 + $0xf08] sm:$0xff]
        %v865 = vld [vmem:[#allocation2 + $0xf10] sm:$0xff]
        %v866 = vld [vmem:[#allocation2 + $0xf18] sm:$0xff]
        %v867 = vld [vmem:[#allocation2 + $0xf20] sm:$0xff]
        %v868 = vld [vmem:[#allocation2 + $0xf28] sm:$0xff]
        %v869 = vld [vmem:[#allocation2 + $0xf30] sm:$0xff]
        %v870 = vld [vmem:[#allocation2 + $0xf38] sm:$0xff]
        %v871 = vld [vmem:[#allocation2 + $0xf40] sm:$0xff]
        %v872 = vld [vmem:[#allocation2 + $0xf48] sm:$0xff]
        %v873 = vld [vmem:[#allocation2 + $0xf50] sm:$0xff]
        %v874 = vld [vmem:[#allocation2 + $0xf58] sm:$0xff]
        %v875 = vld [vmem:[#allocation2 + $0xf60] sm:$0xff]
        %v876 = vld [vmem:[#allocation2 + $0xf68] sm:$0xff]
        %v877 = vld [vmem:[#allocation2 + $0xf70] sm:$0xff]
        %v878 = vld [vmem:[#allocation2 + $0xf78] sm:$0xff]
        %v879 = vld [vmem:[#allocation2 + $0xf80] sm:$0xff]
        %v880 = vld [vmem:[#allocation2 + $0xf88] sm:$0xff]
        %v881 = vld [vmem:[#allocation2 + $0xf90] sm:$0xff]
        %v882 = vld [vmem:[#allocation2 + $0xf98] sm:$0xff]
        %v883 = vld [vmem:[#allocation2 + $0xfa0] sm:$0xff]
        %v884 = vld [vmem:[#allocation2 + $0xfa8] sm:$0xff]
        %v885 = vld [vmem:[#allocation2 + $0xfb0] sm:$0xff]
        %v886 = vld [vmem:[#allocation2 + $0xfb8] sm:$0xff]
        %v887 = vld [vmem:[#allocation2 + $0xfc0] sm:$0xff]
        %v888 = vld [vmem:[#allocation2 + $0xfc8] sm:$0xff]
        %v889 = vld [vmem:[#allocation2 + $0xfd0] sm:$0xff]
        %v890 = vld [vmem:[#allocation2 + $0xfd8] sm:$0xff]
        %v891 = vld [vmem:[#allocation2 + $0xfe0] sm:$0xff]
        %v892 = vld [vmem:[#allocation2 + $0xfe8] sm:$0xff]
        %v893 = vld [vmem:[#allocation2 + $0xff0] sm:$0xff]
        %v894 = vld [vmem:[#allocation2 + $0xff8] sm:$0xff]
        %vm895 = vsmask.f32 7424
        %v897 = vshrl.u32 %v367, 16
        %v899 = vshll.u32 %v367, 16
        %v901 = vrot.slane %v899, 1
        %v902 = vor.u32 %v897, %v901
        %v904 = vshll.u32 %v369, 16
        %v906 = vrot.slane %v904, 1
        %v907 = vsel %vm895, %v902, %v906
        %v909 = vshrl.u32 %v368, 16
        %v911 = vshll.u32 %v368, 16
        %v913 = vrot.slane %v911, 1
        %v914 = vor.u32 %v909, %v913
        %v916 = vshll.u32 %v370, 16
        %v918 = vrot.slane %v916, 1
        %v919 = vsel %vm895, %v914, %v918
        %v920 = vshrl.u32 %v369, 16
        %v922 = vor.u32 %v920, %v906
        %v924 = vshll.u32 %v381, 16
        %v926 = vrot.slane %v924, 1
        %v927 = vsel %vm895, %v922, %v926
        %v928 = vshrl.u32 %v370, 16
        %v930 = vor.u32 %v928, %v918
        %v932 = vshll.u32 %v382, 16
        %v934 = vrot.slane %v932, 1
        %v935 = vsel %vm895, %v930, %v934
        %v1068 = vunpack.c.l.b16 %v511
        %v1069 = vunpack.c.h.b16 %v511
        %v1070 = vunpack.c.l.b16 %v512
        %v1071 = vunpack.c.h.b16 %v512
        %v1072 = vunpack.c.l.b16 %v513
        %v1073 = vunpack.c.h.b16 %v513
        %v1074 = vunpack.c.l.b16 %v514
        %v1075 = vunpack.c.h.b16 %v514
        %v1076 = vunpack.c.l.b16 %v515
        %v1077 = vunpack.c.h.b16 %v515
        %v1078 = vunpack.c.l.b16 %v516
        %v1079 = vunpack.c.h.b16 %v516
        %v1080 = vunpack.c.l.b16 %v517
        %v1081 = vunpack.c.h.b16 %v517
        %v1082 = vunpack.c.l.b16 %v518
        %v1083 = vunpack.c.h.b16 %v518
        %v1084 = vunpack.c.l.b16 %v519
        %v1085 = vunpack.c.h.b16 %v519
        %v1086 = vunpack.c.l.b16 %v520
        %v1087 = vunpack.c.h.b16 %v520
        %v1088 = vunpack.c.l.b16 %v521
        %v1089 = vunpack.c.h.b16 %v521
        %v1090 = vunpack.c.l.b16 %v522
        %v1091 = vunpack.c.h.b16 %v522
        %v1092 = vunpack.c.l.b16 %v523
        %v1093 = vunpack.c.h.b16 %v523
        %v1094 = vunpack.c.l.b16 %v524
        %v1095 = vunpack.c.h.b16 %v524
        %v1096 = vunpack.c.l.b16 %v525
        %v1097 = vunpack.c.h.b16 %v525
        %v1098 = vunpack.c.l.b16 %v526
        %v1099 = vunpack.c.h.b16 %v526
        %v1100 = vunpack.c.l.b16 %v527
        %v1101 = vunpack.c.h.b16 %v527
        %v1102 = vunpack.c.l.b16 %v528
        %v1103 = vunpack.c.h.b16 %v528
        %v1104 = vunpack.c.l.b16 %v529
        %v1105 = vunpack.c.h.b16 %v529
        %v1106 = vunpack.c.l.b16 %v530
        %v1107 = vunpack.c.h.b16 %v530
        %v1108 = vunpack.c.l.b16 %v531
        %v1109 = vunpack.c.h.b16 %v531
        %v1110 = vunpack.c.l.b16 %v532
        %v1111 = vunpack.c.h.b16 %v532
        %v1112 = vunpack.c.l.b16 %v533
        %v1113 = vunpack.c.h.b16 %v533
        %v1114 = vunpack.c.l.b16 %v534
        %v1115 = vunpack.c.h.b16 %v534
        %v1116 = vunpack.c.l.b16 %v535
        %v1117 = vunpack.c.h.b16 %v535
        %v1118 = vunpack.c.l.b16 %v536
        %v1119 = vunpack.c.h.b16 %v536
        %v1120 = vunpack.c.l.b16 %v537
        %v1121 = vunpack.c.h.b16 %v537
        %v1122 = vunpack.c.l.b16 %v538
        %v1123 = vunpack.c.h.b16 %v538
        %v1124 = vunpack.c.l.b16 %v539
        %v1125 = vunpack.c.h.b16 %v539
        %v1126 = vunpack.c.l.b16 %v540
        %v1127 = vunpack.c.h.b16 %v540
        %v1128 = vunpack.c.l.b16 %v541
        %v1129 = vunpack.c.h.b16 %v541
        %v1130 = vunpack.c.l.b16 %v542
        %v1131 = vunpack.c.h.b16 %v542
        %v1132 = vunpack.c.l.b16 %v543
        %v1133 = vunpack.c.h.b16 %v543
        %v1134 = vunpack.c.l.b16 %v544
        %v1135 = vunpack.c.h.b16 %v544
        %v1136 = vunpack.c.l.b16 %v545
        %v1137 = vunpack.c.h.b16 %v545
        %v1138 = vunpack.c.l.b16 %v546
        %v1139 = vunpack.c.h.b16 %v546
        %v1140 = vunpack.c.l.b16 %v547
        %v1141 = vunpack.c.h.b16 %v547
        %v1142 = vunpack.c.l.b16 %v548
        %v1143 = vunpack.c.h.b16 %v548
        %v1144 = vunpack.c.l.b16 %v549
        %v1145 = vunpack.c.h.b16 %v549
        %v1146 = vunpack.c.l.b16 %v550
        %v1147 = vunpack.c.h.b16 %v550
        %v1148 = vunpack.c.l.b16 %v551
        %v1149 = vunpack.c.h.b16 %v551
        %v1150 = vunpack.c.l.b16 %v552
        %v1151 = vunpack.c.h.b16 %v552
        %v1152 = vunpack.c.l.b16 %v553
        %v1153 = vunpack.c.h.b16 %v553
        %v1154 = vunpack.c.l.b16 %v554
        %v1155 = vunpack.c.h.b16 %v554
        %v1156 = vunpack.c.l.b16 %v555
        %v1157 = vunpack.c.h.b16 %v555
        %v1158 = vunpack.c.l.b16 %v556
        %v1159 = vunpack.c.h.b16 %v556
        %v1160 = vunpack.c.l.b16 %v557
        %v1161 = vunpack.c.h.b16 %v557
        %v1162 = vunpack.c.l.b16 %v558
        %v1163 = vunpack.c.h.b16 %v558
        %v1164 = vunpack.c.l.b16 %v559
        %v1165 = vunpack.c.h.b16 %v559
        %v1166 = vunpack.c.l.b16 %v560
        %v1167 = vunpack.c.h.b16 %v560
        %v1168 = vunpack.c.l.b16 %v561
        %v1169 = vunpack.c.h.b16 %v561
        %v1170 = vunpack.c.l.b16 %v562
        %v1171 = vunpack.c.h.b16 %v562
        %v1172 = vunpack.c.l.b16 %v563
        %v1173 = vunpack.c.h.b16 %v563
        %v1174 = vunpack.c.l.b16 %v564
        %v1175 = vunpack.c.h.b16 %v564
        %v1176 = vunpack.c.l.b16 %v565
        %v1177 = vunpack.c.h.b16 %v565
        %v1178 = vunpack.c.l.b16 %v566
        %v1179 = vunpack.c.h.b16 %v566
        %v1180 = vunpack.c.l.b16 %v567
        %v1181 = vunpack.c.h.b16 %v567
        %v1182 = vunpack.c.l.b16 %v568
        %v1183 = vunpack.c.h.b16 %v568
        %v1184 = vunpack.c.l.b16 %v569
        %v1185 = vunpack.c.h.b16 %v569
        %v1186 = vunpack.c.l.b16 %v570
        %v1187 = vunpack.c.h.b16 %v570
        %v1188 = vunpack.c.l.b16 %v571
        %v1189 = vunpack.c.h.b16 %v571
        %v1190 = vunpack.c.l.b16 %v572
        %v1191 = vunpack.c.h.b16 %v572
        %v1192 = vunpack.c.l.b16 %v573
        %v1193 = vunpack.c.h.b16 %v573
        %v1194 = vunpack.c.l.b16 %v574
        %v1195 = vunpack.c.h.b16 %v574
        %v1196 = vunpack.c.l.b16 %v575
        %v1197 = vunpack.c.h.b16 %v575
        %v1198 = vunpack.c.l.b16 %v576
        %v1199 = vunpack.c.h.b16 %v576
        %v1200 = vunpack.c.l.b16 %v577
        %v1201 = vunpack.c.h.b16 %v577
        %v1202 = vunpack.c.l.b16 %v578
        %v1203 = vunpack.c.h.b16 %v578
        %v1204 = vunpack.c.l.b16 %v579
        %v1205 = vunpack.c.h.b16 %v579
        %v1206 = vunpack.c.l.b16 %v580
        %v1207 = vunpack.c.h.b16 %v580
        %v1208 = vunpack.c.l.b16 %v581
        %v1209 = vunpack.c.h.b16 %v581
        %v1210 = vunpack.c.l.b16 %v582
        %v1211 = vunpack.c.h.b16 %v582
        %v1212 = vunpack.c.l.b16 %v583
        %v1213 = vunpack.c.h.b16 %v583
        %v1214 = vunpack.c.l.b16 %v584
        %v1215 = vunpack.c.h.b16 %v584
        %v1216 = vunpack.c.l.b16 %v585
        %v1217 = vunpack.c.h.b16 %v585
        %v1218 = vunpack.c.l.b16 %v586
        %v1219 = vunpack.c.h.b16 %v586
        %v1220 = vunpack.c.l.b16 %v587
        %v1221 = vunpack.c.h.b16 %v587
        %v1222 = vunpack.c.l.b16 %v588
        %v1223 = vunpack.c.h.b16 %v588
        %v1224 = vunpack.c.l.b16 %v589
        %v1225 = vunpack.c.h.b16 %v589
        %v1226 = vunpack.c.l.b16 %v590
        %v1227 = vunpack.c.h.b16 %v590
        %v1228 = vunpack.c.l.b16 %v591
        %v1229 = vunpack.c.h.b16 %v591
        %v1230 = vunpack.c.l.b16 %v592
        %v1231 = vunpack.c.h.b16 %v592
        %v1232 = vunpack.c.l.b16 %v593
        %v1233 = vunpack.c.h.b16 %v593
        %v1234 = vunpack.c.l.b16 %v594
        %v1235 = vunpack.c.h.b16 %v594
        %v1236 = vunpack.c.l.b16 %v595
        %v1237 = vunpack.c.h.b16 %v595
        %v1238 = vunpack.c.l.b16 %v596
        %v1239 = vunpack.c.h.b16 %v596
        %v1240 = vunpack.c.l.b16 %v597
        %v1241 = vunpack.c.h.b16 %v597
        %v1242 = vunpack.c.l.b16 %v598
        %v1243 = vunpack.c.h.b16 %v598
        %v1244 = vunpack.c.l.b16 %v599
        %v1245 = vunpack.c.h.b16 %v599
        %v1246 = vunpack.c.l.b16 %v600
        %v1247 = vunpack.c.h.b16 %v600
        %v1248 = vunpack.c.l.b16 %v601
        %v1249 = vunpack.c.h.b16 %v601
        %v1250 = vunpack.c.l.b16 %v602
        %v1251 = vunpack.c.h.b16 %v602
        %v1252 = vunpack.c.l.b16 %v603
        %v1253 = vunpack.c.h.b16 %v603
        %v1254 = vunpack.c.l.b16 %v604
        %v1255 = vunpack.c.h.b16 %v604
        %v1256 = vunpack.c.l.b16 %v605
        %v1257 = vunpack.c.h.b16 %v605
        %v1258 = vunpack.c.l.b16 %v606
        %v1259 = vunpack.c.h.b16 %v606
        %v1260 = vunpack.c.l.b16 %v607
        %v1261 = vunpack.c.h.b16 %v607
        %v1262 = vunpack.c.l.b16 %v608
        %v1263 = vunpack.c.h.b16 %v608
        %v1264 = vunpack.c.l.b16 %v609
        %v1265 = vunpack.c.h.b16 %v609
        %v1266 = vunpack.c.l.b16 %v610
        %v1267 = vunpack.c.h.b16 %v610
        %v1268 = vunpack.c.l.b16 %v611
        %v1269 = vunpack.c.h.b16 %v611
        %v1270 = vunpack.c.l.b16 %v612
        %v1271 = vunpack.c.h.b16 %v612
        %v1272 = vunpack.c.l.b16 %v613
        %v1273 = vunpack.c.h.b16 %v613
        %v1274 = vunpack.c.l.b16 %v614
        %v1275 = vunpack.c.h.b16 %v614
        %v1276 = vunpack.c.l.b16 %v615
        %v1277 = vunpack.c.h.b16 %v615
        %v1278 = vunpack.c.l.b16 %v616
        %v1279 = vunpack.c.h.b16 %v616
        %v1280 = vunpack.c.l.b16 %v617
        %v1281 = vunpack.c.h.b16 %v617
        %v1282 = vunpack.c.l.b16 %v618
        %v1283 = vunpack.c.h.b16 %v618
        %v1284 = vunpack.c.l.b16 %v619
        %v1285 = vunpack.c.h.b16 %v619
        %v1286 = vunpack.c.l.b16 %v620
        %v1287 = vunpack.c.h.b16 %v620
        %v1288 = vunpack.c.l.b16 %v621
        %v1289 = vunpack.c.h.b16 %v621
        %v1290 = vunpack.c.l.b16 %v622
        %v1291 = vunpack.c.h.b16 %v622
        %v1292 = vunpack.c.l.b16 %v623
        %v1293 = vunpack.c.h.b16 %v623
        %v1294 = vunpack.c.l.b16 %v624
        %v1295 = vunpack.c.h.b16 %v624
        %v1296 = vunpack.c.l.b16 %v625
        %v1297 = vunpack.c.h.b16 %v625
        %v1298 = vunpack.c.l.b16 %v626
        %v1299 = vunpack.c.h.b16 %v626
        %v1300 = vunpack.c.l.b16 %v627
        %v1301 = vunpack.c.h.b16 %v627
        %v1302 = vunpack.c.l.b16 %v628
        %v1303 = vunpack.c.h.b16 %v628
        %v1304 = vunpack.c.l.b16 %v629
        %v1305 = vunpack.c.h.b16 %v629
        %v1306 = vunpack.c.l.b16 %v630
        %v1307 = vunpack.c.h.b16 %v630
        %v1308 = vunpack.c.l.b16 %v631
        %v1309 = vunpack.c.h.b16 %v631
        %v1310 = vunpack.c.l.b16 %v632
        %v1311 = vunpack.c.h.b16 %v632
        %v1312 = vunpack.c.l.b16 %v633
        %v1313 = vunpack.c.h.b16 %v633
        %v1314 = vunpack.c.l.b16 %v634
        %v1315 = vunpack.c.h.b16 %v634
        %v1316 = vunpack.c.l.b16 %v635
        %v1317 = vunpack.c.h.b16 %v635
        %v1318 = vunpack.c.l.b16 %v636
        %v1319 = vunpack.c.h.b16 %v636
        %v1320 = vunpack.c.l.b16 %v637
        %v1321 = vunpack.c.h.b16 %v637
        %v1322 = vunpack.c.l.b16 %v638
        %v1323 = vunpack.c.h.b16 %v638
        %v1324 = vpack.c.b16 %v1076, %v1068
        %v1325 = vpack.c.b16 %v1077, %v1069
        %v1326 = vpack.c.b16 %v1078, %v1070
        %v1327 = vpack.c.b16 %v1079, %v1071
        %v1328 = vpack.c.b16 %v1080, %v1072
        %v1329 = vpack.c.b16 %v1081, %v1073
        %v1330 = vpack.c.b16 %v1082, %v1074
        %v1331 = vpack.c.b16 %v1083, %v1075
        %v1332 = vpack.c.b16 %v1092, %v1084
        %v1333 = vpack.c.b16 %v1093, %v1085
        %v1334 = vpack.c.b16 %v1094, %v1086
        %v1335 = vpack.c.b16 %v1095, %v1087
        %v1336 = vpack.c.b16 %v1096, %v1088
        %v1337 = vpack.c.b16 %v1097, %v1089
        %v1338 = vpack.c.b16 %v1098, %v1090
        %v1339 = vpack.c.b16 %v1099, %v1091
        %v1340 = vpack.c.b16 %v1108, %v1100
        %v1341 = vpack.c.b16 %v1109, %v1101
        %v1342 = vpack.c.b16 %v1110, %v1102
        %v1343 = vpack.c.b16 %v1111, %v1103
        %v1344 = vpack.c.b16 %v1112, %v1104
        %v1345 = vpack.c.b16 %v1113, %v1105
        %v1346 = vpack.c.b16 %v1114, %v1106
        %v1347 = vpack.c.b16 %v1115, %v1107
        %v1348 = vpack.c.b16 %v1124, %v1116
        %v1349 = vpack.c.b16 %v1125, %v1117
        %v1350 = vpack.c.b16 %v1126, %v1118
        %v1351 = vpack.c.b16 %v1127, %v1119
        %v1352 = vpack.c.b16 %v1128, %v1120
        %v1353 = vpack.c.b16 %v1129, %v1121
        %v1354 = vpack.c.b16 %v1130, %v1122
        %v1355 = vpack.c.b16 %v1131, %v1123
        %v1356 = vpack.c.b16 %v1140, %v1132
        %v1357 = vpack.c.b16 %v1141, %v1133
        %v1358 = vpack.c.b16 %v1142, %v1134
        %v1359 = vpack.c.b16 %v1143, %v1135
        %v1360 = vpack.c.b16 %v1144, %v1136
        %v1361 = vpack.c.b16 %v1145, %v1137
        %v1362 = vpack.c.b16 %v1146, %v1138
        %v1363 = vpack.c.b16 %v1147, %v1139
        %v1364 = vpack.c.b16 %v1156, %v1148
        %v1365 = vpack.c.b16 %v1157, %v1149
        %v1366 = vpack.c.b16 %v1158, %v1150
        %v1367 = vpack.c.b16 %v1159, %v1151
        %v1368 = vpack.c.b16 %v1160, %v1152
        %v1369 = vpack.c.b16 %v1161, %v1153
        %v1370 = vpack.c.b16 %v1162, %v1154
        %v1371 = vpack.c.b16 %v1163, %v1155
        %v1372 = vpack.c.b16 %v1172, %v1164
        %v1373 = vpack.c.b16 %v1173, %v1165
        %v1374 = vpack.c.b16 %v1174, %v1166
        %v1375 = vpack.c.b16 %v1175, %v1167
        %v1376 = vpack.c.b16 %v1176, %v1168
        %v1377 = vpack.c.b16 %v1177, %v1169
        %v1378 = vpack.c.b16 %v1178, %v1170
        %v1379 = vpack.c.b16 %v1179, %v1171
        %v1380 = vpack.c.b16 %v1188, %v1180
        %v1381 = vpack.c.b16 %v1189, %v1181
        %v1382 = vpack.c.b16 %v1190, %v1182
        %v1383 = vpack.c.b16 %v1191, %v1183
        %v1384 = vpack.c.b16 %v1192, %v1184
        %v1385 = vpack.c.b16 %v1193, %v1185
        %v1386 = vpack.c.b16 %v1194, %v1186
        %v1387 = vpack.c.b16 %v1195, %v1187
        %v1388 = vpack.c.b16 %v1204, %v1196
        %v1389 = vpack.c.b16 %v1205, %v1197
        %v1390 = vpack.c.b16 %v1206, %v1198
        %v1391 = vpack.c.b16 %v1207, %v1199
        %v1392 = vpack.c.b16 %v1208, %v1200
        %v1393 = vpack.c.b16 %v1209, %v1201
        %v1394 = vpack.c.b16 %v1210, %v1202
        %v1395 = vpack.c.b16 %v1211, %v1203
        %v1396 = vpack.c.b16 %v1220, %v1212
        %v1397 = vpack.c.b16 %v1221, %v1213
        %v1398 = vpack.c.b16 %v1222, %v1214
        %v1399 = vpack.c.b16 %v1223, %v1215
        %v1400 = vpack.c.b16 %v1224, %v1216
        %v1401 = vpack.c.b16 %v1225, %v1217
        %v1402 = vpack.c.b16 %v1226, %v1218
        %v1403 = vpack.c.b16 %v1227, %v1219
        %v1404 = vpack.c.b16 %v1236, %v1228
        %v1405 = vpack.c.b16 %v1237, %v1229
        %v1406 = vpack.c.b16 %v1238, %v1230
        %v1407 = vpack.c.b16 %v1239, %v1231
        %v1408 = vpack.c.b16 %v1240, %v1232
        %v1409 = vpack.c.b16 %v1241, %v1233
        %v1410 = vpack.c.b16 %v1242, %v1234
        %v1411 = vpack.c.b16 %v1243, %v1235
        %v1412 = vpack.c.b16 %v1252, %v1244
        %v1413 = vpack.c.b16 %v1253, %v1245
        %v1414 = vpack.c.b16 %v1254, %v1246
        %v1415 = vpack.c.b16 %v1255, %v1247
        %v1416 = vpack.c.b16 %v1256, %v1248
        %v1417 = vpack.c.b16 %v1257, %v1249
        %v1418 = vpack.c.b16 %v1258, %v1250
        %v1419 = vpack.c.b16 %v1259, %v1251
        %v1420 = vpack.c.b16 %v1268, %v1260
        %v1421 = vpack.c.b16 %v1269, %v1261
        %v1422 = vpack.c.b16 %v1270, %v1262
        %v1423 = vpack.c.b16 %v1271, %v1263
        %v1424 = vpack.c.b16 %v1272, %v1264
        %v1425 = vpack.c.b16 %v1273, %v1265
        %v1426 = vpack.c.b16 %v1274, %v1266
        %v1427 = vpack.c.b16 %v1275, %v1267
        %v1428 = vpack.c.b16 %v1284, %v1276
        %v1429 = vpack.c.b16 %v1285, %v1277
        %v1430 = vpack.c.b16 %v1286, %v1278
        %v1431 = vpack.c.b16 %v1287, %v1279
        %v1432 = vpack.c.b16 %v1288, %v1280
        %v1433 = vpack.c.b16 %v1289, %v1281
        %v1434 = vpack.c.b16 %v1290, %v1282
        %v1435 = vpack.c.b16 %v1291, %v1283
        %v1436 = vpack.c.b16 %v1300, %v1292
        %v1437 = vpack.c.b16 %v1301, %v1293
        %v1438 = vpack.c.b16 %v1302, %v1294
        %v1439 = vpack.c.b16 %v1303, %v1295
        %v1440 = vpack.c.b16 %v1304, %v1296
        %v1441 = vpack.c.b16 %v1305, %v1297
        %v1442 = vpack.c.b16 %v1306, %v1298
        %v1443 = vpack.c.b16 %v1307, %v1299
        %v1444 = vpack.c.b16 %v1316, %v1308
        %v1445 = vpack.c.b16 %v1317, %v1309
        %v1446 = vpack.c.b16 %v1318, %v1310
        %v1447 = vpack.c.b16 %v1319, %v1311
        %v1448 = vpack.c.b16 %v1320, %v1312
        %v1449 = vpack.c.b16 %v1321, %v1313
        %v1450 = vpack.c.b16 %v1322, %v1314
        %v1451 = vpack.c.b16 %v1323, %v1315
        %1580 = vmatprep.subr.bf16.mxu0 %v1325
        %1581 = vmatpush1.bf16.msra.mxu0 %v1324
        %1582 = vmatprep.subr.bf16.mxu0 %v1333
        %1583 = vmatpush1.bf16.msra.mxu0 %v1332
        %1584 = vmatprep.subr.bf16.mxu0 %v1341
        %1585 = vmatpush1.bf16.msra.mxu0 %v1340
        %1586 = vmatprep.subr.bf16.mxu0 %v1349
        %1587 = vmatpush1.bf16.msra.mxu0 %v1348
        %1588 = vmatprep.subr.bf16.mxu0 %v1357
        %1589 = vmatpush1.bf16.msra.mxu0 %v1356
        %1590 = vmatprep.subr.bf16.mxu0 %v1365
        %1591 = vmatpush1.bf16.msra.mxu0 %v1364
        %1592 = vmatprep.subr.bf16.mxu0 %v1373
        %1593 = vmatpush1.bf16.msra.mxu0 %v1372
        %1594 = vmatprep.subr.bf16.mxu0 %v1381
        %1595 = vmatpush1.bf16.msra.mxu0 %v1380
        %1596 = vmatprep.subr.bf16.mxu0 %v1389
        %1597 = vmatpush1.bf16.msra.mxu0 %v1388
        %1598 = vmatprep.subr.bf16.mxu0 %v1397
        %1599 = vmatpush1.bf16.msra.mxu0 %v1396
        %1600 = vmatprep.subr.bf16.mxu0 %v1405
        %1601 = vmatpush1.bf16.msra.mxu0 %v1404
        %1602 = vmatprep.subr.bf16.mxu0 %v1413
        %1603 = vmatpush1.bf16.msra.mxu0 %v1412
        %1604 = vmatprep.subr.bf16.mxu0 %v1421
        %1605 = vmatpush1.bf16.msra.mxu0 %v1420
        %1606 = vmatprep.subr.bf16.mxu0 %v1429
        %1607 = vmatpush1.bf16.msra.mxu0 %v1428
        %1608 = vmatprep.subr.bf16.mxu0 %v1437
        %1609 = vmatpush1.bf16.msra.mxu0 %v1436
        %1610 = vmatprep.subr.bf16.mxu0 %v1445
        %1611 = vmatpush1.bf16.msra.mxu0 %v1444
        %1612 = vmatprep.mubr.bf16.mxu0 %v919
        %1613 = vmatmul.mubr.bf16.gmra.mrb[0].mxu0 %v907
        %v1614 = vpop.f32.mrb[0].mxu0
        %v1615 = vadd.f32 0.0, %v1614
        %v1616 = vpop.f32.mrb[0].mxu0
        %v1617 = vadd.f32 0.0, %v1616
        %v1618 = vpop.f32.mrb[0].mxu0
        %v1619 = vadd.f32 0.0, %v1618
        %v1620 = vpop.f32.mrb[0].mxu0
        %v1621 = vadd.f32 0.0, %v1620
        %1622 = vmatprep.mubr.bf16.mxu0 %v935
        %1623 = vmatmul.mubr.bf16.gmra.mrb[0].mxu0 %v927
        %v1624 = vpop.f32.mrb[0].mxu0
        %v1625 = vadd.f32 0.0, %v1624
        %v1626 = vpop.f32.mrb[0].mxu0
        %v1627 = vadd.f32 0.0, %v1626
        %v1628 = vpop.f32.mrb[0].mxu0
        %v1629 = vadd.f32 0.0, %v1628
        %v1630 = vpop.f32.mrb[0].mxu0
        %v1631 = vadd.f32 0.0, %v1630
        %1632 = vdwg.mxu0
        %1633 = vmatprep.subr.bf16.mxu0 %v1327
        %1634 = vmatpush1.bf16.msra.mxu0 %v1326
        %1635 = vmatprep.subr.bf16.mxu0 %v1335
        %1636 = vmatpush1.bf16.msra.mxu0 %v1334
        %1637 = vmatprep.subr.bf16.mxu0 %v1343
        %1638 = vmatpush1.bf16.msra.mxu0 %v1342
        %1639 = vmatprep.subr.bf16.mxu0 %v1351
        %1640 = vmatpush1.bf16.msra.mxu0 %v1350
        %1641 = vmatprep.subr.bf16.mxu0 %v1359
        %1642 = vmatpush1.bf16.msra.mxu0 %v1358
        %1643 = vmatprep.subr.bf16.mxu0 %v1367
        %1644 = vmatpush1.bf16.msra.mxu0 %v1366
        %1645 = vmatprep.subr.bf16.mxu0 %v1375
        %1646 = vmatpush1.bf16.msra.mxu0 %v1374
        %1647 = vmatprep.subr.bf16.mxu0 %v1383
        %1648 = vmatpush1.bf16.msra.mxu0 %v1382
        %1649 = vmatprep.subr.bf16.mxu0 %v1391
        %1650 = vmatpush1.bf16.msra.mxu0 %v1390
        %1651 = vmatprep.subr.bf16.mxu0 %v1399
        %1652 = vmatpush1.bf16.msra.mxu0 %v1398
        %1653 = vmatprep.subr.bf16.mxu0 %v1407
        %1654 = vmatpush1.bf16.msra.mxu0 %v1406
        %1655 = vmatprep.subr.bf16.mxu0 %v1415
        %1656 = vmatpush1.bf16.msra.mxu0 %v1414
        %1657 = vmatprep.subr.bf16.mxu0 %v1423
        %1658 = vmatpush1.bf16.msra.mxu0 %v1422
        %1659 = vmatprep.subr.bf16.mxu0 %v1431
        %1660 = vmatpush1.bf16.msra.mxu0 %v1430
        %1661 = vmatprep.subr.bf16.mxu0 %v1439
        %1662 = vmatpush1.bf16.msra.mxu0 %v1438
        %1663 = vmatprep.subr.bf16.mxu0 %v1447
        %1664 = vmatpush1.bf16.msra.mxu0 %v1446
        %1665 = vmatprep.mubr.bf16.mxu0 %v919
        %1666 = vmatmul.mubr.bf16.gmra.mrb[0].mxu0 %v907
        %v1667 = vpop.f32.mrb[0].mxu0
        %v1668 = vadd.f32 0.0, %v1667
        %v1669 = vpop.f32.mrb[0].mxu0
        %v1670 = vadd.f32 0.0, %v1669
        %v1671 = vpop.f32.mrb[0].mxu0
        %v1672 = vadd.f32 0.0, %v1671
        %v1673 = vpop.f32.mrb[0].mxu0
        %v1674 = vadd.f32 0.0, %v1673
        %1675 = vmatprep.mubr.bf16.mxu0 %v935
        %1676 = vmatmul.mubr.bf16.gmra.mrb[0].mxu0 %v927
        %v1677 = vpop.f32.mrb[0].mxu0
        %v1678 = vadd.f32 0.0, %v1677
        %v1679 = vpop.f32.mrb[0].mxu0
        %v1680 = vadd.f32 0.0, %v1679
        %v1681 = vpop.f32.mrb[0].mxu0
        %v1682 = vadd.f32 0.0, %v1681
        %v1683 = vpop.f32.mrb[0].mxu0
        %v1684 = vadd.f32 0.0, %v1683
        %1685 = vdwg.mxu0
        %1686 = vmatprep.subr.bf16.mxu0 %v1329
        %1687 = vmatpush1.bf16.msra.mxu0 %v1328
        %1688 = vmatprep.subr.bf16.mxu0 %v1337
        %1689 = vmatpush1.bf16.msra.mxu0 %v1336
        %1690 = vmatprep.subr.bf16.mxu0 %v1345
        %1691 = vmatpush1.bf16.msra.mxu0 %v1344
        %1692 = vmatprep.subr.bf16.mxu0 %v1353
        %1693 = vmatpush1.bf16.msra.mxu0 %v1352
        %1694 = vmatprep.subr.bf16.mxu0 %v1361
        %1695 = vmatpush1.bf16.msra.mxu0 %v1360
        %1696 = vmatprep.subr.bf16.mxu0 %v1369
        %1697 = vmatpush1.bf16.msra.mxu0 %v1368
        %1698 = vmatprep.subr.bf16.mxu0 %v1377
        %1699 = vmatpush1.bf16.msra.mxu0 %v1376
        %1700 = vmatprep.subr.bf16.mxu0 %v1385
        %1701 = vmatpush1.bf16.msra.mxu0 %v1384
        %1702 = vmatprep.subr.bf16.mxu0 %v1393
        %1703 = vmatpush1.bf16.msra.mxu0 %v1392
        %1704 = vmatprep.subr.bf16.mxu0 %v1401
        %1705 = vmatpush1.bf16.msra.mxu0 %v1400
        %1706 = vmatprep.subr.bf16.mxu0 %v1409
        %1707 = vmatpush1.bf16.msra.mxu0 %v1408
        %1708 = vmatprep.subr.bf16.mxu0 %v1417
        %1709 = vmatpush1.bf16.msra.mxu0 %v1416
        %1710 = vmatprep.subr.bf16.mxu0 %v1425
        %1711 = vmatpush1.bf16.msra.mxu0 %v1424
        %1712 = vmatprep.subr.bf16.mxu0 %v1433
        %1713 = vmatpush1.bf16.msra.mxu0 %v1432
        %1714 = vmatprep.subr.bf16.mxu0 %v1441
        %1715 = vmatpush1.bf16.msra.mxu0 %v1440
        %1716 = vmatprep.subr.bf16.mxu0 %v1449
        %1717 = vmatpush1.bf16.msra.mxu0 %v1448
        %1718 = vmatprep.mubr.bf16.mxu0 %v919
        %1719 = vmatmul.mubr.bf16.gmra.mrb[0].mxu0 %v907
        %v1720 = vpop.f32.mrb[0].mxu0
        %v1721 = vadd.f32 0.0, %v1720
        %v1722 = vpop.f32.mrb[0].mxu0
        %v1723 = vadd.f32 0.0, %v1722
        %v1724 = vpop.f32.mrb[0].mxu0
        %v1725 = vadd.f32 0.0, %v1724
        %v1726 = vpop.f32.mrb[0].mxu0
        %v1727 = vadd.f32 0.0, %v1726
        %1728 = vmatprep.mubr.bf16.mxu0 %v935
        %1729 = vmatmul.mubr.bf16.gmra.mrb[0].mxu0 %v927
        %v1730 = vpop.f32.mrb[0].mxu0
        %v1731 = vadd.f32 0.0, %v1730
        %v1732 = vpop.f32.mrb[0].mxu0
        %v1733 = vadd.f32 0.0, %v1732
        %v1734 = vpop.f32.mrb[0].mxu0
        %v1735 = vadd.f32 0.0, %v1734
        %v1736 = vpop.f32.mrb[0].mxu0
        %v1737 = vadd.f32 0.0, %v1736
        %1738 = vdwg.mxu0
        %1739 = vmatprep.subr.bf16.mxu0 %v1331
        %1740 = vmatpush1.bf16.msra.mxu0 %v1330
        %1741 = vmatprep.subr.bf16.mxu0 %v1339
        %1742 = vmatpush1.bf16.msra.mxu0 %v1338
        %1743 = vmatprep.subr.bf16.mxu0 %v1347
        %1744 = vmatpush1.bf16.msra.mxu0 %v1346
        %1745 = vmatprep.subr.bf16.mxu0 %v1355
        %1746 = vmatpush1.bf16.msra.mxu0 %v1354
        %1747 = vmatprep.subr.bf16.mxu0 %v1363
        %1748 = vmatpush1.bf16.msra.mxu0 %v1362
        %1749 = vmatprep.subr.bf16.mxu0 %v1371
        %1750 = vmatpush1.bf16.msra.mxu0 %v1370
        %1751 = vmatprep.subr.bf16.mxu0 %v1379
        %1752 = vmatpush1.bf16.msra.mxu0 %v1378
        %1753 = vmatprep.subr.bf16.mxu0 %v1387
        %1754 = vmatpush1.bf16.msra.mxu0 %v1386
        %1755 = vmatprep.subr.bf16.mxu0 %v1395
        %1756 = vmatpush1.bf16.msra.mxu0 %v1394
        %1757 = vmatprep.subr.bf16.mxu0 %v1403
        %1758 = vmatpush1.bf16.msra.mxu0 %v1402
        %1759 = vmatprep.subr.bf16.mxu0 %v1411
        %1760 = vmatpush1.bf16.msra.mxu0 %v1410
        %1761 = vmatprep.subr.bf16.mxu0 %v1419
        %1762 = vmatpush1.bf16.msra.mxu0 %v1418
        %1763 = vmatprep.subr.bf16.mxu0 %v1427
        %1764 = vmatpush1.bf16.msra.mxu0 %v1426
        %1765 = vmatprep.subr.bf16.mxu0 %v1435
        %1766 = vmatpush1.bf16.msra.mxu0 %v1434
        %1767 = vmatprep.subr.bf16.mxu0 %v1443
        %1768 = vmatpush1.bf16.msra.mxu0 %v1442
        %1769 = vmatprep.subr.bf16.mxu0 %v1451
        %1770 = vmatpush1.bf16.msra.mxu0 %v1450
        %1771 = vmatprep.mubr.bf16.mxu0 %v919
        %1772 = vmatmul.mubr.bf16.gmra.mrb[0].mxu0 %v907
        %v1773 = vpop.f32.mrb[0].mxu0
        %v1774 = vadd.f32 0.0, %v1773
        %v1775 = vpop.f32.mrb[0].mxu0
        %v1776 = vadd.f32 0.0, %v1775
        %v1777 = vpop.f32.mrb[0].mxu0
        %v1778 = vadd.f32 0.0, %v1777
        %v1779 = vpop.f32.mrb[0].mxu0
        %v1780 = vadd.f32 0.0, %v1779
        %1781 = vmatprep.mubr.bf16.mxu0 %v935
        %1782 = vmatmul.mubr.bf16.gmra.mrb[0].mxu0 %v927
        %v1783 = vpop.f32.mrb[0].mxu0
        %v1784 = vadd.f32 0.0, %v1783
        %v1785 = vpop.f32.mrb[0].mxu0
        %v1786 = vadd.f32 0.0, %v1785
        %v1787 = vpop.f32.mrb[0].mxu0
        %v1788 = vadd.f32 0.0, %v1787
        %v1789 = vpop.f32.mrb[0].mxu0
        %v1790 = vadd.f32 0.0, %v1789
        %1791 = vdwg.mxu0
        %v1920 = vunpack.c.l.b16 %v383
        %v1921 = vunpack.c.h.b16 %v383
        %v1922 = vunpack.c.l.b16 %v384
        %v1923 = vunpack.c.h.b16 %v384
        %v1924 = vunpack.c.l.b16 %v385
        %v1925 = vunpack.c.h.b16 %v385
        %v1926 = vunpack.c.l.b16 %v386
        %v1927 = vunpack.c.h.b16 %v386
        %v1928 = vunpack.c.l.b16 %v387
        %v1929 = vunpack.c.h.b16 %v387
        %v1930 = vunpack.c.l.b16 %v388
        %v1931 = vunpack.c.h.b16 %v388
        %v1932 = vunpack.c.l.b16 %v389
        %v1933 = vunpack.c.h.b16 %v389
        %v1934 = vunpack.c.l.b16 %v390
        %v1935 = vunpack.c.h.b16 %v390
        %v1936 = vunpack.c.l.b16 %v391
        %v1937 = vunpack.c.h.b16 %v391
        %v1938 = vunpack.c.l.b16 %v392
        %v1939 = vunpack.c.h.b16 %v392
        %v1940 = vunpack.c.l.b16 %v393
        %v1941 = vunpack.c.h.b16 %v393
        %v1942 = vunpack.c.l.b16 %v394
        %v1943 = vunpack.c.h.b16 %v394
        %v1944 = vunpack.c.l.b16 %v395
        %v1945 = vunpack.c.h.b16 %v395
        %v1946 = vunpack.c.l.b16 %v396
        %v1947 = vunpack.c.h.b16 %v396
        %v1948 = vunpack.c.l.b16 %v397
        %v1949 = vunpack.c.h.b16 %v397
        %v1950 = vunpack.c.l.b16 %v398
        %v1951 = vunpack.c.h.b16 %v398
        %v1952 = vunpack.c.l.b16 %v399
        %v1953 = vunpack.c.h.b16 %v399
        %v1954 = vunpack.c.l.b16 %v400
        %v1955 = vunpack.c.h.b16 %v400
        %v1956 = vunpack.c.l.b16 %v401
        %v1957 = vunpack.c.h.b16 %v401
        %v1958 = vunpack.c.l.b16 %v402
        %v1959 = vunpack.c.h.b16 %v402
        %v1960 = vunpack.c.l.b16 %v403
        %v1961 = vunpack.c.h.b16 %v403
        %v1962 = vunpack.c.l.b16 %v404
        %v1963 = vunpack.c.h.b16 %v404
        %v1964 = vunpack.c.l.b16 %v405
        %v1965 = vunpack.c.h.b16 %v405
        %v1966 = vunpack.c.l.b16 %v406
        %v1967 = vunpack.c.h.b16 %v406
        %v1968 = vunpack.c.l.b16 %v407
        %v1969 = vunpack.c.h.b16 %v407
        %v1970 = vunpack.c.l.b16 %v408
        %v1971 = vunpack.c.h.b16 %v408
        %v1972 = vunpack.c.l.b16 %v409
        %v1973 = vunpack.c.h.b16 %v409
        %v1974 = vunpack.c.l.b16 %v410
        %v1975 = vunpack.c.h.b16 %v410
        %v1976 = vunpack.c.l.b16 %v411
        %v1977 = vunpack.c.h.b16 %v411
        %v1978 = vunpack.c.l.b16 %v412
        %v1979 = vunpack.c.h.b16 %v412
        %v1980 = vunpack.c.l.b16 %v413
        %v1981 = vunpack.c.h.b16 %v413
        %v1982 = vunpack.c.l.b16 %v414
        %v1983 = vunpack.c.h.b16 %v414
        %v1984 = vunpack.c.l.b16 %v415
        %v1985 = vunpack.c.h.b16 %v415
        %v1986 = vunpack.c.l.b16 %v416
        %v1987 = vunpack.c.h.b16 %v416
        %v1988 = vunpack.c.l.b16 %v417
        %v1989 = vunpack.c.h.b16 %v417
        %v1990 = vunpack.c.l.b16 %v418
        %v1991 = vunpack.c.h.b16 %v418
        %v1992 = vunpack.c.l.b16 %v419
        %v1993 = vunpack.c.h.b16 %v419
        %v1994 = vunpack.c.l.b16 %v420
        %v1995 = vunpack.c.h.b16 %v420
        %v1996 = vunpack.c.l.b16 %v421
        %v1997 = vunpack.c.h.b16 %v421
        %v1998 = vunpack.c.l.b16 %v422
        %v1999 = vunpack.c.h.b16 %v422
        %v2000 = vunpack.c.l.b16 %v423
        %v2001 = vunpack.c.h.b16 %v423
        %v2002 = vunpack.c.l.b16 %v424
        %v2003 = vunpack.c.h.b16 %v424
        %v2004 = vunpack.c.l.b16 %v425
        %v2005 = vunpack.c.h.b16 %v425
        %v2006 = vunpack.c.l.b16 %v426
        %v2007 = vunpack.c.h.b16 %v426
        %v2008 = vunpack.c.l.b16 %v427
        %v2009 = vunpack.c.h.b16 %v427
        %v2010 = vunpack.c.l.b16 %v428
        %v2011 = vunpack.c.h.b16 %v428
        %v2012 = vunpack.c.l.b16 %v429
        %v2013 = vunpack.c.h.b16 %v429
        %v2014 = vunpack.c.l.b16 %v430
        %v2015 = vunpack.c.h.b16 %v430
        %v2016 = vunpack.c.l.b16 %v431
        %v2017 = vunpack.c.h.b16 %v431
        %v2018 = vunpack.c.l.b16 %v432
        %v2019 = vunpack.c.h.b16 %v432
        %v2020 = vunpack.c.l.b16 %v433
        %v2021 = vunpack.c.h.b16 %v433
        %v2022 = vunpack.c.l.b16 %v434
        %v2023 = vunpack.c.h.b16 %v434
        %v2024 = vunpack.c.l.b16 %v435
        %v2025 = vunpack.c.h.b16 %v435
        %v2026 = vunpack.c.l.b16 %v436
        %v2027 = vunpack.c.h.b16 %v436
        %v2028 = vunpack.c.l.b16 %v437
        %v2029 = vunpack.c.h.b16 %v437
        %v2030 = vunpack.c.l.b16 %v438
        %v2031 = vunpack.c.h.b16 %v438
        %v2032 = vunpack.c.l.b16 %v439
        %v2033 = vunpack.c.h.b16 %v439
        %v2034 = vunpack.c.l.b16 %v440
        %v2035 = vunpack.c.h.b16 %v440
        %v2036 = vunpack.c.l.b16 %v441
        %v2037 = vunpack.c.h.b16 %v441
        %v2038 = vunpack.c.l.b16 %v442
        %v2039 = vunpack.c.h.b16 %v442
        %v2040 = vunpack.c.l.b16 %v443
        %v2041 = vunpack.c.h.b16 %v443
        %v2042 = vunpack.c.l.b16 %v444
        %v2043 = vunpack.c.h.b16 %v444
        %v2044 = vunpack.c.l.b16 %v445
        %v2045 = vunpack.c.h.b16 %v445
        %v2046 = vunpack.c.l.b16 %v446
        %v2047 = vunpack.c.h.b16 %v446
        %v2048 = vunpack.c.l.b16 %v447
        %v2049 = vunpack.c.h.b16 %v447
        %v2050 = vunpack.c.l.b16 %v448
        %v2051 = vunpack.c.h.b16 %v448
        %v2052 = vunpack.c.l.b16 %v449
        %v2053 = vunpack.c.h.b16 %v449
        %v2054 = vunpack.c.l.b16 %v450
        %v2055 = vunpack.c.h.b16 %v450
        %v2056 = vunpack.c.l.b16 %v451
        %v2057 = vunpack.c.h.b16 %v451
        %v2058 = vunpack.c.l.b16 %v452
        %v2059 = vunpack.c.h.b16 %v452
        %v2060 = vunpack.c.l.b16 %v453
        %v2061 = vunpack.c.h.b16 %v453
        %v2062 = vunpack.c.l.b16 %v454
        %v2063 = vunpack.c.h.b16 %v454
        %v2064 = vunpack.c.l.b16 %v455
        %v2065 = vunpack.c.h.b16 %v455
        %v2066 = vunpack.c.l.b16 %v456
        %v2067 = vunpack.c.h.b16 %v456
        %v2068 = vunpack.c.l.b16 %v457
        %v2069 = vunpack.c.h.b16 %v457
        %v2070 = vunpack.c.l.b16 %v458
        %v2071 = vunpack.c.h.b16 %v458
        %v2072 = vunpack.c.l.b16 %v459
        %v2073 = vunpack.c.h.b16 %v459
        %v2074 = vunpack.c.l.b16 %v460
        %v2075 = vunpack.c.h.b16 %v460
        %v2076 = vunpack.c.l.b16 %v461
        %v2077 = vunpack.c.h.b16 %v461
        %v2078 = vunpack.c.l.b16 %v462
        %v2079 = vunpack.c.h.b16 %v462
        %v2080 = vunpack.c.l.b16 %v463
        %v2081 = vunpack.c.h.b16 %v463
        %v2082 = vunpack.c.l.b16 %v464
        %v2083 = vunpack.c.h.b16 %v464
        %v2084 = vunpack.c.l.b16 %v465
        %v2085 = vunpack.c.h.b16 %v465
        %v2086 = vunpack.c.l.b16 %v466
        %v2087 = vunpack.c.h.b16 %v466
        %v2088 = vunpack.c.l.b16 %v467
        %v2089 = vunpack.c.h.b16 %v467
        %v2090 = vunpack.c.l.b16 %v468
        %v2091 = vunpack.c.h.b16 %v468
        %v2092 = vunpack.c.l.b16 %v469
        %v2093 = vunpack.c.h.b16 %v469
        %v2094 = vunpack.c.l.b16 %v470
        %v2095 = vunpack.c.h.b16 %v470
        %v2096 = vunpack.c.l.b16 %v471
        %v2097 = vunpack.c.h.b16 %v471
        %v2098 = vunpack.c.l.b16 %v472
        %v2099 = vunpack.c.h.b16 %v472
        %v2100 = vunpack.c.l.b16 %v473
        %v2101 = vunpack.c.h.b16 %v473
        %v2102 = vunpack.c.l.b16 %v474
        %v2103 = vunpack.c.h.b16 %v474
        %v2104 = vunpack.c.l.b16 %v475
        %v2105 = vunpack.c.h.b16 %v475
        %v2106 = vunpack.c.l.b16 %v476
        %v2107 = vunpack.c.h.b16 %v476
        %v2108 = vunpack.c.l.b16 %v477
        %v2109 = vunpack.c.h.b16 %v477
        %v2110 = vunpack.c.l.b16 %v478
        %v2111 = vunpack.c.h.b16 %v478
        %v2112 = vunpack.c.l.b16 %v479
        %v2113 = vunpack.c.h.b16 %v479
        %v2114 = vunpack.c.l.b16 %v480
        %v2115 = vunpack.c.h.b16 %v480
        %v2116 = vunpack.c.l.b16 %v481
        %v2117 = vunpack.c.h.b16 %v481
        %v2118 = vunpack.c.l.b16 %v482
        %v2119 = vunpack.c.h.b16 %v482
        %v2120 = vunpack.c.l.b16 %v483
        %v2121 = vunpack.c.h.b16 %v483
        %v2122 = vunpack.c.l.b16 %v484
        %v2123 = vunpack.c.h.b16 %v484
        %v2124 = vunpack.c.l.b16 %v485
        %v2125 = vunpack.c.h.b16 %v485
        %v2126 = vunpack.c.l.b16 %v486
        %v2127 = vunpack.c.h.b16 %v486
        %v2128 = vunpack.c.l.b16 %v487
        %v2129 = vunpack.c.h.b16 %v487
        %v2130 = vunpack.c.l.b16 %v488
        %v2131 = vunpack.c.h.b16 %v488
        %v2132 = vunpack.c.l.b16 %v489
        %v2133 = vunpack.c.h.b16 %v489
        %v2134 = vunpack.c.l.b16 %v490
        %v2135 = vunpack.c.h.b16 %v490
        %v2136 = vunpack.c.l.b16 %v491
        %v2137 = vunpack.c.h.b16 %v491
        %v2138 = vunpack.c.l.b16 %v492
        %v2139 = vunpack.c.h.b16 %v492
        %v2140 = vunpack.c.l.b16 %v493
        %v2141 = vunpack.c.h.b16 %v493
        %v2142 = vunpack.c.l.b16 %v494
        %v2143 = vunpack.c.h.b16 %v494
        %v2144 = vunpack.c.l.b16 %v495
        %v2145 = vunpack.c.h.b16 %v495
        %v2146 = vunpack.c.l.b16 %v496
        %v2147 = vunpack.c.h.b16 %v496
        %v2148 = vunpack.c.l.b16 %v497
        %v2149 = vunpack.c.h.b16 %v497
        %v2150 = vunpack.c.l.b16 %v498
        %v2151 = vunpack.c.h.b16 %v498
        %v2152 = vunpack.c.l.b16 %v499
        %v2153 = vunpack.c.h.b16 %v499
        %v2154 = vunpack.c.l.b16 %v500
        %v2155 = vunpack.c.h.b16 %v500
        %v2156 = vunpack.c.l.b16 %v501
        %v2157 = vunpack.c.h.b16 %v501
        %v2158 = vunpack.c.l.b16 %v502
        %v2159 = vunpack.c.h.b16 %v502
        %v2160 = vunpack.c.l.b16 %v503
        %v2161 = vunpack.c.h.b16 %v503
        %v2162 = vunpack.c.l.b16 %v504
        %v2163 = vunpack.c.h.b16 %v504
        %v2164 = vunpack.c.l.b16 %v505
        %v2165 = vunpack.c.h.b16 %v505
        %v2166 = vunpack.c.l.b16 %v506
        %v2167 = vunpack.c.h.b16 %v506
        %v2168 = vunpack.c.l.b16 %v507
        %v2169 = vunpack.c.h.b16 %v507
        %v2170 = vunpack.c.l.b16 %v508
        %v2171 = vunpack.c.h.b16 %v508
        %v2172 = vunpack.c.l.b16 %v509
        %v2173 = vunpack.c.h.b16 %v509
        %v2174 = vunpack.c.l.b16 %v510
        %v2175 = vunpack.c.h.b16 %v510
        %v2176 = vpack.c.b16 %v1928, %v1920
        %v2177 = vpack.c.b16 %v1929, %v1921
        %v2178 = vpack.c.b16 %v1930, %v1922
        %v2179 = vpack.c.b16 %v1931, %v1923
        %v2180 = vpack.c.b16 %v1932, %v1924
        %v2181 = vpack.c.b16 %v1933, %v1925
        %v2182 = vpack.c.b16 %v1934, %v1926
        %v2183 = vpack.c.b16 %v1935, %v1927
        %v2184 = vpack.c.b16 %v1944, %v1936
        %v2185 = vpack.c.b16 %v1945, %v1937
        %v2186 = vpack.c.b16 %v1946, %v1938
        %v2187 = vpack.c.b16 %v1947, %v1939
        %v2188 = vpack.c.b16 %v1948, %v1940
        %v2189 = vpack.c.b16 %v1949, %v1941
        %v2190 = vpack.c.b16 %v1950, %v1942
        %v2191 = vpack.c.b16 %v1951, %v1943
        %v2192 = vpack.c.b16 %v1960, %v1952
        %v2193 = vpack.c.b16 %v1961, %v1953
        %v2194 = vpack.c.b16 %v1962, %v1954
        %v2195 = vpack.c.b16 %v1963, %v1955
        %v2196 = vpack.c.b16 %v1964, %v1956
        %v2197 = vpack.c.b16 %v1965, %v1957
        %v2198 = vpack.c.b16 %v1966, %v1958
        %v2199 = vpack.c.b16 %v1967, %v1959
        %v2200 = vpack.c.b16 %v1976, %v1968
        %v2201 = vpack.c.b16 %v1977, %v1969
        %v2202 = vpack.c.b16 %v1978, %v1970
        %v2203 = vpack.c.b16 %v1979, %v1971
        %v2204 = vpack.c.b16 %v1980, %v1972
        %v2205 = vpack.c.b16 %v1981, %v1973
        %v2206 = vpack.c.b16 %v1982, %v1974
        %v2207 = vpack.c.b16 %v1983, %v1975
        %v2208 = vpack.c.b16 %v1992, %v1984
        %v2209 = vpack.c.b16 %v1993, %v1985
        %v2210 = vpack.c.b16 %v1994, %v1986
        %v2211 = vpack.c.b16 %v1995, %v1987
        %v2212 = vpack.c.b16 %v1996, %v1988
        %v2213 = vpack.c.b16 %v1997, %v1989
        %v2214 = vpack.c.b16 %v1998, %v1990
        %v2215 = vpack.c.b16 %v1999, %v1991
        %v2216 = vpack.c.b16 %v2008, %v2000
        %v2217 = vpack.c.b16 %v2009, %v2001
        %v2218 = vpack.c.b16 %v2010, %v2002
        %v2219 = vpack.c.b16 %v2011, %v2003
        %v2220 = vpack.c.b16 %v2012, %v2004
        %v2221 = vpack.c.b16 %v2013, %v2005
        %v2222 = vpack.c.b16 %v2014, %v2006
        %v2223 = vpack.c.b16 %v2015, %v2007
        %v2224 = vpack.c.b16 %v2024, %v2016
        %v2225 = vpack.c.b16 %v2025, %v2017
        %v2226 = vpack.c.b16 %v2026, %v2018
        %v2227 = vpack.c.b16 %v2027, %v2019
        %v2228 = vpack.c.b16 %v2028, %v2020
        %v2229 = vpack.c.b16 %v2029, %v2021
        %v2230 = vpack.c.b16 %v2030, %v2022
        %v2231 = vpack.c.b16 %v2031, %v2023
        %v2232 = vpack.c.b16 %v2040, %v2032
        %v2233 = vpack.c.b16 %v2041, %v2033
        %v2234 = vpack.c.b16 %v2042, %v2034
        %v2235 = vpack.c.b16 %v2043, %v2035
        %v2236 = vpack.c.b16 %v2044, %v2036
        %v2237 = vpack.c.b16 %v2045, %v2037
        %v2238 = vpack.c.b16 %v2046, %v2038
        %v2239 = vpack.c.b16 %v2047, %v2039
        %v2240 = vpack.c.b16 %v2056, %v2048
        %v2241 = vpack.c.b16 %v2057, %v2049
        %v2242 = vpack.c.b16 %v2058, %v2050
        %v2243 = vpack.c.b16 %v2059, %v2051
        %v2244 = vpack.c.b16 %v2060, %v2052
        %v2245 = vpack.c.b16 %v2061, %v2053
        %v2246 = vpack.c.b16 %v2062, %v2054
        %v2247 = vpack.c.b16 %v2063, %v2055
        %v2248 = vpack.c.b16 %v2072, %v2064
        %v2249 = vpack.c.b16 %v2073, %v2065
        %v2250 = vpack.c.b16 %v2074, %v2066
        %v2251 = vpack.c.b16 %v2075, %v2067
        %v2252 = vpack.c.b16 %v2076, %v2068
        %v2253 = vpack.c.b16 %v2077, %v2069
        %v2254 = vpack.c.b16 %v2078, %v2070
        %v2255 = vpack.c.b16 %v2079, %v2071
        %v2256 = vpack.c.b16 %v2088, %v2080
        %v2257 = vpack.c.b16 %v2089, %v2081
        %v2258 = vpack.c.b16 %v2090, %v2082
        %v2259 = vpack.c.b16 %v2091, %v2083
        %v2260 = vpack.c.b16 %v2092, %v2084
        %v2261 = vpack.c.b16 %v2093, %v2085
        %v2262 = vpack.c.b16 %v2094, %v2086
        %v2263 = vpack.c.b16 %v2095, %v2087
        %v2264 = vpack.c.b16 %v2104, %v2096
        %v2265 = vpack.c.b16 %v2105, %v2097
        %v2266 = vpack.c.b16 %v2106, %v2098
        %v2267 = vpack.c.b16 %v2107, %v2099
        %v2268 = vpack.c.b16 %v2108, %v2100
        %v2269 = vpack.c.b16 %v2109, %v2101
        %v2270 = vpack.c.b16 %v2110, %v2102
        %v2271 = vpack.c.b16 %v2111, %v2103
        %v2272 = vpack.c.b16 %v2120, %v2112
        %v2273 = vpack.c.b16 %v2121, %v2113
        %v2274 = vpack.c.b16 %v2122, %v2114
        %v2275 = vpack.c.b16 %v2123, %v2115
        %v2276 = vpack.c.b16 %v2124, %v2116
        %v2277 = vpack.c.b16 %v2125, %v2117
        %v2278 = vpack.c.b16 %v2126, %v2118
        %v2279 = vpack.c.b16 %v2127, %v2119
        %v2280 = vpack.c.b16 %v2136, %v2128
        %v2281 = vpack.c.b16 %v2137, %v2129
        %v2282 = vpack.c.b16 %v2138, %v2130
        %v2283 = vpack.c.b16 %v2139, %v2131
        %v2284 = vpack.c.b16 %v2140, %v2132
        %v2285 = vpack.c.b16 %v2141, %v2133
        %v2286 = vpack.c.b16 %v2142, %v2134
        %v2287 = vpack.c.b16 %v2143, %v2135
        %v2288 = vpack.c.b16 %v2152, %v2144
        %v2289 = vpack.c.b16 %v2153, %v2145
        %v2290 = vpack.c.b16 %v2154, %v2146
        %v2291 = vpack.c.b16 %v2155, %v2147
        %v2292 = vpack.c.b16 %v2156, %v2148
        %v2293 = vpack.c.b16 %v2157, %v2149
        %v2294 = vpack.c.b16 %v2158, %v2150
        %v2295 = vpack.c.b16 %v2159, %v2151
        %v2296 = vpack.c.b16 %v2168, %v2160
        %v2297 = vpack.c.b16 %v2169, %v2161
        %v2298 = vpack.c.b16 %v2170, %v2162
        %v2299 = vpack.c.b16 %v2171, %v2163
        %v2300 = vpack.c.b16 %v2172, %v2164
        %v2301 = vpack.c.b16 %v2173, %v2165
        %v2302 = vpack.c.b16 %v2174, %v2166
        %v2303 = vpack.c.b16 %v2175, %v2167
        %2432 = vmatprep.subr.bf16.mxu0 %v2177
        %2433 = vmatpush1.bf16.msra.mxu0 %v2176
        %2434 = vmatprep.subr.bf16.mxu0 %v2185
        %2435 = vmatpush1.bf16.msra.mxu0 %v2184
        %2436 = vmatprep.subr.bf16.mxu0 %v2193
        %2437 = vmatpush1.bf16.msra.mxu0 %v2192
        %2438 = vmatprep.subr.bf16.mxu0 %v2201
        %2439 = vmatpush1.bf16.msra.mxu0 %v2200
        %2440 = vmatprep.subr.bf16.mxu0 %v2209
        %2441 = vmatpush1.bf16.msra.mxu0 %v2208
        %2442 = vmatprep.subr.bf16.mxu0 %v2217
        %2443 = vmatpush1.bf16.msra.mxu0 %v2216
        %2444 = vmatprep.subr.bf16.mxu0 %v2225
        %2445 = vmatpush1.bf16.msra.mxu0 %v2224
        %2446 = vmatprep.subr.bf16.mxu0 %v2233
        %2447 = vmatpush1.bf16.msra.mxu0 %v2232
        %2448 = vmatprep.subr.bf16.mxu0 %v2241
        %2449 = vmatpush1.bf16.msra.mxu0 %v2240
        %2450 = vmatprep.subr.bf16.mxu0 %v2249
        %2451 = vmatpush1.bf16.msra.mxu0 %v2248
        %2452 = vmatprep.subr.bf16.mxu0 %v2257
        %2453 = vmatpush1.bf16.msra.mxu0 %v2256
        %2454 = vmatprep.subr.bf16.mxu0 %v2265
        %2455 = vmatpush1.bf16.msra.mxu0 %v2264
        %2456 = vmatprep.subr.bf16.mxu0 %v2273
        %2457 = vmatpush1.bf16.msra.mxu0 %v2272
        %2458 = vmatprep.subr.bf16.mxu0 %v2281
        %2459 = vmatpush1.bf16.msra.mxu0 %v2280
        %2460 = vmatprep.subr.bf16.mxu0 %v2289
        %2461 = vmatpush1.bf16.msra.mxu0 %v2288
        %2462 = vmatprep.subr.bf16.mxu0 %v2297
        %2463 = vmatpush1.bf16.msra.mxu0 %v2296
        %2464 = vmatprep.mubr.bf16.mxu0 %v368
        %2465 = vmatmul.mubr.bf16.gmra.mrb[0].mxu0 %v367
        %v2466 = vpop.f32.mrb[0].mxu0
        %v2467 = vadd.f32 %v1615, %v2466
        %v2468 = vpop.f32.mrb[0].mxu0
        %v2469 = vadd.f32 %v1617, %v2468
        %v2470 = vpop.f32.mrb[0].mxu0
        %v2471 = vadd.f32 %v1619, %v2470
        %v2472 = vpop.f32.mrb[0].mxu0
        %v2473 = vadd.f32 %v1621, %v2472
        %2474 = vmatprep.mubr.bf16.mxu0 %v370
        %2475 = vmatmul.mubr.bf16.gmra.mrb[0].mxu0 %v369
        %v2476 = vpop.f32.mrb[0].mxu0
        %v2477 = vadd.f32 %v1625, %v2476
        %v2478 = vpop.f32.mrb[0].mxu0
        %v2479 = vadd.f32 %v1627, %v2478
        %v2480 = vpop.f32.mrb[0].mxu0
        %v2481 = vadd.f32 %v1629, %v2480
        %v2482 = vpop.f32.mrb[0].mxu0
        %v2483 = vadd.f32 %v1631, %v2482
        %2484 = vdwg.mxu0
        %2485 = vmatprep.subr.bf16.mxu0 %v2179
        %2486 = vmatpush1.bf16.msra.mxu0 %v2178
        %2487 = vmatprep.subr.bf16.mxu0 %v2187
        %2488 = vmatpush1.bf16.msra.mxu0 %v2186
        %2489 = vmatprep.subr.bf16.mxu0 %v2195
        %2490 = vmatpush1.bf16.msra.mxu0 %v2194
        %2491 = vmatprep.subr.bf16.mxu0 %v2203
        %2492 = vmatpush1.bf16.msra.mxu0 %v2202
        %2493 = vmatprep.subr.bf16.mxu0 %v2211
        %2494 = vmatpush1.bf16.msra.mxu0 %v2210
        %2495 = vmatprep.subr.bf16.mxu0 %v2219
        %2496 = vmatpush1.bf16.msra.mxu0 %v2218
        %2497 = vmatprep.subr.bf16.mxu0 %v2227
        %2498 = vmatpush1.bf16.msra.mxu0 %v2226
        %2499 = vmatprep.subr.bf16.mxu0 %v2235
        %2500 = vmatpush1.bf16.msra.mxu0 %v2234
        %2501 = vmatprep.subr.bf16.mxu0 %v2243
        %2502 = vmatpush1.bf16.msra.mxu0 %v2242
        %2503 = vmatprep.subr.bf16.mxu0 %v2251
        %2504 = vmatpush1.bf16.msra.mxu0 %v2250
        %2505 = vmatprep.subr.bf16.mxu0 %v2259
        %2506 = vmatpush1.bf16.msra.mxu0 %v2258
        %2507 = vmatprep.subr.bf16.mxu0 %v2267
        %2508 = vmatpush1.bf16.msra.mxu0 %v2266
        %2509 = vmatprep.subr.bf16.mxu0 %v2275
        %2510 = vmatpush1.bf16.msra.mxu0 %v2274
        %2511 = vmatprep.subr.bf16.mxu0 %v2283
        %2512 = vmatpush1.bf16.msra.mxu0 %v2282
        %2513 = vmatprep.subr.bf16.mxu0 %v2291
        %2514 = vmatpush1.bf16.msra.mxu0 %v2290
        %2515 = vmatprep.subr.bf16.mxu0 %v2299
        %2516 = vmatpush1.bf16.msra.mxu0 %v2298
        %2517 = vmatprep.mubr.bf16.mxu0 %v368
        %2518 = vmatmul.mubr.bf16.gmra.mrb[0].mxu0 %v367
        %v2519 = vpop.f32.mrb[0].mxu0
        %v2520 = vadd.f32 %v1668, %v2519
        %v2521 = vpop.f32.mrb[0].mxu0
        %v2522 = vadd.f32 %v1670, %v2521
        %v2523 = vpop.f32.mrb[0].mxu0
        %v2524 = vadd.f32 %v1672, %v2523
        %v2525 = vpop.f32.mrb[0].mxu0
        %v2526 = vadd.f32 %v1674, %v2525
        %2527 = vmatprep.mubr.bf16.mxu0 %v370
        %2528 = vmatmul.mubr.bf16.gmra.mrb[0].mxu0 %v369
        %v2529 = vpop.f32.mrb[0].mxu0
        %v2530 = vadd.f32 %v1678, %v2529
        %v2531 = vpop.f32.mrb[0].mxu0
        %v2532 = vadd.f32 %v1680, %v2531
        %v2533 = vpop.f32.mrb[0].mxu0
        %v2534 = vadd.f32 %v1682, %v2533
        %v2535 = vpop.f32.mrb[0].mxu0
        %v2536 = vadd.f32 %v1684, %v2535
        %2537 = vdwg.mxu0
        %2538 = vmatprep.subr.bf16.mxu0 %v2181
        %2539 = vmatpush1.bf16.msra.mxu0 %v2180
        %2540 = vmatprep.subr.bf16.mxu0 %v2189
        %2541 = vmatpush1.bf16.msra.mxu0 %v2188
        %2542 = vmatprep.subr.bf16.mxu0 %v2197
        %2543 = vmatpush1.bf16.msra.mxu0 %v2196
        %2544 = vmatprep.subr.bf16.mxu0 %v2205
        %2545 = vmatpush1.bf16.msra.mxu0 %v2204
        %2546 = vmatprep.subr.bf16.mxu0 %v2213
        %2547 = vmatpush1.bf16.msra.mxu0 %v2212
        %2548 = vmatprep.subr.bf16.mxu0 %v2221
        %2549 = vmatpush1.bf16.msra.mxu0 %v2220
        %2550 = vmatprep.subr.bf16.mxu0 %v2229
        %2551 = vmatpush1.bf16.msra.mxu0 %v2228
        %2552 = vmatprep.subr.bf16.mxu0 %v2237
        %2553 = vmatpush1.bf16.msra.mxu0 %v2236
        %2554 = vmatprep.subr.bf16.mxu0 %v2245
        %2555 = vmatpush1.bf16.msra.mxu0 %v2244
        %2556 = vmatprep.subr.bf16.mxu0 %v2253
        %2557 = vmatpush1.bf16.msra.mxu0 %v2252
        %2558 = vmatprep.subr.bf16.mxu0 %v2261
        %2559 = vmatpush1.bf16.msra.mxu0 %v2260
        %2560 = vmatprep.subr.bf16.mxu0 %v2269
        %2561 = vmatpush1.bf16.msra.mxu0 %v2268
        %2562 = vmatprep.subr.bf16.mxu0 %v2277
        %2563 = vmatpush1.bf16.msra.mxu0 %v2276
        %2564 = vmatprep.subr.bf16.mxu0 %v2285
        %2565 = vmatpush1.bf16.msra.mxu0 %v2284
        %2566 = vmatprep.subr.bf16.mxu0 %v2293
        %2567 = vmatpush1.bf16.msra.mxu0 %v2292
        %2568 = vmatprep.subr.bf16.mxu0 %v2301
        %2569 = vmatpush1.bf16.msra.mxu0 %v2300
        %2570 = vmatprep.mubr.bf16.mxu0 %v368
        %2571 = vmatmul.mubr.bf16.gmra.mrb[0].mxu0 %v367
        %v2572 = vpop.f32.mrb[0].mxu0
        %v2573 = vadd.f32 %v1721, %v2572
        %v2574 = vpop.f32.mrb[0].mxu0
        %v2575 = vadd.f32 %v1723, %v2574
        %v2576 = vpop.f32.mrb[0].mxu0
        %v2577 = vadd.f32 %v1725, %v2576
        %v2578 = vpop.f32.mrb[0].mxu0
        %v2579 = vadd.f32 %v1727, %v2578
        %2580 = vmatprep.mubr.bf16.mxu0 %v370
        %2581 = vmatmul.mubr.bf16.gmra.mrb[0].mxu0 %v369
        %v2582 = vpop.f32.mrb[0].mxu0
        %v2583 = vadd.f32 %v1731, %v2582
        %v2584 = vpop.f32.mrb[0].mxu0
        %v2585 = vadd.f32 %v1733, %v2584
        %v2586 = vpop.f32.mrb[0].mxu0
        %v2587 = vadd.f32 %v1735, %v2586
        %v2588 = vpop.f32.mrb[0].mxu0
        %v2589 = vadd.f32 %v1737, %v2588
        %2590 = vdwg.mxu0
        %2591 = vmatprep.subr.bf16.mxu0 %v2183
        %2592 = vmatpush1.bf16.msra.mxu0 %v2182
        %2593 = vmatprep.subr.bf16.mxu0 %v2191
        %2594 = vmatpush1.bf16.msra.mxu0 %v2190
        %2595 = vmatprep.subr.bf16.mxu0 %v2199
        %2596 = vmatpush1.bf16.msra.mxu0 %v2198
        %2597 = vmatprep.subr.bf16.mxu0 %v2207
        %2598 = vmatpush1.bf16.msra.mxu0 %v2206
        %2599 = vmatprep.subr.bf16.mxu0 %v2215
        %2600 = vmatpush1.bf16.msra.mxu0 %v2214
        %2601 = vmatprep.subr.bf16.mxu0 %v2223
        %2602 = vmatpush1.bf16.msra.mxu0 %v2222
        %2603 = vmatprep.subr.bf16.mxu0 %v2231
        %2604 = vmatpush1.bf16.msra.mxu0 %v2230
        %2605 = vmatprep.subr.bf16.mxu0 %v2239
        %2606 = vmatpush1.bf16.msra.mxu0 %v2238
        %2607 = vmatprep.subr.bf16.mxu0 %v2247
        %2608 = vmatpush1.bf16.msra.mxu0 %v2246
        %2609 = vmatprep.subr.bf16.mxu0 %v2255
        %2610 = vmatpush1.bf16.msra.mxu0 %v2254
        %2611 = vmatprep.subr.bf16.mxu0 %v2263
        %2612 = vmatpush1.bf16.msra.mxu0 %v2262
        %2613 = vmatprep.subr.bf16.mxu0 %v2271
        %2614 = vmatpush1.bf16.msra.mxu0 %v2270
        %2615 = vmatprep.subr.bf16.mxu0 %v2279
        %2616 = vmatpush1.bf16.msra.mxu0 %v2278
        %2617 = vmatprep.subr.bf16.mxu0 %v2287
        %2618 = vmatpush1.bf16.msra.mxu0 %v2286
        %2619 = vmatprep.subr.bf16.mxu0 %v2295
        %2620 = vmatpush1.bf16.msra.mxu0 %v2294
        %2621 = vmatprep.subr.bf16.mxu0 %v2303
        %2622 = vmatpush1.bf16.msra.mxu0 %v2302
        %2623 = vmatprep.mubr.bf16.mxu0 %v368
        %2624 = vmatmul.mubr.bf16.gmra.mrb[0].mxu0 %v367
        %v2625 = vpop.f32.mrb[0].mxu0
        %v2626 = vadd.f32 %v1774, %v2625
        %v2627 = vpop.f32.mrb[0].mxu0
        %v2628 = vadd.f32 %v1776, %v2627
        %v2629 = vpop.f32.mrb[0].mxu0
        %v2630 = vadd.f32 %v1778, %v2629
        %v2631 = vpop.f32.mrb[0].mxu0
        %v2632 = vadd.f32 %v1780, %v2631
        %2633 = vmatprep.mubr.bf16.mxu0 %v370
        %2634 = vmatmul.mubr.bf16.gmra.mrb[0].mxu0 %v369
        %v2635 = vpop.f32.mrb[0].mxu0
        %v2636 = vadd.f32 %v1784, %v2635
        %v2637 = vpop.f32.mrb[0].mxu0
        %v2638 = vadd.f32 %v1786, %v2637
        %v2639 = vpop.f32.mrb[0].mxu0
        %v2640 = vadd.f32 %v1788, %v2639
        %v2641 = vpop.f32.mrb[0].mxu0
        %v2642 = vadd.f32 %v1790, %v2641
        %2643 = vdwg.mxu0
        %vm2644 = vcmask 1046528
        %v2645 = vrot.slane %v367, 1
        %v2646 = vrot.slane %v369, 1
        %v2647 = vsel %vm2644, %v2645, %v2646
        %v2648 = vrot.slane %v368, 1
        %v2649 = vrot.slane %v370, 1
        %v2650 = vsel %vm2644, %v2648, %v2649
        %v2651 = vrot.slane %v381, 1
        %v2652 = vsel %vm2644, %v2646, %v2651
        %v2653 = vrot.slane %v382, 1
        %v2654 = vsel %vm2644, %v2649, %v2653
        %v2787 = vunpack.c.l.b16 %v639
        %v2788 = vunpack.c.h.b16 %v639
        %v2789 = vunpack.c.l.b16 %v640
        %v2790 = vunpack.c.h.b16 %v640
        %v2791 = vunpack.c.l.b16 %v641
        %v2792 = vunpack.c.h.b16 %v641
        %v2793 = vunpack.c.l.b16 %v642
        %v2794 = vunpack.c.h.b16 %v642
        %v2795 = vunpack.c.l.b16 %v643
        %v2796 = vunpack.c.h.b16 %v643
        %v2797 = vunpack.c.l.b16 %v644
        %v2798 = vunpack.c.h.b16 %v644
        %v2799 = vunpack.c.l.b16 %v645
        %v2800 = vunpack.c.h.b16 %v645
        %v2801 = vunpack.c.l.b16 %v646
        %v2802 = vunpack.c.h.b16 %v646
        %v2803 = vunpack.c.l.b16 %v647
        %v2804 = vunpack.c.h.b16 %v647
        %v2805 = vunpack.c.l.b16 %v648
        %v2806 = vunpack.c.h.b16 %v648
        %v2807 = vunpack.c.l.b16 %v649
        %v2808 = vunpack.c.h.b16 %v649
        %v2809 = vunpack.c.l.b16 %v650
        %v2810 = vunpack.c.h.b16 %v650
        %v2811 = vunpack.c.l.b16 %v651
        %v2812 = vunpack.c.h.b16 %v651
        %v2813 = vunpack.c.l.b16 %v652
        %v2814 = vunpack.c.h.b16 %v652
        %v2815 = vunpack.c.l.b16 %v653
        %v2816 = vunpack.c.h.b16 %v653
        %v2817 = vunpack.c.l.b16 %v654
        %v2818 = vunpack.c.h.b16 %v654
        %v2819 = vunpack.c.l.b16 %v655
        %v2820 = vunpack.c.h.b16 %v655
        %v2821 = vunpack.c.l.b16 %v656
        %v2822 = vunpack.c.h.b16 %v656
        %v2823 = vunpack.c.l.b16 %v657
        %v2824 = vunpack.c.h.b16 %v657
        %v2825 = vunpack.c.l.b16 %v658
        %v2826 = vunpack.c.h.b16 %v658
        %v2827 = vunpack.c.l.b16 %v659
        %v2828 = vunpack.c.h.b16 %v659
        %v2829 = vunpack.c.l.b16 %v660
        %v2830 = vunpack.c.h.b16 %v660
        %v2831 = vunpack.c.l.b16 %v661
        %v2832 = vunpack.c.h.b16 %v661
        %v2833 = vunpack.c.l.b16 %v662
        %v2834 = vunpack.c.h.b16 %v662
        %v2835 = vunpack.c.l.b16 %v663
        %v2836 = vunpack.c.h.b16 %v663
        %v2837 = vunpack.c.l.b16 %v664
        %v2838 = vunpack.c.h.b16 %v664
        %v2839 = vunpack.c.l.b16 %v665
        %v2840 = vunpack.c.h.b16 %v665
        %v2841 = vunpack.c.l.b16 %v666
        %v2842 = vunpack.c.h.b16 %v666
        %v2843 = vunpack.c.l.b16 %v667
        %v2844 = vunpack.c.h.b16 %v667
        %v2845 = vunpack.c.l.b16 %v668
        %v2846 = vunpack.c.h.b16 %v668
        %v2847 = vunpack.c.l.b16 %v669
        %v2848 = vunpack.c.h.b16 %v669
        %v2849 = vunpack.c.l.b16 %v670
        %v2850 = vunpack.c.h.b16 %v670
        %v2851 = vunpack.c.l.b16 %v671
        %v2852 = vunpack.c.h.b16 %v671
        %v2853 = vunpack.c.l.b16 %v672
        %v2854 = vunpack.c.h.b16 %v672
        %v2855 = vunpack.c.l.b16 %v673
        %v2856 = vunpack.c.h.b16 %v673
        %v2857 = vunpack.c.l.b16 %v674
        %v2858 = vunpack.c.h.b16 %v674
        %v2859 = vunpack.c.l.b16 %v675
        %v2860 = vunpack.c.h.b16 %v675
        %v2861 = vunpack.c.l.b16 %v676
        %v2862 = vunpack.c.h.b16 %v676
        %v2863 = vunpack.c.l.b16 %v677
        %v2864 = vunpack.c.h.b16 %v677
        %v2865 = vunpack.c.l.b16 %v678
        %v2866 = vunpack.c.h.b16 %v678
        %v2867 = vunpack.c.l.b16 %v679
        %v2868 = vunpack.c.h.b16 %v679
        %v2869 = vunpack.c.l.b16 %v680
        %v2870 = vunpack.c.h.b16 %v680
        %v2871 = vunpack.c.l.b16 %v681
        %v2872 = vunpack.c.h.b16 %v681
        %v2873 = vunpack.c.l.b16 %v682
        %v2874 = vunpack.c.h.b16 %v682
        %v2875 = vunpack.c.l.b16 %v683
        %v2876 = vunpack.c.h.b16 %v683
        %v2877 = vunpack.c.l.b16 %v684
        %v2878 = vunpack.c.h.b16 %v684
        %v2879 = vunpack.c.l.b16 %v685
        %v2880 = vunpack.c.h.b16 %v685
        %v2881 = vunpack.c.l.b16 %v686
        %v2882 = vunpack.c.h.b16 %v686
        %v2883 = vunpack.c.l.b16 %v687
        %v2884 = vunpack.c.h.b16 %v687
        %v2885 = vunpack.c.l.b16 %v688
        %v2886 = vunpack.c.h.b16 %v688
        %v2887 = vunpack.c.l.b16 %v689
        %v2888 = vunpack.c.h.b16 %v689
        %v2889 = vunpack.c.l.b16 %v690
        %v2890 = vunpack.c.h.b16 %v690
        %v2891 = vunpack.c.l.b16 %v691
        %v2892 = vunpack.c.h.b16 %v691
        %v2893 = vunpack.c.l.b16 %v692
        %v2894 = vunpack.c.h.b16 %v692
        %v2895 = vunpack.c.l.b16 %v693
        %v2896 = vunpack.c.h.b16 %v693
        %v2897 = vunpack.c.l.b16 %v694
        %v2898 = vunpack.c.h.b16 %v694
        %v2899 = vunpack.c.l.b16 %v695
        %v2900 = vunpack.c.h.b16 %v695
        %v2901 = vunpack.c.l.b16 %v696
        %v2902 = vunpack.c.h.b16 %v696
        %v2903 = vunpack.c.l.b16 %v697
        %v2904 = vunpack.c.h.b16 %v697
        %v2905 = vunpack.c.l.b16 %v698
        %v2906 = vunpack.c.h.b16 %v698
        %v2907 = vunpack.c.l.b16 %v699
        %v2908 = vunpack.c.h.b16 %v699
        %v2909 = vunpack.c.l.b16 %v700
        %v2910 = vunpack.c.h.b16 %v700
        %v2911 = vunpack.c.l.b16 %v701
        %v2912 = vunpack.c.h.b16 %v701
        %v2913 = vunpack.c.l.b16 %v702
        %v2914 = vunpack.c.h.b16 %v702
        %v2915 = vunpack.c.l.b16 %v703
        %v2916 = vunpack.c.h.b16 %v703
        %v2917 = vunpack.c.l.b16 %v704
        %v2918 = vunpack.c.h.b16 %v704
        %v2919 = vunpack.c.l.b16 %v705
        %v2920 = vunpack.c.h.b16 %v705
        %v2921 = vunpack.c.l.b16 %v706
        %v2922 = vunpack.c.h.b16 %v706
        %v2923 = vunpack.c.l.b16 %v707
        %v2924 = vunpack.c.h.b16 %v707
        %v2925 = vunpack.c.l.b16 %v708
        %v2926 = vunpack.c.h.b16 %v708
        %v2927 = vunpack.c.l.b16 %v709
        %v2928 = vunpack.c.h.b16 %v709
        %v2929 = vunpack.c.l.b16 %v710
        %v2930 = vunpack.c.h.b16 %v710
        %v2931 = vunpack.c.l.b16 %v711
        %v2932 = vunpack.c.h.b16 %v711
        %v2933 = vunpack.c.l.b16 %v712
        %v2934 = vunpack.c.h.b16 %v712
        %v2935 = vunpack.c.l.b16 %v713
        %v2936 = vunpack.c.h.b16 %v713
        %v2937 = vunpack.c.l.b16 %v714
        %v2938 = vunpack.c.h.b16 %v714
        %v2939 = vunpack.c.l.b16 %v715
        %v2940 = vunpack.c.h.b16 %v715
        %v2941 = vunpack.c.l.b16 %v716
        %v2942 = vunpack.c.h.b16 %v716
        %v2943 = vunpack.c.l.b16 %v717
        %v2944 = vunpack.c.h.b16 %v717
        %v2945 = vunpack.c.l.b16 %v718
        %v2946 = vunpack.c.h.b16 %v718
        %v2947 = vunpack.c.l.b16 %v719
        %v2948 = vunpack.c.h.b16 %v719
        %v2949 = vunpack.c.l.b16 %v720
        %v2950 = vunpack.c.h.b16 %v720
        %v2951 = vunpack.c.l.b16 %v721
        %v2952 = vunpack.c.h.b16 %v721
        %v2953 = vunpack.c.l.b16 %v722
        %v2954 = vunpack.c.h.b16 %v722
        %v2955 = vunpack.c.l.b16 %v723
        %v2956 = vunpack.c.h.b16 %v723
        %v2957 = vunpack.c.l.b16 %v724
        %v2958 = vunpack.c.h.b16 %v724
        %v2959 = vunpack.c.l.b16 %v725
        %v2960 = vunpack.c.h.b16 %v725
        %v2961 = vunpack.c.l.b16 %v726
        %v2962 = vunpack.c.h.b16 %v726
        %v2963 = vunpack.c.l.b16 %v727
        %v2964 = vunpack.c.h.b16 %v727
        %v2965 = vunpack.c.l.b16 %v728
        %v2966 = vunpack.c.h.b16 %v728
        %v2967 = vunpack.c.l.b16 %v729
        %v2968 = vunpack.c.h.b16 %v729
        %v2969 = vunpack.c.l.b16 %v730
        %v2970 = vunpack.c.h.b16 %v730
        %v2971 = vunpack.c.l.b16 %v731
        %v2972 = vunpack.c.h.b16 %v731
        %v2973 = vunpack.c.l.b16 %v732
        %v2974 = vunpack.c.h.b16 %v732
        %v2975 = vunpack.c.l.b16 %v733
        %v2976 = vunpack.c.h.b16 %v733
        %v2977 = vunpack.c.l.b16 %v734
        %v2978 = vunpack.c.h.b16 %v734
        %v2979 = vunpack.c.l.b16 %v735
        %v2980 = vunpack.c.h.b16 %v735
        %v2981 = vunpack.c.l.b16 %v736
        %v2982 = vunpack.c.h.b16 %v736
        %v2983 = vunpack.c.l.b16 %v737
        %v2984 = vunpack.c.h.b16 %v737
        %v2985 = vunpack.c.l.b16 %v738
        %v2986 = vunpack.c.h.b16 %v738
        %v2987 = vunpack.c.l.b16 %v739
        %v2988 = vunpack.c.h.b16 %v739
        %v2989 = vunpack.c.l.b16 %v740
        %v2990 = vunpack.c.h.b16 %v740
        %v2991 = vunpack.c.l.b16 %v741
        %v2992 = vunpack.c.h.b16 %v741
        %v2993 = vunpack.c.l.b16 %v742
        %v2994 = vunpack.c.h.b16 %v742
        %v2995 = vunpack.c.l.b16 %v743
        %v2996 = vunpack.c.h.b16 %v743
        %v2997 = vunpack.c.l.b16 %v744
        %v2998 = vunpack.c.h.b16 %v744
        %v2999 = vunpack.c.l.b16 %v745
        %v3000 = vunpack.c.h.b16 %v745
        %v3001 = vunpack.c.l.b16 %v746
        %v3002 = vunpack.c.h.b16 %v746
        %v3003 = vunpack.c.l.b16 %v747
        %v3004 = vunpack.c.h.b16 %v747
        %v3005 = vunpack.c.l.b16 %v748
        %v3006 = vunpack.c.h.b16 %v748
        %v3007 = vunpack.c.l.b16 %v749
        %v3008 = vunpack.c.h.b16 %v749
        %v3009 = vunpack.c.l.b16 %v750
        %v3010 = vunpack.c.h.b16 %v750
        %v3011 = vunpack.c.l.b16 %v751
        %v3012 = vunpack.c.h.b16 %v751
        %v3013 = vunpack.c.l.b16 %v752
        %v3014 = vunpack.c.h.b16 %v752
        %v3015 = vunpack.c.l.b16 %v753
        %v3016 = vunpack.c.h.b16 %v753
        %v3017 = vunpack.c.l.b16 %v754
        %v3018 = vunpack.c.h.b16 %v754
        %v3019 = vunpack.c.l.b16 %v755
        %v3020 = vunpack.c.h.b16 %v755
        %v3021 = vunpack.c.l.b16 %v756
        %v3022 = vunpack.c.h.b16 %v756
        %v3023 = vunpack.c.l.b16 %v757
        %v3024 = vunpack.c.h.b16 %v757
        %v3025 = vunpack.c.l.b16 %v758
        %v3026 = vunpack.c.h.b16 %v758
        %v3027 = vunpack.c.l.b16 %v759
        %v3028 = vunpack.c.h.b16 %v759
        %v3029 = vunpack.c.l.b16 %v760
        %v3030 = vunpack.c.h.b16 %v760
        %v3031 = vunpack.c.l.b16 %v761
        %v3032 = vunpack.c.h.b16 %v761
        %v3033 = vunpack.c.l.b16 %v762
        %v3034 = vunpack.c.h.b16 %v762
        %v3035 = vunpack.c.l.b16 %v763
        %v3036 = vunpack.c.h.b16 %v763
        %v3037 = vunpack.c.l.b16 %v764
        %v3038 = vunpack.c.h.b16 %v764
        %v3039 = vunpack.c.l.b16 %v765
        %v3040 = vunpack.c.h.b16 %v765
        %v3041 = vunpack.c.l.b16 %v766
        %v3042 = vunpack.c.h.b16 %v766
        %v3043 = vpack.c.b16 %v2795, %v2787
        %v3044 = vpack.c.b16 %v2796, %v2788
        %v3045 = vpack.c.b16 %v2797, %v2789
        %v3046 = vpack.c.b16 %v2798, %v2790
        %v3047 = vpack.c.b16 %v2799, %v2791
        %v3048 = vpack.c.b16 %v2800, %v2792
        %v3049 = vpack.c.b16 %v2801, %v2793
        %v3050 = vpack.c.b16 %v2802, %v2794
        %v3051 = vpack.c.b16 %v2811, %v2803
        %v3052 = vpack.c.b16 %v2812, %v2804
        %v3053 = vpack.c.b16 %v2813, %v2805
        %v3054 = vpack.c.b16 %v2814, %v2806
        %v3055 = vpack.c.b16 %v2815, %v2807
        %v3056 = vpack.c.b16 %v2816, %v2808
        %v3057 = vpack.c.b16 %v2817, %v2809
        %v3058 = vpack.c.b16 %v2818, %v2810
        %v3059 = vpack.c.b16 %v2827, %v2819
        %v3060 = vpack.c.b16 %v2828, %v2820
        %v3061 = vpack.c.b16 %v2829, %v2821
        %v3062 = vpack.c.b16 %v2830, %v2822
        %v3063 = vpack.c.b16 %v2831, %v2823
        %v3064 = vpack.c.b16 %v2832, %v2824
        %v3065 = vpack.c.b16 %v2833, %v2825
        %v3066 = vpack.c.b16 %v2834, %v2826
        %v3067 = vpack.c.b16 %v2843, %v2835
        %v3068 = vpack.c.b16 %v2844, %v2836
        %v3069 = vpack.c.b16 %v2845, %v2837
        %v3070 = vpack.c.b16 %v2846, %v2838
        %v3071 = vpack.c.b16 %v2847, %v2839
        %v3072 = vpack.c.b16 %v2848, %v2840
        %v3073 = vpack.c.b16 %v2849, %v2841
        %v3074 = vpack.c.b16 %v2850, %v2842
        %v3075 = vpack.c.b16 %v2859, %v2851
        %v3076 = vpack.c.b16 %v2860, %v2852
        %v3077 = vpack.c.b16 %v2861, %v2853
        %v3078 = vpack.c.b16 %v2862, %v2854
        %v3079 = vpack.c.b16 %v2863, %v2855
        %v3080 = vpack.c.b16 %v2864, %v2856
        %v3081 = vpack.c.b16 %v2865, %v2857
        %v3082 = vpack.c.b16 %v2866, %v2858
        %v3083 = vpack.c.b16 %v2875, %v2867
        %v3084 = vpack.c.b16 %v2876, %v2868
        %v3085 = vpack.c.b16 %v2877, %v2869
        %v3086 = vpack.c.b16 %v2878, %v2870
        %v3087 = vpack.c.b16 %v2879, %v2871
        %v3088 = vpack.c.b16 %v2880, %v2872
        %v3089 = vpack.c.b16 %v2881, %v2873
        %v3090 = vpack.c.b16 %v2882, %v2874
        %v3091 = vpack.c.b16 %v2891, %v2883
        %v3092 = vpack.c.b16 %v2892, %v2884
        %v3093 = vpack.c.b16 %v2893, %v2885
        %v3094 = vpack.c.b16 %v2894, %v2886
        %v3095 = vpack.c.b16 %v2895, %v2887
        %v3096 = vpack.c.b16 %v2896, %v2888
        %v3097 = vpack.c.b16 %v2897, %v2889
        %v3098 = vpack.c.b16 %v2898, %v2890
        %v3099 = vpack.c.b16 %v2907, %v2899
        %v3100 = vpack.c.b16 %v2908, %v2900
        %v3101 = vpack.c.b16 %v2909, %v2901
        %v3102 = vpack.c.b16 %v2910, %v2902
        %v3103 = vpack.c.b16 %v2911, %v2903
        %v3104 = vpack.c.b16 %v2912, %v2904
        %v3105 = vpack.c.b16 %v2913, %v2905
        %v3106 = vpack.c.b16 %v2914, %v2906
        %v3107 = vpack.c.b16 %v2923, %v2915
        %v3108 = vpack.c.b16 %v2924, %v2916
        %v3109 = vpack.c.b16 %v2925, %v2917
        %v3110 = vpack.c.b16 %v2926, %v2918
        %v3111 = vpack.c.b16 %v2927, %v2919
        %v3112 = vpack.c.b16 %v2928, %v2920
        %v3113 = vpack.c.b16 %v2929, %v2921
        %v3114 = vpack.c.b16 %v2930, %v2922
        %v3115 = vpack.c.b16 %v2939, %v2931
        %v3116 = vpack.c.b16 %v2940, %v2932
        %v3117 = vpack.c.b16 %v2941, %v2933
        %v3118 = vpack.c.b16 %v2942, %v2934
        %v3119 = vpack.c.b16 %v2943, %v2935
        %v3120 = vpack.c.b16 %v2944, %v2936
        %v3121 = vpack.c.b16 %v2945, %v2937
        %v3122 = vpack.c.b16 %v2946, %v2938
        %v3123 = vpack.c.b16 %v2955, %v2947
        %v3124 = vpack.c.b16 %v2956, %v2948
        %v3125 = vpack.c.b16 %v2957, %v2949
        %v3126 = vpack.c.b16 %v2958, %v2950
        %v3127 = vpack.c.b16 %v2959, %v2951
        %v3128 = vpack.c.b16 %v2960, %v2952
        %v3129 = vpack.c.b16 %v2961, %v2953
        %v3130 = vpack.c.b16 %v2962, %v2954
        %v3131 = vpack.c.b16 %v2971, %v2963
        %v3132 = vpack.c.b16 %v2972, %v2964
        %v3133 = vpack.c.b16 %v2973, %v2965
        %v3134 = vpack.c.b16 %v2974, %v2966
        %v3135 = vpack.c.b16 %v2975, %v2967
        %v3136 = vpack.c.b16 %v2976, %v2968
        %v3137 = vpack.c.b16 %v2977, %v2969
        %v3138 = vpack.c.b16 %v2978, %v2970
        %v3139 = vpack.c.b16 %v2987, %v2979
        %v3140 = vpack.c.b16 %v2988, %v2980
        %v3141 = vpack.c.b16 %v2989, %v2981
        %v3142 = vpack.c.b16 %v2990, %v2982
        %v3143 = vpack.c.b16 %v2991, %v2983
        %v3144 = vpack.c.b16 %v2992, %v2984
        %v3145 = vpack.c.b16 %v2993, %v2985
        %v3146 = vpack.c.b16 %v2994, %v2986
        %v3147 = vpack.c.b16 %v3003, %v2995
        %v3148 = vpack.c.b16 %v3004, %v2996
        %v3149 = vpack.c.b16 %v3005, %v2997
        %v3150 = vpack.c.b16 %v3006, %v2998
        %v3151 = vpack.c.b16 %v3007, %v2999
        %v3152 = vpack.c.b16 %v3008, %v3000
        %v3153 = vpack.c.b16 %v3009, %v3001
        %v3154 = vpack.c.b16 %v3010, %v3002
        %v3155 = vpack.c.b16 %v3019, %v3011
        %v3156 = vpack.c.b16 %v3020, %v3012
        %v3157 = vpack.c.b16 %v3021, %v3013
        %v3158 = vpack.c.b16 %v3022, %v3014
        %v3159 = vpack.c.b16 %v3023, %v3015
        %v3160 = vpack.c.b16 %v3024, %v3016
        %v3161 = vpack.c.b16 %v3025, %v3017
        %v3162 = vpack.c.b16 %v3026, %v3018
        %v3163 = vpack.c.b16 %v3035, %v3027
        %v3164 = vpack.c.b16 %v3036, %v3028
        %v3165 = vpack.c.b16 %v3037, %v3029
        %v3166 = vpack.c.b16 %v3038, %v3030
        %v3167 = vpack.c.b16 %v3039, %v3031
        %v3168 = vpack.c.b16 %v3040, %v3032
        %v3169 = vpack.c.b16 %v3041, %v3033
        %v3170 = vpack.c.b16 %v3042, %v3034
        %3299 = vmatprep.subr.bf16.mxu0 %v3044
        %3300 = vmatpush1.bf16.msra.mxu0 %v3043
        %3301 = vmatprep.subr.bf16.mxu0 %v3052
        %3302 = vmatpush1.bf16.msra.mxu0 %v3051
        %3303 = vmatprep.subr.bf16.mxu0 %v3060
        %3304 = vmatpush1.bf16.msra.mxu0 %v3059
        %3305 = vmatprep.subr.bf16.mxu0 %v3068
        %3306 = vmatpush1.bf16.msra.mxu0 %v3067
        %3307 = vmatprep.subr.bf16.mxu0 %v3076
        %3308 = vmatpush1.bf16.msra.mxu0 %v3075
        %3309 = vmatprep.subr.bf16.mxu0 %v3084
        %3310 = vmatpush1.bf16.msra.mxu0 %v3083
        %3311 = vmatprep.subr.bf16.mxu0 %v3092
        %3312 = vmatpush1.bf16.msra.mxu0 %v3091
        %3313 = vmatprep.subr.bf16.mxu0 %v3100
        %3314 = vmatpush1.bf16.msra.mxu0 %v3099
        %3315 = vmatprep.subr.bf16.mxu0 %v3108
        %3316 = vmatpush1.bf16.msra.mxu0 %v3107
        %3317 = vmatprep.subr.bf16.mxu0 %v3116
        %3318 = vmatpush1.bf16.msra.mxu0 %v3115
        %3319 = vmatprep.subr.bf16.mxu0 %v3124
        %3320 = vmatpush1.bf16.msra.mxu0 %v3123
        %3321 = vmatprep.subr.bf16.mxu0 %v3132
        %3322 = vmatpush1.bf16.msra.mxu0 %v3131
        %3323 = vmatprep.subr.bf16.mxu0 %v3140
        %3324 = vmatpush1.bf16.msra.mxu0 %v3139
        %3325 = vmatprep.subr.bf16.mxu0 %v3148
        %3326 = vmatpush1.bf16.msra.mxu0 %v3147
        %3327 = vmatprep.subr.bf16.mxu0 %v3156
        %3328 = vmatpush1.bf16.msra.mxu0 %v3155
        %3329 = vmatprep.subr.bf16.mxu0 %v3164
        %3330 = vmatpush1.bf16.msra.mxu0 %v3163
        %3331 = vmatprep.mubr.bf16.mxu0 %v2650
        %3332 = vmatmul.mubr.bf16.gmra.mrb[0].mxu0 %v2647
        %v3333 = vpop.f32.mrb[0].mxu0
        %v3334 = vadd.f32 0.0, %v3333
        %v3335 = vpop.f32.mrb[0].mxu0
        %v3336 = vadd.f32 0.0, %v3335
        %v3337 = vpop.f32.mrb[0].mxu0
        %v3338 = vadd.f32 0.0, %v3337
        %v3339 = vpop.f32.mrb[0].mxu0
        %v3340 = vadd.f32 0.0, %v3339
        %3341 = vmatprep.mubr.bf16.mxu0 %v2654
        %3342 = vmatmul.mubr.bf16.gmra.mrb[0].mxu0 %v2652
        %v3343 = vpop.f32.mrb[0].mxu0
        %v3344 = vadd.f32 0.0, %v3343
        %v3345 = vpop.f32.mrb[0].mxu0
        %v3346 = vadd.f32 0.0, %v3345
        %v3347 = vpop.f32.mrb[0].mxu0
        %v3348 = vadd.f32 0.0, %v3347
        %v3349 = vpop.f32.mrb[0].mxu0
        %v3350 = vadd.f32 0.0, %v3349
        %3351 = vdwg.mxu0
        %3352 = vmatprep.subr.bf16.mxu0 %v3046
        %3353 = vmatpush1.bf16.msra.mxu0 %v3045
        %3354 = vmatprep.subr.bf16.mxu0 %v3054
        %3355 = vmatpush1.bf16.msra.mxu0 %v3053
        %3356 = vmatprep.subr.bf16.mxu0 %v3062
        %3357 = vmatpush1.bf16.msra.mxu0 %v3061
        %3358 = vmatprep.subr.bf16.mxu0 %v3070
        %3359 = vmatpush1.bf16.msra.mxu0 %v3069
        %3360 = vmatprep.subr.bf16.mxu0 %v3078
        %3361 = vmatpush1.bf16.msra.mxu0 %v3077
        %3362 = vmatprep.subr.bf16.mxu0 %v3086
        %3363 = vmatpush1.bf16.msra.mxu0 %v3085
        %3364 = vmatprep.subr.bf16.mxu0 %v3094
        %3365 = vmatpush1.bf16.msra.mxu0 %v3093
        %3366 = vmatprep.subr.bf16.mxu0 %v3102
        %3367 = vmatpush1.bf16.msra.mxu0 %v3101
        %3368 = vmatprep.subr.bf16.mxu0 %v3110
        %3369 = vmatpush1.bf16.msra.mxu0 %v3109
        %3370 = vmatprep.subr.bf16.mxu0 %v3118
        %3371 = vmatpush1.bf16.msra.mxu0 %v3117
        %3372 = vmatprep.subr.bf16.mxu0 %v3126
        %3373 = vmatpush1.bf16.msra.mxu0 %v3125
        %3374 = vmatprep.subr.bf16.mxu0 %v3134
        %3375 = vmatpush1.bf16.msra.mxu0 %v3133
        %3376 = vmatprep.subr.bf16.mxu0 %v3142
        %3377 = vmatpush1.bf16.msra.mxu0 %v3141
        %3378 = vmatprep.subr.bf16.mxu0 %v3150
        %3379 = vmatpush1.bf16.msra.mxu0 %v3149
        %3380 = vmatprep.subr.bf16.mxu0 %v3158
        %3381 = vmatpush1.bf16.msra.mxu0 %v3157
        %3382 = vmatprep.subr.bf16.mxu0 %v3166
        %3383 = vmatpush1.bf16.msra.mxu0 %v3165
        %3384 = vmatprep.mubr.bf16.mxu0 %v2650
        %3385 = vmatmul.mubr.bf16.gmra.mrb[0].mxu0 %v2647
        %v3386 = vpop.f32.mrb[0].mxu0
        %v3387 = vadd.f32 0.0, %v3386
        %v3388 = vpop.f32.mrb[0].mxu0
        %v3389 = vadd.f32 0.0, %v3388
        %v3390 = vpop.f32.mrb[0].mxu0
        %v3391 = vadd.f32 0.0, %v3390
        %v3392 = vpop.f32.mrb[0].mxu0
        %v3393 = vadd.f32 0.0, %v3392
        %3394 = vmatprep.mubr.bf16.mxu0 %v2654
        %3395 = vmatmul.mubr.bf16.gmra.mrb[0].mxu0 %v2652
        %v3396 = vpop.f32.mrb[0].mxu0
        %v3397 = vadd.f32 0.0, %v3396
        %v3398 = vpop.f32.mrb[0].mxu0
        %v3399 = vadd.f32 0.0, %v3398
        %v3400 = vpop.f32.mrb[0].mxu0
        %v3401 = vadd.f32 0.0, %v3400
        %v3402 = vpop.f32.mrb[0].mxu0
        %v3403 = vadd.f32 0.0, %v3402
        %3404 = vdwg.mxu0
        %3405 = vmatprep.subr.bf16.mxu0 %v3048
        %3406 = vmatpush1.bf16.msra.mxu0 %v3047
        %3407 = vmatprep.subr.bf16.mxu0 %v3056
        %3408 = vmatpush1.bf16.msra.mxu0 %v3055
        %3409 = vmatprep.subr.bf16.mxu0 %v3064
        %3410 = vmatpush1.bf16.msra.mxu0 %v3063
        %3411 = vmatprep.subr.bf16.mxu0 %v3072
        %3412 = vmatpush1.bf16.msra.mxu0 %v3071
        %3413 = vmatprep.subr.bf16.mxu0 %v3080
        %3414 = vmatpush1.bf16.msra.mxu0 %v3079
        %3415 = vmatprep.subr.bf16.mxu0 %v3088
        %3416 = vmatpush1.bf16.msra.mxu0 %v3087
        %3417 = vmatprep.subr.bf16.mxu0 %v3096
        %3418 = vmatpush1.bf16.msra.mxu0 %v3095
        %3419 = vmatprep.subr.bf16.mxu0 %v3104
        %3420 = vmatpush1.bf16.msra.mxu0 %v3103
        %3421 = vmatprep.subr.bf16.mxu0 %v3112
        %3422 = vmatpush1.bf16.msra.mxu0 %v3111
        %3423 = vmatprep.subr.bf16.mxu0 %v3120
        %3424 = vmatpush1.bf16.msra.mxu0 %v3119
        %3425 = vmatprep.subr.bf16.mxu0 %v3128
        %3426 = vmatpush1.bf16.msra.mxu0 %v3127
        %3427 = vmatprep.subr.bf16.mxu0 %v3136
        %3428 = vmatpush1.bf16.msra.mxu0 %v3135
        %3429 = vmatprep.subr.bf16.mxu0 %v3144
        %3430 = vmatpush1.bf16.msra.mxu0 %v3143
        %3431 = vmatprep.subr.bf16.mxu0 %v3152
        %3432 = vmatpush1.bf16.msra.mxu0 %v3151
        %3433 = vmatprep.subr.bf16.mxu0 %v3160
        %3434 = vmatpush1.bf16.msra.mxu0 %v3159
        %3435 = vmatprep.subr.bf16.mxu0 %v3168
        %3436 = vmatpush1.bf16.msra.mxu0 %v3167
        %3437 = vmatprep.mubr.bf16.mxu0 %v2650
        %3438 = vmatmul.mubr.bf16.gmra.mrb[0].mxu0 %v2647
        %v3439 = vpop.f32.mrb[0].mxu0
        %v3440 = vadd.f32 0.0, %v3439
        %v3441 = vpop.f32.mrb[0].mxu0
        %v3442 = vadd.f32 0.0, %v3441
        %v3443 = vpop.f32.mrb[0].mxu0
        %v3444 = vadd.f32 0.0, %v3443
        %v3445 = vpop.f32.mrb[0].mxu0
        %v3446 = vadd.f32 0.0, %v3445
        %3447 = vmatprep.mubr.bf16.mxu0 %v2654
        %3448 = vmatmul.mubr.bf16.gmra.mrb[0].mxu0 %v2652
        %v3449 = vpop.f32.mrb[0].mxu0
        %v3450 = vadd.f32 0.0, %v3449
        %v3451 = vpop.f32.mrb[0].mxu0
        %v3452 = vadd.f32 0.0, %v3451
        %v3453 = vpop.f32.mrb[0].mxu0
        %v3454 = vadd.f32 0.0, %v3453
        %v3455 = vpop.f32.mrb[0].mxu0
        %v3456 = vadd.f32 0.0, %v3455
        %3457 = vdwg.mxu0
        %3458 = vmatprep.subr.bf16.mxu0 %v3050
        %3459 = vmatpush1.bf16.msra.mxu0 %v3049
        %3460 = vmatprep.subr.bf16.mxu0 %v3058
        %3461 = vmatpush1.bf16.msra.mxu0 %v3057
        %3462 = vmatprep.subr.bf16.mxu0 %v3066
        %3463 = vmatpush1.bf16.msra.mxu0 %v3065
        %3464 = vmatprep.subr.bf16.mxu0 %v3074
        %3465 = vmatpush1.bf16.msra.mxu0 %v3073
        %3466 = vmatprep.subr.bf16.mxu0 %v3082
        %3467 = vmatpush1.bf16.msra.mxu0 %v3081
        %3468 = vmatprep.subr.bf16.mxu0 %v3090
        %3469 = vmatpush1.bf16.msra.mxu0 %v3089
        %3470 = vmatprep.subr.bf16.mxu0 %v3098
        %3471 = vmatpush1.bf16.msra.mxu0 %v3097
        %3472 = vmatprep.subr.bf16.mxu0 %v3106
        %3473 = vmatpush1.bf16.msra.mxu0 %v3105
        %3474 = vmatprep.subr.bf16.mxu0 %v3114
        %3475 = vmatpush1.bf16.msra.mxu0 %v3113
        %3476 = vmatprep.subr.bf16.mxu0 %v3122
        %3477 = vmatpush1.bf16.msra.mxu0 %v3121
        %3478 = vmatprep.subr.bf16.mxu0 %v3130
        %3479 = vmatpush1.bf16.msra.mxu0 %v3129
        %3480 = vmatprep.subr.bf16.mxu0 %v3138
        %3481 = vmatpush1.bf16.msra.mxu0 %v3137
        %3482 = vmatprep.subr.bf16.mxu0 %v3146
        %3483 = vmatpush1.bf16.msra.mxu0 %v3145
        %3484 = vmatprep.subr.bf16.mxu0 %v3154
        %3485 = vmatpush1.bf16.msra.mxu0 %v3153
        %3486 = vmatprep.subr.bf16.mxu0 %v3162
        %3487 = vmatpush1.bf16.msra.mxu0 %v3161
        %3488 = vmatprep.subr.bf16.mxu0 %v3170
        %3489 = vmatpush1.bf16.msra.mxu0 %v3169
        %3490 = vmatprep.mubr.bf16.mxu0 %v2650
        %3491 = vmatmul.mubr.bf16.gmra.mrb[0].mxu0 %v2647
        %v3492 = vpop.f32.mrb[0].mxu0
        %v3493 = vadd.f32 0.0, %v3492
        %v3494 = vpop.f32.mrb[0].mxu0
        %v3495 = vadd.f32 0.0, %v3494
        %v3496 = vpop.f32.mrb[0].mxu0
        %v3497 = vadd.f32 0.0, %v3496
        %v3498 = vpop.f32.mrb[0].mxu0
        %v3499 = vadd.f32 0.0, %v3498
        %3500 = vmatprep.mubr.bf16.mxu0 %v2654
        %3501 = vmatmul.mubr.bf16.gmra.mrb[0].mxu0 %v2652
        %v3502 = vpop.f32.mrb[0].mxu0
        %v3503 = vadd.f32 0.0, %v3502
        %v3504 = vpop.f32.mrb[0].mxu0
        %v3505 = vadd.f32 0.0, %v3504
        %v3506 = vpop.f32.mrb[0].mxu0
        %v3507 = vadd.f32 0.0, %v3506
        %v3508 = vpop.f32.mrb[0].mxu0
        %v3509 = vadd.f32 0.0, %v3508
        %3510 = vdwg.mxu0
        %v3511 = vadd.f32 %v2467, %v3334
        %v3512 = vadd.f32 %v2469, %v3336
        %v3513 = vadd.f32 %v2520, %v3387
        %v3514 = vadd.f32 %v2522, %v3389
        %v3515 = vadd.f32 %v2573, %v3440
        %v3516 = vadd.f32 %v2575, %v3442
        %v3517 = vadd.f32 %v2626, %v3493
        %v3518 = vadd.f32 %v2628, %v3495
        %v3519 = vadd.f32 %v2471, %v3338
        %v3520 = vadd.f32 %v2473, %v3340
        %v3521 = vadd.f32 %v2524, %v3391
        %v3522 = vadd.f32 %v2526, %v3393
        %v3523 = vadd.f32 %v2577, %v3444
        %v3524 = vadd.f32 %v2579, %v3446
        %v3525 = vadd.f32 %v2630, %v3497
        %v3526 = vadd.f32 %v2632, %v3499
        %v3527 = vadd.f32 %v2477, %v3344
        %v3528 = vadd.f32 %v2479, %v3346
        %v3529 = vadd.f32 %v2530, %v3397
        %v3530 = vadd.f32 %v2532, %v3399
        %v3531 = vadd.f32 %v2583, %v3450
        %v3532 = vadd.f32 %v2585, %v3452
        %v3533 = vadd.f32 %v2636, %v3503
        %v3534 = vadd.f32 %v2638, %v3505
        %v3535 = vadd.f32 %v2481, %v3348
        %v3536 = vadd.f32 %v2483, %v3350
        %v3537 = vadd.f32 %v2534, %v3401
        %v3538 = vadd.f32 %v2536, %v3403
        %v3539 = vadd.f32 %v2587, %v3454
        %v3540 = vadd.f32 %v2589, %v3456
        %v3541 = vadd.f32 %v2640, %v3507
        %v3542 = vadd.f32 %v2642, %v3509
        %vm3543 = vsmask.f32 6400
        %v3544 = vrot.slane %v897, 1
        %v3545 = vrot.slane %v899, 2
        %v3546 = vor.u32 %v3544, %v3545
        %v3547 = vrot.slane %v920, 1
        %v3548 = vrot.slane %v904, 2
        %v3549 = vor.u32 %v3547, %v3548
        %v3550 = vsel %vm3543, %v3546, %v3549
        %v3551 = vrot.slane %v909, 1
        %v3552 = vrot.slane %v911, 2
        %v3553 = vor.u32 %v3551, %v3552
        %v3554 = vrot.slane %v928, 1
        %v3555 = vrot.slane %v916, 2
        %v3556 = vor.u32 %v3554, %v3555
        %v3557 = vsel %vm3543, %v3553, %v3556
        %v3558 = vshrl.u32 %v381, 16
        %v3560 = vrot.slane %v3558, 1
        %v3561 = vrot.slane %v924, 2
        %v3562 = vor.u32 %v3560, %v3561
        %v3563 = vsel %vm3543, %v3549, %v3562
        %v3564 = vshrl.u32 %v382, 16
        %v3566 = vrot.slane %v3564, 1
        %v3567 = vrot.slane %v932, 2
        %v3568 = vor.u32 %v3566, %v3567
        %v3569 = vsel %vm3543, %v3556, %v3568
        %v3702 = vunpack.c.l.b16 %v767
        %v3703 = vunpack.c.h.b16 %v767
        %v3704 = vunpack.c.l.b16 %v768
        %v3705 = vunpack.c.h.b16 %v768
        %v3706 = vunpack.c.l.b16 %v769
        %v3707 = vunpack.c.h.b16 %v769
        %v3708 = vunpack.c.l.b16 %v770
        %v3709 = vunpack.c.h.b16 %v770
        %v3710 = vunpack.c.l.b16 %v771
        %v3711 = vunpack.c.h.b16 %v771
        %v3712 = vunpack.c.l.b16 %v772
        %v3713 = vunpack.c.h.b16 %v772
        %v3714 = vunpack.c.l.b16 %v773
        %v3715 = vunpack.c.h.b16 %v773
        %v3716 = vunpack.c.l.b16 %v774
        %v3717 = vunpack.c.h.b16 %v774
        %v3718 = vunpack.c.l.b16 %v775
        %v3719 = vunpack.c.h.b16 %v775
        %v3720 = vunpack.c.l.b16 %v776
        %v3721 = vunpack.c.h.b16 %v776
        %v3722 = vunpack.c.l.b16 %v777
        %v3723 = vunpack.c.h.b16 %v777
        %v3724 = vunpack.c.l.b16 %v778
        %v3725 = vunpack.c.h.b16 %v778
        %v3726 = vunpack.c.l.b16 %v779
        %v3727 = vunpack.c.h.b16 %v779
        %v3728 = vunpack.c.l.b16 %v780
        %v3729 = vunpack.c.h.b16 %v780
        %v3730 = vunpack.c.l.b16 %v781
        %v3731 = vunpack.c.h.b16 %v781
        %v3732 = vunpack.c.l.b16 %v782
        %v3733 = vunpack.c.h.b16 %v782
        %v3734 = vunpack.c.l.b16 %v783
        %v3735 = vunpack.c.h.b16 %v783
        %v3736 = vunpack.c.l.b16 %v784
        %v3737 = vunpack.c.h.b16 %v784
        %v3738 = vunpack.c.l.b16 %v785
        %v3739 = vunpack.c.h.b16 %v785
        %v3740 = vunpack.c.l.b16 %v786
        %v3741 = vunpack.c.h.b16 %v786
        %v3742 = vunpack.c.l.b16 %v787
        %v3743 = vunpack.c.h.b16 %v787
        %v3744 = vunpack.c.l.b16 %v788
        %v3745 = vunpack.c.h.b16 %v788
        %v3746 = vunpack.c.l.b16 %v789
        %v3747 = vunpack.c.h.b16 %v789
        %v3748 = vunpack.c.l.b16 %v790
        %v3749 = vunpack.c.h.b16 %v790
        %v3750 = vunpack.c.l.b16 %v791
        %v3751 = vunpack.c.h.b16 %v791
        %v3752 = vunpack.c.l.b16 %v792
        %v3753 = vunpack.c.h.b16 %v792
        %v3754 = vunpack.c.l.b16 %v793
        %v3755 = vunpack.c.h.b16 %v793
        %v3756 = vunpack.c.l.b16 %v794
        %v3757 = vunpack.c.h.b16 %v794
        %v3758 = vunpack.c.l.b16 %v795
        %v3759 = vunpack.c.h.b16 %v795
        %v3760 = vunpack.c.l.b16 %v796
        %v3761 = vunpack.c.h.b16 %v796
        %v3762 = vunpack.c.l.b16 %v797
        %v3763 = vunpack.c.h.b16 %v797
        %v3764 = vunpack.c.l.b16 %v798
        %v3765 = vunpack.c.h.b16 %v798
        %v3766 = vunpack.c.l.b16 %v799
        %v3767 = vunpack.c.h.b16 %v799
        %v3768 = vunpack.c.l.b16 %v800
        %v3769 = vunpack.c.h.b16 %v800
        %v3770 = vunpack.c.l.b16 %v801
        %v3771 = vunpack.c.h.b16 %v801
        %v3772 = vunpack.c.l.b16 %v802
        %v3773 = vunpack.c.h.b16 %v802
        %v3774 = vunpack.c.l.b16 %v803
        %v3775 = vunpack.c.h.b16 %v803
        %v3776 = vunpack.c.l.b16 %v804
        %v3777 = vunpack.c.h.b16 %v804
        %v3778 = vunpack.c.l.b16 %v805
        %v3779 = vunpack.c.h.b16 %v805
        %v3780 = vunpack.c.l.b16 %v806
        %v3781 = vunpack.c.h.b16 %v806
        %v3782 = vunpack.c.l.b16 %v807
        %v3783 = vunpack.c.h.b16 %v807
        %v3784 = vunpack.c.l.b16 %v808
        %v3785 = vunpack.c.h.b16 %v808
        %v3786 = vunpack.c.l.b16 %v809
        %v3787 = vunpack.c.h.b16 %v809
        %v3788 = vunpack.c.l.b16 %v810
        %v3789 = vunpack.c.h.b16 %v810
        %v3790 = vunpack.c.l.b16 %v811
        %v3791 = vunpack.c.h.b16 %v811
        %v3792 = vunpack.c.l.b16 %v812
        %v3793 = vunpack.c.h.b16 %v812
        %v3794 = vunpack.c.l.b16 %v813
        %v3795 = vunpack.c.h.b16 %v813
        %v3796 = vunpack.c.l.b16 %v814
        %v3797 = vunpack.c.h.b16 %v814
        %v3798 = vunpack.c.l.b16 %v815
        %v3799 = vunpack.c.h.b16 %v815
        %v3800 = vunpack.c.l.b16 %v816
        %v3801 = vunpack.c.h.b16 %v816
        %v3802 = vunpack.c.l.b16 %v817
        %v3803 = vunpack.c.h.b16 %v817
        %v3804 = vunpack.c.l.b16 %v818
        %v3805 = vunpack.c.h.b16 %v818
        %v3806 = vunpack.c.l.b16 %v819
        %v3807 = vunpack.c.h.b16 %v819
        %v3808 = vunpack.c.l.b16 %v820
        %v3809 = vunpack.c.h.b16 %v820
        %v3810 = vunpack.c.l.b16 %v821
        %v3811 = vunpack.c.h.b16 %v821
        %v3812 = vunpack.c.l.b16 %v822
        %v3813 = vunpack.c.h.b16 %v822
        %v3814 = vunpack.c.l.b16 %v823
        %v3815 = vunpack.c.h.b16 %v823
        %v3816 = vunpack.c.l.b16 %v824
        %v3817 = vunpack.c.h.b16 %v824
        %v3818 = vunpack.c.l.b16 %v825
        %v3819 = vunpack.c.h.b16 %v825
        %v3820 = vunpack.c.l.b16 %v826
        %v3821 = vunpack.c.h.b16 %v826
        %v3822 = vunpack.c.l.b16 %v827
        %v3823 = vunpack.c.h.b16 %v827
        %v3824 = vunpack.c.l.b16 %v828
        %v3825 = vunpack.c.h.b16 %v828
        %v3826 = vunpack.c.l.b16 %v829
        %v3827 = vunpack.c.h.b16 %v829
        %v3828 = vunpack.c.l.b16 %v830
        %v3829 = vunpack.c.h.b16 %v830
        %v3830 = vunpack.c.l.b16 %v831
        %v3831 = vunpack.c.h.b16 %v831
        %v3832 = vunpack.c.l.b16 %v832
        %v3833 = vunpack.c.h.b16 %v832
        %v3834 = vunpack.c.l.b16 %v833
        %v3835 = vunpack.c.h.b16 %v833
        %v3836 = vunpack.c.l.b16 %v834
        %v3837 = vunpack.c.h.b16 %v834
        %v3838 = vunpack.c.l.b16 %v835
        %v3839 = vunpack.c.h.b16 %v835
        %v3840 = vunpack.c.l.b16 %v836
        %v3841 = vunpack.c.h.b16 %v836
        %v3842 = vunpack.c.l.b16 %v837
        %v3843 = vunpack.c.h.b16 %v837
        %v3844 = vunpack.c.l.b16 %v838
        %v3845 = vunpack.c.h.b16 %v838
        %v3846 = vunpack.c.l.b16 %v839
        %v3847 = vunpack.c.h.b16 %v839
        %v3848 = vunpack.c.l.b16 %v840
        %v3849 = vunpack.c.h.b16 %v840
        %v3850 = vunpack.c.l.b16 %v841
        %v3851 = vunpack.c.h.b16 %v841
        %v3852 = vunpack.c.l.b16 %v842
        %v3853 = vunpack.c.h.b16 %v842
        %v3854 = vunpack.c.l.b16 %v843
        %v3855 = vunpack.c.h.b16 %v843
        %v3856 = vunpack.c.l.b16 %v844
        %v3857 = vunpack.c.h.b16 %v844
        %v3858 = vunpack.c.l.b16 %v845
        %v3859 = vunpack.c.h.b16 %v845
        %v3860 = vunpack.c.l.b16 %v846
        %v3861 = vunpack.c.h.b16 %v846
        %v3862 = vunpack.c.l.b16 %v847
        %v3863 = vunpack.c.h.b16 %v847
        %v3864 = vunpack.c.l.b16 %v848
        %v3865 = vunpack.c.h.b16 %v848
        %v3866 = vunpack.c.l.b16 %v849
        %v3867 = vunpack.c.h.b16 %v849
        %v3868 = vunpack.c.l.b16 %v850
        %v3869 = vunpack.c.h.b16 %v850
        %v3870 = vunpack.c.l.b16 %v851
        %v3871 = vunpack.c.h.b16 %v851
        %v3872 = vunpack.c.l.b16 %v852
        %v3873 = vunpack.c.h.b16 %v852
        %v3874 = vunpack.c.l.b16 %v853
        %v3875 = vunpack.c.h.b16 %v853
        %v3876 = vunpack.c.l.b16 %v854
        %v3877 = vunpack.c.h.b16 %v854
        %v3878 = vunpack.c.l.b16 %v855
        %v3879 = vunpack.c.h.b16 %v855
        %v3880 = vunpack.c.l.b16 %v856
        %v3881 = vunpack.c.h.b16 %v856
        %v3882 = vunpack.c.l.b16 %v857
        %v3883 = vunpack.c.h.b16 %v857
        %v3884 = vunpack.c.l.b16 %v858
        %v3885 = vunpack.c.h.b16 %v858
        %v3886 = vunpack.c.l.b16 %v859
        %v3887 = vunpack.c.h.b16 %v859
        %v3888 = vunpack.c.l.b16 %v860
        %v3889 = vunpack.c.h.b16 %v860
        %v3890 = vunpack.c.l.b16 %v861
        %v3891 = vunpack.c.h.b16 %v861
        %v3892 = vunpack.c.l.b16 %v862
        %v3893 = vunpack.c.h.b16 %v862
        %v3894 = vunpack.c.l.b16 %v863
        %v3895 = vunpack.c.h.b16 %v863
        %v3896 = vunpack.c.l.b16 %v864
        %v3897 = vunpack.c.h.b16 %v864
        %v3898 = vunpack.c.l.b16 %v865
        %v3899 = vunpack.c.h.b16 %v865
        %v3900 = vunpack.c.l.b16 %v866
        %v3901 = vunpack.c.h.b16 %v866
        %v3902 = vunpack.c.l.b16 %v867
        %v3903 = vunpack.c.h.b16 %v867
        %v3904 = vunpack.c.l.b16 %v868
        %v3905 = vunpack.c.h.b16 %v868
        %v3906 = vunpack.c.l.b16 %v869
        %v3907 = vunpack.c.h.b16 %v869
        %v3908 = vunpack.c.l.b16 %v870
        %v3909 = vunpack.c.h.b16 %v870
        %v3910 = vunpack.c.l.b16 %v871
        %v3911 = vunpack.c.h.b16 %v871
        %v3912 = vunpack.c.l.b16 %v872
        %v3913 = vunpack.c.h.b16 %v872
        %v3914 = vunpack.c.l.b16 %v873
        %v3915 = vunpack.c.h.b16 %v873
        %v3916 = vunpack.c.l.b16 %v874
        %v3917 = vunpack.c.h.b16 %v874
        %v3918 = vunpack.c.l.b16 %v875
        %v3919 = vunpack.c.h.b16 %v875
        %v3920 = vunpack.c.l.b16 %v876
        %v3921 = vunpack.c.h.b16 %v876
        %v3922 = vunpack.c.l.b16 %v877
        %v3923 = vunpack.c.h.b16 %v877
        %v3924 = vunpack.c.l.b16 %v878
        %v3925 = vunpack.c.h.b16 %v878
        %v3926 = vunpack.c.l.b16 %v879
        %v3927 = vunpack.c.h.b16 %v879
        %v3928 = vunpack.c.l.b16 %v880
        %v3929 = vunpack.c.h.b16 %v880
        %v3930 = vunpack.c.l.b16 %v881
        %v3931 = vunpack.c.h.b16 %v881
        %v3932 = vunpack.c.l.b16 %v882
        %v3933 = vunpack.c.h.b16 %v882
        %v3934 = vunpack.c.l.b16 %v883
        %v3935 = vunpack.c.h.b16 %v883
        %v3936 = vunpack.c.l.b16 %v884
        %v3937 = vunpack.c.h.b16 %v884
        %v3938 = vunpack.c.l.b16 %v885
        %v3939 = vunpack.c.h.b16 %v885
        %v3940 = vunpack.c.l.b16 %v886
        %v3941 = vunpack.c.h.b16 %v886
        %v3942 = vunpack.c.l.b16 %v887
        %v3943 = vunpack.c.h.b16 %v887
        %v3944 = vunpack.c.l.b16 %v888
        %v3945 = vunpack.c.h.b16 %v888
        %v3946 = vunpack.c.l.b16 %v889
        %v3947 = vunpack.c.h.b16 %v889
        %v3948 = vunpack.c.l.b16 %v890
        %v3949 = vunpack.c.h.b16 %v890
        %v3950 = vunpack.c.l.b16 %v891
        %v3951 = vunpack.c.h.b16 %v891
        %v3952 = vunpack.c.l.b16 %v892
        %v3953 = vunpack.c.h.b16 %v892
        %v3954 = vunpack.c.l.b16 %v893
        %v3955 = vunpack.c.h.b16 %v893
        %v3956 = vunpack.c.l.b16 %v894
        %v3957 = vunpack.c.h.b16 %v894
        %v3958 = vpack.c.b16 %v3710, %v3702
        %v3959 = vpack.c.b16 %v3711, %v3703
        %v3960 = vpack.c.b16 %v3712, %v3704
        %v3961 = vpack.c.b16 %v3713, %v3705
        %v3962 = vpack.c.b16 %v3714, %v3706
        %v3963 = vpack.c.b16 %v3715, %v3707
        %v3964 = vpack.c.b16 %v3716, %v3708
        %v3965 = vpack.c.b16 %v3717, %v3709
        %v3966 = vpack.c.b16 %v3726, %v3718
        %v3967 = vpack.c.b16 %v3727, %v3719
        %v3968 = vpack.c.b16 %v3728, %v3720
        %v3969 = vpack.c.b16 %v3729, %v3721
        %v3970 = vpack.c.b16 %v3730, %v3722
        %v3971 = vpack.c.b16 %v3731, %v3723
        %v3972 = vpack.c.b16 %v3732, %v3724
        %v3973 = vpack.c.b16 %v3733, %v3725
        %v3974 = vpack.c.b16 %v3742, %v3734
        %v3975 = vpack.c.b16 %v3743, %v3735
        %v3976 = vpack.c.b16 %v3744, %v3736
        %v3977 = vpack.c.b16 %v3745, %v3737
        %v3978 = vpack.c.b16 %v3746, %v3738
        %v3979 = vpack.c.b16 %v3747, %v3739
        %v3980 = vpack.c.b16 %v3748, %v3740
        %v3981 = vpack.c.b16 %v3749, %v3741
        %v3982 = vpack.c.b16 %v3758, %v3750
        %v3983 = vpack.c.b16 %v3759, %v3751
        %v3984 = vpack.c.b16 %v3760, %v3752
        %v3985 = vpack.c.b16 %v3761, %v3753
        %v3986 = vpack.c.b16 %v3762, %v3754
        %v3987 = vpack.c.b16 %v3763, %v3755
        %v3988 = vpack.c.b16 %v3764, %v3756
        %v3989 = vpack.c.b16 %v3765, %v3757
        %v3990 = vpack.c.b16 %v3774, %v3766
        %v3991 = vpack.c.b16 %v3775, %v3767
        %v3992 = vpack.c.b16 %v3776, %v3768
        %v3993 = vpack.c.b16 %v3777, %v3769
        %v3994 = vpack.c.b16 %v3778, %v3770
        %v3995 = vpack.c.b16 %v3779, %v3771
        %v3996 = vpack.c.b16 %v3780, %v3772
        %v3997 = vpack.c.b16 %v3781, %v3773
        %v3998 = vpack.c.b16 %v3790, %v3782
        %v3999 = vpack.c.b16 %v3791, %v3783
        %v4000 = vpack.c.b16 %v3792, %v3784
        %v4001 = vpack.c.b16 %v3793, %v3785
        %v4002 = vpack.c.b16 %v3794, %v3786
        %v4003 = vpack.c.b16 %v3795, %v3787
        %v4004 = vpack.c.b16 %v3796, %v3788
        %v4005 = vpack.c.b16 %v3797, %v3789
        %v4006 = vpack.c.b16 %v3806, %v3798
        %v4007 = vpack.c.b16 %v3807, %v3799
        %v4008 = vpack.c.b16 %v3808, %v3800
        %v4009 = vpack.c.b16 %v3809, %v3801
        %v4010 = vpack.c.b16 %v3810, %v3802
        %v4011 = vpack.c.b16 %v3811, %v3803
        %v4012 = vpack.c.b16 %v3812, %v3804
        %v4013 = vpack.c.b16 %v3813, %v3805
        %v4014 = vpack.c.b16 %v3822, %v3814
        %v4015 = vpack.c.b16 %v3823, %v3815
        %v4016 = vpack.c.b16 %v3824, %v3816
        %v4017 = vpack.c.b16 %v3825, %v3817
        %v4018 = vpack.c.b16 %v3826, %v3818
        %v4019 = vpack.c.b16 %v3827, %v3819
        %v4020 = vpack.c.b16 %v3828, %v3820
        %v4021 = vpack.c.b16 %v3829, %v3821
        %v4022 = vpack.c.b16 %v3838, %v3830
        %v4023 = vpack.c.b16 %v3839, %v3831
        %v4024 = vpack.c.b16 %v3840, %v3832
        %v4025 = vpack.c.b16 %v3841, %v3833
        %v4026 = vpack.c.b16 %v3842, %v3834
        %v4027 = vpack.c.b16 %v3843, %v3835
        %v4028 = vpack.c.b16 %v3844, %v3836
        %v4029 = vpack.c.b16 %v3845, %v3837
        %v4030 = vpack.c.b16 %v3854, %v3846
        %v4031 = vpack.c.b16 %v3855, %v3847
        %v4032 = vpack.c.b16 %v3856, %v3848
        %v4033 = vpack.c.b16 %v3857, %v3849
        %v4034 = vpack.c.b16 %v3858, %v3850
        %v4035 = vpack.c.b16 %v3859, %v3851
        %v4036 = vpack.c.b16 %v3860, %v3852
        %v4037 = vpack.c.b16 %v3861, %v3853
        %v4038 = vpack.c.b16 %v3870, %v3862
        %v4039 = vpack.c.b16 %v3871, %v3863
        %v4040 = vpack.c.b16 %v3872, %v3864
        %v4041 = vpack.c.b16 %v3873, %v3865
        %v4042 = vpack.c.b16 %v3874, %v3866
        %v4043 = vpack.c.b16 %v3875, %v3867
        %v4044 = vpack.c.b16 %v3876, %v3868
        %v4045 = vpack.c.b16 %v3877, %v3869
        %v4046 = vpack.c.b16 %v3886, %v3878
        %v4047 = vpack.c.b16 %v3887, %v3879
        %v4048 = vpack.c.b16 %v3888, %v3880
        %v4049 = vpack.c.b16 %v3889, %v3881
        %v4050 = vpack.c.b16 %v3890, %v3882
        %v4051 = vpack.c.b16 %v3891, %v3883
        %v4052 = vpack.c.b16 %v3892, %v3884
        %v4053 = vpack.c.b16 %v3893, %v3885
        %v4054 = vpack.c.b16 %v3902, %v3894
        %v4055 = vpack.c.b16 %v3903, %v3895
        %v4056 = vpack.c.b16 %v3904, %v3896
        %v4057 = vpack.c.b16 %v3905, %v3897
        %v4058 = vpack.c.b16 %v3906, %v3898
        %v4059 = vpack.c.b16 %v3907, %v3899
        %v4060 = vpack.c.b16 %v3908, %v3900
        %v4061 = vpack.c.b16 %v3909, %v3901
        %v4062 = vpack.c.b16 %v3918, %v3910
        %v4063 = vpack.c.b16 %v3919, %v3911
        %v4064 = vpack.c.b16 %v3920, %v3912
        %v4065 = vpack.c.b16 %v3921, %v3913
        %v4066 = vpack.c.b16 %v3922, %v3914
        %v4067 = vpack.c.b16 %v3923, %v3915
        %v4068 = vpack.c.b16 %v3924, %v3916
        %v4069 = vpack.c.b16 %v3925, %v3917
        %v4070 = vpack.c.b16 %v3934, %v3926
        %v4071 = vpack.c.b16 %v3935, %v3927
        %v4072 = vpack.c.b16 %v3936, %v3928
        %v4073 = vpack.c.b16 %v3937, %v3929
        %v4074 = vpack.c.b16 %v3938, %v3930
        %v4075 = vpack.c.b16 %v3939, %v3931
        %v4076 = vpack.c.b16 %v3940, %v3932
        %v4077 = vpack.c.b16 %v3941, %v3933
        %v4078 = vpack.c.b16 %v3950, %v3942
        %v4079 = vpack.c.b16 %v3951, %v3943
        %v4080 = vpack.c.b16 %v3952, %v3944
        %v4081 = vpack.c.b16 %v3953, %v3945
        %v4082 = vpack.c.b16 %v3954, %v3946
        %v4083 = vpack.c.b16 %v3955, %v3947
        %v4084 = vpack.c.b16 %v3956, %v3948
        %v4085 = vpack.c.b16 %v3957, %v3949
        %4214 = vmatprep.subr.bf16.mxu0 %v3959
        %4215 = vmatpush1.bf16.msra.mxu0 %v3958
        %4216 = vmatprep.subr.bf16.mxu0 %v3967
        %4217 = vmatpush1.bf16.msra.mxu0 %v3966
        %4218 = vmatprep.subr.bf16.mxu0 %v3975
        %4219 = vmatpush1.bf16.msra.mxu0 %v3974
        %4220 = vmatprep.subr.bf16.mxu0 %v3983
        %4221 = vmatpush1.bf16.msra.mxu0 %v3982
        %4222 = vmatprep.subr.bf16.mxu0 %v3991
        %4223 = vmatpush1.bf16.msra.mxu0 %v3990
        %4224 = vmatprep.subr.bf16.mxu0 %v3999
        %4225 = vmatpush1.bf16.msra.mxu0 %v3998
        %4226 = vmatprep.subr.bf16.mxu0 %v4007
        %4227 = vmatpush1.bf16.msra.mxu0 %v4006
        %4228 = vmatprep.subr.bf16.mxu0 %v4015
        %4229 = vmatpush1.bf16.msra.mxu0 %v4014
        %4230 = vmatprep.subr.bf16.mxu0 %v4023
        %4231 = vmatpush1.bf16.msra.mxu0 %v4022
        %4232 = vmatprep.subr.bf16.mxu0 %v4031
        %4233 = vmatpush1.bf16.msra.mxu0 %v4030
        %4234 = vmatprep.subr.bf16.mxu0 %v4039
        %4235 = vmatpush1.bf16.msra.mxu0 %v4038
        %4236 = vmatprep.subr.bf16.mxu0 %v4047
        %4237 = vmatpush1.bf16.msra.mxu0 %v4046
        %4238 = vmatprep.subr.bf16.mxu0 %v4055
        %4239 = vmatpush1.bf16.msra.mxu0 %v4054
        %4240 = vmatprep.subr.bf16.mxu0 %v4063
        %4241 = vmatpush1.bf16.msra.mxu0 %v4062
        %4242 = vmatprep.subr.bf16.mxu0 %v4071
        %4243 = vmatpush1.bf16.msra.mxu0 %v4070
        %4244 = vmatprep.subr.bf16.mxu0 %v4079
        %4245 = vmatpush1.bf16.msra.mxu0 %v4078
        %4246 = vmatprep.mubr.bf16.mxu0 %v3557
        %4247 = vmatmul.mubr.bf16.gmra.mrb[0].mxu0 %v3550
        %v4248 = vpop.f32.mrb[0].mxu0
        %v4249 = vadd.f32 0.0, %v4248
        %v4250 = vpop.f32.mrb[0].mxu0
        %v4251 = vadd.f32 0.0, %v4250
        %v4252 = vpop.f32.mrb[0].mxu0
        %v4253 = vadd.f32 0.0, %v4252
        %v4254 = vpop.f32.mrb[0].mxu0
        %v4255 = vadd.f32 0.0, %v4254
        %4256 = vmatprep.mubr.bf16.mxu0 %v3569
        %4257 = vmatmul.mubr.bf16.gmra.mrb[0].mxu0 %v3563
        %v4258 = vpop.f32.mrb[0].mxu0
        %v4259 = vadd.f32 0.0, %v4258
        %v4260 = vpop.f32.mrb[0].mxu0
        %v4261 = vadd.f32 0.0, %v4260
        %v4262 = vpop.f32.mrb[0].mxu0
        %v4263 = vadd.f32 0.0, %v4262
        %v4264 = vpop.f32.mrb[0].mxu0
        %v4265 = vadd.f32 0.0, %v4264
        %4266 = vdwg.mxu0
        %4267 = vmatprep.subr.bf16.mxu0 %v3961
        %4268 = vmatpush1.bf16.msra.mxu0 %v3960
        %4269 = vmatprep.subr.bf16.mxu0 %v3969
        %4270 = vmatpush1.bf16.msra.mxu0 %v3968
        %4271 = vmatprep.subr.bf16.mxu0 %v3977
        %4272 = vmatpush1.bf16.msra.mxu0 %v3976
        %4273 = vmatprep.subr.bf16.mxu0 %v3985
        %4274 = vmatpush1.bf16.msra.mxu0 %v3984
        %4275 = vmatprep.subr.bf16.mxu0 %v3993
        %4276 = vmatpush1.bf16.msra.mxu0 %v3992
        %4277 = vmatprep.subr.bf16.mxu0 %v4001
        %4278 = vmatpush1.bf16.msra.mxu0 %v4000
        %4279 = vmatprep.subr.bf16.mxu0 %v4009
        %4280 = vmatpush1.bf16.msra.mxu0 %v4008
        %4281 = vmatprep.subr.bf16.mxu0 %v4017
        %4282 = vmatpush1.bf16.msra.mxu0 %v4016
        %4283 = vmatprep.subr.bf16.mxu0 %v4025
        %4284 = vmatpush1.bf16.msra.mxu0 %v4024
        %4285 = vmatprep.subr.bf16.mxu0 %v4033
        %4286 = vmatpush1.bf16.msra.mxu0 %v4032
        %4287 = vmatprep.subr.bf16.mxu0 %v4041
        %4288 = vmatpush1.bf16.msra.mxu0 %v4040
        %4289 = vmatprep.subr.bf16.mxu0 %v4049
        %4290 = vmatpush1.bf16.msra.mxu0 %v4048
        %4291 = vmatprep.subr.bf16.mxu0 %v4057
        %4292 = vmatpush1.bf16.msra.mxu0 %v4056
        %4293 = vmatprep.subr.bf16.mxu0 %v4065
        %4294 = vmatpush1.bf16.msra.mxu0 %v4064
        %4295 = vmatprep.subr.bf16.mxu0 %v4073
        %4296 = vmatpush1.bf16.msra.mxu0 %v4072
        %4297 = vmatprep.subr.bf16.mxu0 %v4081
        %4298 = vmatpush1.bf16.msra.mxu0 %v4080
        %4299 = vmatprep.mubr.bf16.mxu0 %v3557
        %4300 = vmatmul.mubr.bf16.gmra.mrb[0].mxu0 %v3550
        %v4301 = vpop.f32.mrb[0].mxu0
        %v4302 = vadd.f32 0.0, %v4301
        %v4303 = vpop.f32.mrb[0].mxu0
        %v4304 = vadd.f32 0.0, %v4303
        %v4305 = vpop.f32.mrb[0].mxu0
        %v4306 = vadd.f32 0.0, %v4305
        %v4307 = vpop.f32.mrb[0].mxu0
        %v4308 = vadd.f32 0.0, %v4307
        %4309 = vmatprep.mubr.bf16.mxu0 %v3569
        %4310 = vmatmul.mubr.bf16.gmra.mrb[0].mxu0 %v3563
        %v4311 = vpop.f32.mrb[0].mxu0
        %v4312 = vadd.f32 0.0, %v4311
        %v4313 = vpop.f32.mrb[0].mxu0
        %v4314 = vadd.f32 0.0, %v4313
        %v4315 = vpop.f32.mrb[0].mxu0
        %v4316 = vadd.f32 0.0, %v4315
        %v4317 = vpop.f32.mrb[0].mxu0
        %v4318 = vadd.f32 0.0, %v4317
        %4319 = vdwg.mxu0
        %4320 = vmatprep.subr.bf16.mxu0 %v3963
        %4321 = vmatpush1.bf16.msra.mxu0 %v3962
        %4322 = vmatprep.subr.bf16.mxu0 %v3971
        %4323 = vmatpush1.bf16.msra.mxu0 %v3970
        %4324 = vmatprep.subr.bf16.mxu0 %v3979
        %4325 = vmatpush1.bf16.msra.mxu0 %v3978
        %4326 = vmatprep.subr.bf16.mxu0 %v3987
        %4327 = vmatpush1.bf16.msra.mxu0 %v3986
        %4328 = vmatprep.subr.bf16.mxu0 %v3995
        %4329 = vmatpush1.bf16.msra.mxu0 %v3994
        %4330 = vmatprep.subr.bf16.mxu0 %v4003
        %4331 = vmatpush1.bf16.msra.mxu0 %v4002
        %4332 = vmatprep.subr.bf16.mxu0 %v4011
        %4333 = vmatpush1.bf16.msra.mxu0 %v4010
        %4334 = vmatprep.subr.bf16.mxu0 %v4019
        %4335 = vmatpush1.bf16.msra.mxu0 %v4018
        %4336 = vmatprep.subr.bf16.mxu0 %v4027
        %4337 = vmatpush1.bf16.msra.mxu0 %v4026
        %4338 = vmatprep.subr.bf16.mxu0 %v4035
        %4339 = vmatpush1.bf16.msra.mxu0 %v4034
        %4340 = vmatprep.subr.bf16.mxu0 %v4043
        %4341 = vmatpush1.bf16.msra.mxu0 %v4042
        %4342 = vmatprep.subr.bf16.mxu0 %v4051
        %4343 = vmatpush1.bf16.msra.mxu0 %v4050
        %4344 = vmatprep.subr.bf16.mxu0 %v4059
        %4345 = vmatpush1.bf16.msra.mxu0 %v4058
        %4346 = vmatprep.subr.bf16.mxu0 %v4067
        %4347 = vmatpush1.bf16.msra.mxu0 %v4066
        %4348 = vmatprep.subr.bf16.mxu0 %v4075
        %4349 = vmatpush1.bf16.msra.mxu0 %v4074
        %4350 = vmatprep.subr.bf16.mxu0 %v4083
        %4351 = vmatpush1.bf16.msra.mxu0 %v4082
        %4352 = vmatprep.mubr.bf16.mxu0 %v3557
        %4353 = vmatmul.mubr.bf16.gmra.mrb[0].mxu0 %v3550
        %v4354 = vpop.f32.mrb[0].mxu0
        %v4355 = vadd.f32 0.0, %v4354
        %v4356 = vpop.f32.mrb[0].mxu0
        %v4357 = vadd.f32 0.0, %v4356
        %v4358 = vpop.f32.mrb[0].mxu0
        %v4359 = vadd.f32 0.0, %v4358
        %v4360 = vpop.f32.mrb[0].mxu0
        %v4361 = vadd.f32 0.0, %v4360
        %4362 = vmatprep.mubr.bf16.mxu0 %v3569
        %4363 = vmatmul.mubr.bf16.gmra.mrb[0].mxu0 %v3563
        %v4364 = vpop.f32.mrb[0].mxu0
        %v4365 = vadd.f32 0.0, %v4364
        %v4366 = vpop.f32.mrb[0].mxu0
        %v4367 = vadd.f32 0.0, %v4366
        %v4368 = vpop.f32.mrb[0].mxu0
        %v4369 = vadd.f32 0.0, %v4368
        %v4370 = vpop.f32.mrb[0].mxu0
        %v4371 = vadd.f32 0.0, %v4370
        %4372 = vdwg.mxu0
        %4373 = vmatprep.subr.bf16.mxu0 %v3965
        %4374 = vmatpush1.bf16.msra.mxu0 %v3964
        %4375 = vmatprep.subr.bf16.mxu0 %v3973
        %4376 = vmatpush1.bf16.msra.mxu0 %v3972
        %4377 = vmatprep.subr.bf16.mxu0 %v3981
        %4378 = vmatpush1.bf16.msra.mxu0 %v3980
        %4379 = vmatprep.subr.bf16.mxu0 %v3989
        %4380 = vmatpush1.bf16.msra.mxu0 %v3988
        %4381 = vmatprep.subr.bf16.mxu0 %v3997
        %4382 = vmatpush1.bf16.msra.mxu0 %v3996
        %4383 = vmatprep.subr.bf16.mxu0 %v4005
        %4384 = vmatpush1.bf16.msra.mxu0 %v4004
        %4385 = vmatprep.subr.bf16.mxu0 %v4013
        %4386 = vmatpush1.bf16.msra.mxu0 %v4012
        %4387 = vmatprep.subr.bf16.mxu0 %v4021
        %4388 = vmatpush1.bf16.msra.mxu0 %v4020
        %4389 = vmatprep.subr.bf16.mxu0 %v4029
        %4390 = vmatpush1.bf16.msra.mxu0 %v4028
        %4391 = vmatprep.subr.bf16.mxu0 %v4037
        %4392 = vmatpush1.bf16.msra.mxu0 %v4036
        %4393 = vmatprep.subr.bf16.mxu0 %v4045
        %4394 = vmatpush1.bf16.msra.mxu0 %v4044
        %4395 = vmatprep.subr.bf16.mxu0 %v4053
        %4396 = vmatpush1.bf16.msra.mxu0 %v4052
        %4397 = vmatprep.subr.bf16.mxu0 %v4061
        %4398 = vmatpush1.bf16.msra.mxu0 %v4060
        %4399 = vmatprep.subr.bf16.mxu0 %v4069
        %4400 = vmatpush1.bf16.msra.mxu0 %v4068
        %4401 = vmatprep.subr.bf16.mxu0 %v4077
        %4402 = vmatpush1.bf16.msra.mxu0 %v4076
        %4403 = vmatprep.subr.bf16.mxu0 %v4085
        %4404 = vmatpush1.bf16.msra.mxu0 %v4084
        %4405 = vmatprep.mubr.bf16.mxu0 %v3557
        %4406 = vmatmul.mubr.bf16.gmra.mrb[0].mxu0 %v3550
        %v4407 = vpop.f32.mrb[0].mxu0
        %v4408 = vadd.f32 0.0, %v4407
        %v4409 = vpop.f32.mrb[0].mxu0
        %v4410 = vadd.f32 0.0, %v4409
        %v4411 = vpop.f32.mrb[0].mxu0
        %v4412 = vadd.f32 0.0, %v4411
        %v4413 = vpop.f32.mrb[0].mxu0
        %v4414 = vadd.f32 0.0, %v4413
        %4415 = vmatprep.mubr.bf16.mxu0 %v3569
        %4416 = vmatmul.mubr.bf16.gmra.mrb[0].mxu0 %v3563
        %v4417 = vpop.f32.mrb[0].mxu0
        %v4418 = vadd.f32 0.0, %v4417
        %v4419 = vpop.f32.mrb[0].mxu0
        %v4420 = vadd.f32 0.0, %v4419
        %v4421 = vpop.f32.mrb[0].mxu0
        %v4422 = vadd.f32 0.0, %v4421
        %v4423 = vpop.f32.mrb[0].mxu0
        %v4424 = vadd.f32 0.0, %v4423
        %4425 = vdwg.mxu0
        %v4426 = vadd.f32 %v3511, %v4249
        %v4427 = vadd.f32 %v3512, %v4251
        %v4428 = vadd.f32 %v3513, %v4302
        %v4429 = vadd.f32 %v3514, %v4304
        %v4430 = vadd.f32 %v3515, %v4355
        %v4431 = vadd.f32 %v3516, %v4357
        %v4432 = vadd.f32 %v3517, %v4408
        %v4433 = vadd.f32 %v3518, %v4410
        %v4434 = vadd.f32 %v3519, %v4253
        %v4435 = vadd.f32 %v3520, %v4255
        %v4436 = vadd.f32 %v3521, %v4306
        %v4437 = vadd.f32 %v3522, %v4308
        %v4438 = vadd.f32 %v3523, %v4359
        %v4439 = vadd.f32 %v3524, %v4361
        %v4440 = vadd.f32 %v3525, %v4412
        %v4441 = vadd.f32 %v3526, %v4414
        %v4442 = vadd.f32 %v3527, %v4259
        %v4443 = vadd.f32 %v3528, %v4261
        %v4444 = vadd.f32 %v3529, %v4312
        %v4445 = vadd.f32 %v3530, %v4314
        %v4446 = vadd.f32 %v3531, %v4365
        %v4447 = vadd.f32 %v3532, %v4367
        %v4448 = vadd.f32 %v3533, %v4418
        %v4449 = vadd.f32 %v3534, %v4420
        %v4450 = vadd.f32 %v3535, %v4263
        %v4451 = vadd.f32 %v3536, %v4265
        %v4452 = vadd.f32 %v3537, %v4316
        %v4453 = vadd.f32 %v3538, %v4318
        %v4454 = vadd.f32 %v3539, %v4369
        %v4455 = vadd.f32 %v3540, %v4371
        %v4456 = vadd.f32 %v3541, %v4422
        %v4457 = vadd.f32 %v3542, %v4424
        %v4458 = vmul.f32 %v4426, %v4426
        %v4459 = vmul.f32 %v4427, %v4427
        %v4460 = vmul.f32 %v4428, %v4428
        %v4461 = vmul.f32 %v4429, %v4429
        %v4462 = vmul.f32 %v4434, %v4434
        %v4463 = vmul.f32 %v4435, %v4435
        %v4464 = vmul.f32 %v4436, %v4436
        %v4465 = vmul.f32 %v4437, %v4437
        %v4466 = vmul.f32 %v4442, %v4442
        %v4467 = vmul.f32 %v4443, %v4443
        %v4468 = vmul.f32 %v4444, %v4444
        %v4469 = vmul.f32 %v4445, %v4445
        %v4470 = vmul.f32 %v4450, %v4450
        %v4471 = vmul.f32 %v4451, %v4451
        %v4472 = vmul.f32 %v4452, %v4452
        %v4473 = vmul.f32 %v4453, %v4453
        %v4474 = vmul.f32 %v4430, %v4430
        %v4475 = vmul.f32 %v4431, %v4431
        %v4476 = vmul.f32 %v4432, %v4432
        %v4477 = vmul.f32 %v4433, %v4433
        %v4478 = vmul.f32 %v4438, %v4438
        %v4479 = vmul.f32 %v4439, %v4439
        %v4480 = vmul.f32 %v4440, %v4440
        %v4481 = vmul.f32 %v4441, %v4441
        %v4482 = vmul.f32 %v4446, %v4446
        %v4483 = vmul.f32 %v4447, %v4447
        %v4484 = vmul.f32 %v4448, %v4448
        %v4485 = vmul.f32 %v4449, %v4449
        %v4486 = vmul.f32 %v4454, %v4454
        %v4487 = vmul.f32 %v4455, %v4455
        %v4488 = vmul.f32 %v4456, %v4456
        %v4489 = vmul.f32 %v4457, %v4457
        %v4490 = vadd.f32 %v4458, %v4474
        %v4491 = vadd.f32 %v4459, %v4475
        %v4492 = vadd.f32 %v4460, %v4476
        %v4493 = vadd.f32 %v4461, %v4477
        %v4494 = vadd.f32 %v4462, %v4478
        %v4495 = vadd.f32 %v4463, %v4479
        %v4496 = vadd.f32 %v4464, %v4480
        %v4497 = vadd.f32 %v4465, %v4481
        %v4498 = vadd.f32 %v4466, %v4482
        %v4499 = vadd.f32 %v4467, %v4483
        %v4500 = vadd.f32 %v4468, %v4484
        %v4501 = vadd.f32 %v4469, %v4485
        %v4502 = vadd.f32 %v4470, %v4486
        %v4503 = vadd.f32 %v4471, %v4487
        %v4504 = vadd.f32 %v4472, %v4488
        %v4505 = vadd.f32 %v4473, %v4489
        %v4506 = vrsqrt.pop %v4490
        %v4507 = vmul.f32 %v4490, %v4506
        %vm4508 = vcmp.eq.f32.partialorder %v4490, inf
        %v4509 = vsel %vm4508, %v4490, %v4507
        %vm4510 = vcmp.eq.f32.partialorder %v4490, 0.0
        %v4511 = vand.u32 %v4490, 2147483648
        %v4512 = vsel %vm4510, %v4511, %v4509
        %v4513 = vrsqrt.pop %v4491
        %v4514 = vmul.f32 %v4491, %v4513
        %vm4515 = vcmp.eq.f32.partialorder %v4491, inf
        %v4516 = vsel %vm4515, %v4491, %v4514
        %vm4517 = vcmp.eq.f32.partialorder %v4491, 0.0
        %v4518 = vand.u32 %v4491, 2147483648
        %v4519 = vsel %vm4517, %v4518, %v4516
        %v4520 = vrsqrt.pop %v4492
        %v4521 = vmul.f32 %v4492, %v4520
        %vm4522 = vcmp.eq.f32.partialorder %v4492, inf
        %v4523 = vsel %vm4522, %v4492, %v4521
        %vm4524 = vcmp.eq.f32.partialorder %v4492, 0.0
        %v4525 = vand.u32 %v4492, 2147483648
        %v4526 = vsel %vm4524, %v4525, %v4523
        %v4527 = vrsqrt.pop %v4493
        %v4528 = vmul.f32 %v4493, %v4527
        %vm4529 = vcmp.eq.f32.partialorder %v4493, inf
        %v4530 = vsel %vm4529, %v4493, %v4528
        %vm4531 = vcmp.eq.f32.partialorder %v4493, 0.0
        %v4532 = vand.u32 %v4493, 2147483648
        %v4533 = vsel %vm4531, %v4532, %v4530
        %v4534 = vrsqrt.pop %v4494
        %v4535 = vmul.f32 %v4494, %v4534
        %vm4536 = vcmp.eq.f32.partialorder %v4494, inf
        %v4537 = vsel %vm4536, %v4494, %v4535
        %vm4538 = vcmp.eq.f32.partialorder %v4494, 0.0
        %v4539 = vand.u32 %v4494, 2147483648
        %v4540 = vsel %vm4538, %v4539, %v4537
        %v4541 = vrsqrt.pop %v4495
        %v4542 = vmul.f32 %v4495, %v4541
        %vm4543 = vcmp.eq.f32.partialorder %v4495, inf
        %v4544 = vsel %vm4543, %v4495, %v4542
        %vm4545 = vcmp.eq.f32.partialorder %v4495, 0.0
        %v4546 = vand.u32 %v4495, 2147483648
        %v4547 = vsel %vm4545, %v4546, %v4544
        %v4548 = vrsqrt.pop %v4496
        %v4549 = vmul.f32 %v4496, %v4548
        %vm4550 = vcmp.eq.f32.partialorder %v4496, inf
        %v4551 = vsel %vm4550, %v4496, %v4549
        %vm4552 = vcmp.eq.f32.partialorder %v4496, 0.0
        %v4553 = vand.u32 %v4496, 2147483648
        %v4554 = vsel %vm4552, %v4553, %v4551
        %v4555 = vrsqrt.pop %v4497
        %v4556 = vmul.f32 %v4497, %v4555
        %vm4557 = vcmp.eq.f32.partialorder %v4497, inf
        %v4558 = vsel %vm4557, %v4497, %v4556
        %vm4559 = vcmp.eq.f32.partialorder %v4497, 0.0
        %v4560 = vand.u32 %v4497, 2147483648
        %v4561 = vsel %vm4559, %v4560, %v4558
        %v4562 = vrsqrt.pop %v4498
        %v4563 = vmul.f32 %v4498, %v4562
        %vm4564 = vcmp.eq.f32.partialorder %v4498, inf
        %v4565 = vsel %vm4564, %v4498, %v4563
        %vm4566 = vcmp.eq.f32.partialorder %v4498, 0.0
        %v4567 = vand.u32 %v4498, 2147483648
        %v4568 = vsel %vm4566, %v4567, %v4565
        %v4569 = vrsqrt.pop %v4499
        %v4570 = vmul.f32 %v4499, %v4569
        %vm4571 = vcmp.eq.f32.partialorder %v4499, inf
        %v4572 = vsel %vm4571, %v4499, %v4570
        %vm4573 = vcmp.eq.f32.partialorder %v4499, 0.0
        %v4574 = vand.u32 %v4499, 2147483648
        %v4575 = vsel %vm4573, %v4574, %v4572
        %v4576 = vrsqrt.pop %v4500
        %v4577 = vmul.f32 %v4500, %v4576
        %vm4578 = vcmp.eq.f32.partialorder %v4500, inf
        %v4579 = vsel %vm4578, %v4500, %v4577
        %vm4580 = vcmp.eq.f32.partialorder %v4500, 0.0
        %v4581 = vand.u32 %v4500, 2147483648
        %v4582 = vsel %vm4580, %v4581, %v4579
        %v4583 = vrsqrt.pop %v4501
        %v4584 = vmul.f32 %v4501, %v4583
        %vm4585 = vcmp.eq.f32.partialorder %v4501, inf
        %v4586 = vsel %vm4585, %v4501, %v4584
        %vm4587 = vcmp.eq.f32.partialorder %v4501, 0.0
        %v4588 = vand.u32 %v4501, 2147483648
        %v4589 = vsel %vm4587, %v4588, %v4586
        %v4590 = vrsqrt.pop %v4502
        %v4591 = vmul.f32 %v4502, %v4590
        %vm4592 = vcmp.eq.f32.partialorder %v4502, inf
        %v4593 = vsel %vm4592, %v4502, %v4591
        %vm4594 = vcmp.eq.f32.partialorder %v4502, 0.0
        %v4595 = vand.u32 %v4502, 2147483648
        %v4596 = vsel %vm4594, %v4595, %v4593
        %v4597 = vrsqrt.pop %v4503
        %v4598 = vmul.f32 %v4503, %v4597
        %vm4599 = vcmp.eq.f32.partialorder %v4503, inf
        %v4600 = vsel %vm4599, %v4503, %v4598
        %vm4601 = vcmp.eq.f32.partialorder %v4503, 0.0
        %v4602 = vand.u32 %v4503, 2147483648
        %v4603 = vsel %vm4601, %v4602, %v4600
        %v4604 = vrsqrt.pop %v4504
        %v4605 = vmul.f32 %v4504, %v4604
        %vm4606 = vcmp.eq.f32.partialorder %v4504, inf
        %v4607 = vsel %vm4606, %v4504, %v4605
        %vm4608 = vcmp.eq.f32.partialorder %v4504, 0.0
        %v4609 = vand.u32 %v4504, 2147483648
        %v4610 = vsel %vm4608, %v4609, %v4607
        %v4611 = vrsqrt.pop %v4505
        %v4612 = vmul.f32 %v4505, %v4611
        %vm4613 = vcmp.eq.f32.partialorder %v4505, inf
        %v4614 = vsel %vm4613, %v4505, %v4612
        %vm4615 = vcmp.eq.f32.partialorder %v4505, 0.0
        %v4616 = vand.u32 %v4505, 2147483648
        %v4617 = vsel %vm4615, %v4616, %v4614
        %v4618 = vpack.c.bf16 %v4540, %v4512
        %v4619 = vpack.c.bf16 %v4547, %v4519
        %v4620 = vpack.c.bf16 %v4554, %v4526
        %v4621 = vpack.c.bf16 %v4561, %v4533
        %v4622 = vpack.c.bf16 %v4596, %v4568
        %v4623 = vpack.c.bf16 %v4603, %v4575
        %v4624 = vpack.c.bf16 %v4610, %v4582
        %v4625 = vpack.c.bf16 %v4617, %v4589
        %v4626 = vld [vmem:[#allocation4] sm:$0xf]
        %v4627 = vld [vmem:[#allocation4 + $0x4] sm:$0xf]
        %v4628 = vld [vmem:[#allocation4 + $0x8] sm:$0xf]
        %v4629 = vld [vmem:[#allocation4 + $0xc] sm:$0xf]
        %v4630 = vld [vmem:[#allocation4 + $0x10] sm:$0xf]
        %v4631 = vld [vmem:[#allocation4 + $0x14] sm:$0xf]
        %v4632 = vld [vmem:[#allocation4 + $0x18] sm:$0xf]
        %v4633 = vld [vmem:[#allocation4 + $0x1c] sm:$0xf]
        %v4634 = vld [vmem:[#allocation4 + $0x20] sm:$0xf]
        %v4635 = vld [vmem:[#allocation4 + $0x24] sm:$0xf]
        %v4636 = vld [vmem:[#allocation4 + $0x28] sm:$0xf]
        %v4637 = vld [vmem:[#allocation4 + $0x2c] sm:$0xf]
        %v4638 = vld [vmem:[#allocation4 + $0x30] sm:$0xf]
        %v4639 = vld [vmem:[#allocation4 + $0x34] sm:$0xf]
        %v4640 = vld [vmem:[#allocation4 + $0x38] sm:$0xf]
        %v4641 = vld [vmem:[#allocation4 + $0x3c] sm:$0xf]
        %v4642 = vld [vmem:[#allocation4 + $0x40] sm:$0xf]
        %v4643 = vld [vmem:[#allocation4 + $0x44] sm:$0xf]
        %v4644 = vld [vmem:[#allocation4 + $0x48] sm:$0xf]
        %v4645 = vld [vmem:[#allocation4 + $0x4c] sm:$0xf]
        %v4646 = vld [vmem:[#allocation4 + $0x50] sm:$0xf]
        %v4647 = vld [vmem:[#allocation4 + $0x54] sm:$0xf]
        %v4648 = vld [vmem:[#allocation4 + $0x58] sm:$0xf]
        %v4649 = vld [vmem:[#allocation4 + $0x5c] sm:$0xf]
        %v4650 = vld [vmem:[#allocation4 + $0x60] sm:$0xf]
        %v4651 = vld [vmem:[#allocation4 + $0x64] sm:$0xf]
        %v4652 = vld [vmem:[#allocation4 + $0x68] sm:$0xf]
        %v4653 = vld [vmem:[#allocation4 + $0x6c] sm:$0xf]
        %v4654 = vld [vmem:[#allocation4 + $0x70] sm:$0xf]
        %v4655 = vld [vmem:[#allocation4 + $0x74] sm:$0xf]
        %v4656 = vld [vmem:[#allocation4 + $0x78] sm:$0xf]
        %v4657 = vld [vmem:[#allocation4 + $0x7c] sm:$0xf]
        %v4658 = vld [vmem:[#allocation4 + $0x80] sm:$0xf]
        %v4659 = vld [vmem:[#allocation4 + $0x84] sm:$0xf]
        %v4660 = vld [vmem:[#allocation4 + $0x88] sm:$0xf]
        %v4661 = vld [vmem:[#allocation4 + $0x8c] sm:$0xf]
        %v4662 = vld [vmem:[#allocation4 + $0x90] sm:$0xf]
        %v4663 = vld [vmem:[#allocation4 + $0x94] sm:$0xf]
        %v4664 = vld [vmem:[#allocation4 + $0x98] sm:$0xf]
        %v4665 = vld [vmem:[#allocation4 + $0x9c] sm:$0xf]
        %v4666 = vld [vmem:[#allocation4 + $0xa0] sm:$0xf]
        %v4667 = vld [vmem:[#allocation4 + $0xa4] sm:$0xf]
        %v4668 = vld [vmem:[#allocation4 + $0xa8] sm:$0xf]
        %v4669 = vld [vmem:[#allocation4 + $0xac] sm:$0xf]
        %v4670 = vld [vmem:[#allocation4 + $0xb0] sm:$0xf]
        %v4671 = vld [vmem:[#allocation4 + $0xb4] sm:$0xf]
        %v4672 = vld [vmem:[#allocation4 + $0xb8] sm:$0xf]
        %v4673 = vld [vmem:[#allocation4 + $0xbc] sm:$0xf]
        %v4674 = vld [vmem:[#allocation4 + $0xc0] sm:$0xf]
        %v4675 = vld [vmem:[#allocation4 + $0xc4] sm:$0xf]
        %v4676 = vld [vmem:[#allocation4 + $0xc8] sm:$0xf]
        %v4677 = vld [vmem:[#allocation4 + $0xcc] sm:$0xf]
        %v4678 = vld [vmem:[#allocation4 + $0xd0] sm:$0xf]
        %v4679 = vld [vmem:[#allocation4 + $0xd4] sm:$0xf]
        %v4680 = vld [vmem:[#allocation4 + $0xd8] sm:$0xf]
        %v4681 = vld [vmem:[#allocation4 + $0xdc] sm:$0xf]
        %v4682 = vld [vmem:[#allocation4 + $0xe0] sm:$0xf]
        %v4683 = vld [vmem:[#allocation4 + $0xe4] sm:$0xf]
        %v4684 = vld [vmem:[#allocation4 + $0xe8] sm:$0xf]
        %v4685 = vld [vmem:[#allocation4 + $0xec] sm:$0xf]
        %v4686 = vld [vmem:[#allocation4 + $0xf0] sm:$0xf]
        %v4687 = vld [vmem:[#allocation4 + $0xf4] sm:$0xf]
        %v4688 = vld [vmem:[#allocation4 + $0xf8] sm:$0xf]
        %v4689 = vld [vmem:[#allocation4 + $0xfc] sm:$0xf]
        %v4754 = vunpack.c.l.b16 %v4626
        %v4755 = vunpack.c.l.b16 %v4627
        %v4756 = vunpack.c.l.b16 %v4628
        %v4757 = vunpack.c.l.b16 %v4629
        %v4758 = vunpack.c.l.b16 %v4630
        %v4759 = vunpack.c.l.b16 %v4631
        %v4760 = vunpack.c.l.b16 %v4632
        %v4761 = vunpack.c.l.b16 %v4633
        %v4762 = vunpack.c.l.b16 %v4634
        %v4763 = vunpack.c.l.b16 %v4635
        %v4764 = vunpack.c.l.b16 %v4636
        %v4765 = vunpack.c.l.b16 %v4637
        %v4766 = vunpack.c.l.b16 %v4638
        %v4767 = vunpack.c.l.b16 %v4639
        %v4768 = vunpack.c.l.b16 %v4640
        %v4769 = vunpack.c.l.b16 %v4641
        %v4770 = vunpack.c.l.b16 %v4642
        %v4771 = vunpack.c.l.b16 %v4643
        %v4772 = vunpack.c.l.b16 %v4644
        %v4773 = vunpack.c.l.b16 %v4645
        %v4774 = vunpack.c.l.b16 %v4646
        %v4775 = vunpack.c.l.b16 %v4647
        %v4776 = vunpack.c.l.b16 %v4648
        %v4777 = vunpack.c.l.b16 %v4649
        %v4778 = vunpack.c.l.b16 %v4650
        %v4779 = vunpack.c.l.b16 %v4651
        %v4780 = vunpack.c.l.b16 %v4652
        %v4781 = vunpack.c.l.b16 %v4653
        %v4782 = vunpack.c.l.b16 %v4654
        %v4783 = vunpack.c.l.b16 %v4655
        %v4784 = vunpack.c.l.b16 %v4656
        %v4785 = vunpack.c.l.b16 %v4657
        %v4786 = vunpack.c.l.b16 %v4658
        %v4787 = vunpack.c.l.b16 %v4659
        %v4788 = vunpack.c.l.b16 %v4660
        %v4789 = vunpack.c.l.b16 %v4661
        %v4790 = vunpack.c.l.b16 %v4662
        %v4791 = vunpack.c.l.b16 %v4663
        %v4792 = vunpack.c.l.b16 %v4664
        %v4793 = vunpack.c.l.b16 %v4665
        %v4794 = vunpack.c.l.b16 %v4666
        %v4795 = vunpack.c.l.b16 %v4667
        %v4796 = vunpack.c.l.b16 %v4668
        %v4797 = vunpack.c.l.b16 %v4669
        %v4798 = vunpack.c.l.b16 %v4670
        %v4799 = vunpack.c.l.b16 %v4671
        %v4800 = vunpack.c.l.b16 %v4672
        %v4801 = vunpack.c.l.b16 %v4673
        %v4802 = vunpack.c.l.b16 %v4674
        %v4803 = vunpack.c.l.b16 %v4675
        %v4804 = vunpack.c.l.b16 %v4676
        %v4805 = vunpack.c.l.b16 %v4677
        %v4806 = vunpack.c.l.b16 %v4678
        %v4807 = vunpack.c.l.b16 %v4679
        %v4808 = vunpack.c.l.b16 %v4680
        %v4809 = vunpack.c.l.b16 %v4681
        %v4810 = vunpack.c.l.b16 %v4682
        %v4811 = vunpack.c.l.b16 %v4683
        %v4812 = vunpack.c.l.b16 %v4684
        %v4813 = vunpack.c.l.b16 %v4685
        %v4814 = vunpack.c.l.b16 %v4686
        %v4815 = vunpack.c.l.b16 %v4687
        %v4816 = vunpack.c.l.b16 %v4688
        %v4817 = vunpack.c.l.b16 %v4689
        %v4818 = vpack.c.b16 %v4755, %v4754
        %v4819 = vpack.c.b16 %v4757, %v4756
        %v4820 = vpack.c.b16 %v4759, %v4758
        %v4821 = vpack.c.b16 %v4761, %v4760
        %v4822 = vpack.c.b16 %v4763, %v4762
        %v4823 = vpack.c.b16 %v4765, %v4764
        %v4824 = vpack.c.b16 %v4767, %v4766
        %v4825 = vpack.c.b16 %v4769, %v4768
        %v4826 = vpack.c.b16 %v4771, %v4770
        %v4827 = vpack.c.b16 %v4773, %v4772
        %v4828 = vpack.c.b16 %v4775, %v4774
        %v4829 = vpack.c.b16 %v4777, %v4776
        %v4830 = vpack.c.b16 %v4779, %v4778
        %v4831 = vpack.c.b16 %v4781, %v4780
        %v4832 = vpack.c.b16 %v4783, %v4782
        %v4833 = vpack.c.b16 %v4785, %v4784
        %v4834 = vpack.c.b16 %v4787, %v4786
        %v4835 = vpack.c.b16 %v4789, %v4788
        %v4836 = vpack.c.b16 %v4791, %v4790
        %v4837 = vpack.c.b16 %v4793, %v4792
        %v4838 = vpack.c.b16 %v4795, %v4794
        %v4839 = vpack.c.b16 %v4797, %v4796
        %v4840 = vpack.c.b16 %v4799, %v4798
        %v4841 = vpack.c.b16 %v4801, %v4800
        %v4842 = vpack.c.b16 %v4803, %v4802
        %v4843 = vpack.c.b16 %v4805, %v4804
        %v4844 = vpack.c.b16 %v4807, %v4806
        %v4845 = vpack.c.b16 %v4809, %v4808
        %v4846 = vpack.c.b16 %v4811, %v4810
        %v4847 = vpack.c.b16 %v4813, %v4812
        %v4848 = vpack.c.b16 %v4815, %v4814
        %v4849 = vpack.c.b16 %v4817, %v4816
        %4882 = vmatprep.subr.bf16.mxu0 0
        %4883 = vmatpush1.bf16.msra.mxu0 %v4818
        %4884 = vmatprep.subr.bf16.mxu0 0
        %4885 = vmatpush1.bf16.msra.mxu0 %v4819
        %4886 = vmatprep.subr.bf16.mxu0 0
        %4887 = vmatpush1.bf16.msra.mxu0 %v4820
        %4888 = vmatprep.subr.bf16.mxu0 0
        %4889 = vmatpush1.bf16.msra.mxu0 %v4821
        %4890 = vmatprep.subr.bf16.mxu0 0
        %4891 = vmatpush1.bf16.msra.mxu0 %v4822
        %4892 = vmatprep.subr.bf16.mxu0 0
        %4893 = vmatpush1.bf16.msra.mxu0 %v4823
        %4894 = vmatprep.subr.bf16.mxu0 0
        %4895 = vmatpush1.bf16.msra.mxu0 %v4824
        %4896 = vmatprep.subr.bf16.mxu0 0
        %4897 = vmatpush1.bf16.msra.mxu0 %v4825
        %4898 = vmatprep.subr.bf16.mxu0 0
        %4899 = vmatpush1.bf16.msra.mxu0 %v4826
        %4900 = vmatprep.subr.bf16.mxu0 0
        %4901 = vmatpush1.bf16.msra.mxu0 %v4827
        %4902 = vmatprep.subr.bf16.mxu0 0
        %4903 = vmatpush1.bf16.msra.mxu0 %v4828
        %4904 = vmatprep.subr.bf16.mxu0 0
        %4905 = vmatpush1.bf16.msra.mxu0 %v4829
        %4906 = vmatprep.subr.bf16.mxu0 0
        %4907 = vmatpush1.bf16.msra.mxu0 %v4830
        %4908 = vmatprep.subr.bf16.mxu0 0
        %4909 = vmatpush1.bf16.msra.mxu0 %v4831
        %4910 = vmatprep.subr.bf16.mxu0 0
        %4911 = vmatpush1.bf16.msra.mxu0 %v4832
        %4912 = vmatprep.subr.bf16.mxu0 0
        %4913 = vmatpush1.bf16.msra.mxu0 %v4833
        %4914 = vmatprep.mubr.bf16.mxu0 %v4619
        %4915 = vmatmul.mubr.bf16.gmra.mrb[0].mxu0 %v4618
        %v4916 = vpop.f32.mrb[0].mxu0
        %v4917 = vadd.f32 1e-05, %v4916
        %v4918 = vpop.f32.mrb[0].mxu0
        %v4919 = vpop.f32.mrb[0].mxu0
        %v4920 = vadd.f32 1e-05, %v4919
        %v4921 = vpop.f32.mrb[0].mxu0
        %4922 = vmatprep.mubr.bf16.mxu0 %v4623
        %4923 = vmatmul.mubr.bf16.gmra.mrb[0].mxu0 %v4622
        %v4924 = vpop.f32.mrb[0].mxu0
        %v4925 = vadd.f32 1e-05, %v4924
        %v4926 = vpop.f32.mrb[0].mxu0
        %v4927 = vpop.f32.mrb[0].mxu0
        %v4928 = vadd.f32 1e-05, %v4927
        %v4929 = vpop.f32.mrb[0].mxu0
        %4930 = vdwg.mxu0
        %4931 = vmatprep.subr.bf16.mxu0 0
        %4932 = vmatpush1.bf16.msra.mxu0 %v4834
        %4933 = vmatprep.subr.bf16.mxu0 0
        %4934 = vmatpush1.bf16.msra.mxu0 %v4835
        %4935 = vmatprep.subr.bf16.mxu0 0
        %4936 = vmatpush1.bf16.msra.mxu0 %v4836
        %4937 = vmatprep.subr.bf16.mxu0 0
        %4938 = vmatpush1.bf16.msra.mxu0 %v4837
        %4939 = vmatprep.subr.bf16.mxu0 0
        %4940 = vmatpush1.bf16.msra.mxu0 %v4838
        %4941 = vmatprep.subr.bf16.mxu0 0
        %4942 = vmatpush1.bf16.msra.mxu0 %v4839
        %4943 = vmatprep.subr.bf16.mxu0 0
        %4944 = vmatpush1.bf16.msra.mxu0 %v4840
        %4945 = vmatprep.subr.bf16.mxu0 0
        %4946 = vmatpush1.bf16.msra.mxu0 %v4841
        %4947 = vmatprep.subr.bf16.mxu0 0
        %4948 = vmatpush1.bf16.msra.mxu0 %v4842
        %4949 = vmatprep.subr.bf16.mxu0 0
        %4950 = vmatpush1.bf16.msra.mxu0 %v4843
        %4951 = vmatprep.subr.bf16.mxu0 0
        %4952 = vmatpush1.bf16.msra.mxu0 %v4844
        %4953 = vmatprep.subr.bf16.mxu0 0
        %4954 = vmatpush1.bf16.msra.mxu0 %v4845
        %4955 = vmatprep.subr.bf16.mxu0 0
        %4956 = vmatpush1.bf16.msra.mxu0 %v4846
        %4957 = vmatprep.subr.bf16.mxu0 0
        %4958 = vmatpush1.bf16.msra.mxu0 %v4847
        %4959 = vmatprep.subr.bf16.mxu0 0
        %4960 = vmatpush1.bf16.msra.mxu0 %v4848
        %4961 = vmatprep.subr.bf16.mxu0 0
        %4962 = vmatpush1.bf16.msra.mxu0 %v4849
        %4963 = vmatprep.mubr.bf16.mxu0 %v4621
        %4964 = vmatmul.mubr.bf16.gmra.mrb[0].mxu0 %v4620
        %v4965 = vpop.f32.mrb[0].mxu0
        %v4966 = vadd.f32 %v4917, %v4965
        %v4967 = vpop.f32.mrb[0].mxu0
        %v4968 = vpop.f32.mrb[0].mxu0
        %v4969 = vadd.f32 %v4920, %v4968
        %v4970 = vpop.f32.mrb[0].mxu0
        %4971 = vmatprep.mubr.bf16.mxu0 %v4625
        %4972 = vmatmul.mubr.bf16.gmra.mrb[0].mxu0 %v4624
        %v4973 = vpop.f32.mrb[0].mxu0
        %v4974 = vadd.f32 %v4925, %v4973
        %v4975 = vpop.f32.mrb[0].mxu0
        %v4976 = vpop.f32.mrb[0].mxu0
        %v4977 = vadd.f32 %v4928, %v4976
        %v4978 = vpop.f32.mrb[0].mxu0
        %4979 = vdwg.mxu0
        %v4980 = vlog2.pop %v4966
        %v4981 = vmul.f32 %v4980, 0.6931472
        %v4982 = vlog2.pop %v4969
        %v4983 = vmul.f32 %v4982, 0.6931472
        %v4984 = vlog2.pop %v4974
        %v4985 = vmul.f32 %v4984, 0.6931472
        %v4986 = vlog2.pop %v4977
        %v4987 = vmul.f32 %v4986, 0.6931472
        %v4988 = vmul.f32 %v4981, 0.4342945
        %v4989 = vmul.f32 %v4983, 0.4342945
        %v4990 = vmul.f32 %v4985, 0.4342945
        %v4991 = vmul.f32 %v4987, 0.4342945
        %v4992 = vmul.f32 %v4988, 20.0
        %v4993 = vmul.f32 %v4989, 20.0
        %v4994 = vmul.f32 %v4990, 20.0
        %v4995 = vmul.f32 %v4991, 20.0
        %4996 = vst [vmem:[%s346] sm:$0xff] %v4992
        %4997 = vst [vmem:[%s346 + $0x8] sm:$0xff] %v4993
        %4998 = vst [vmem:[%s346 + $0x10] sm:$0xff] %v4994
        %4999 = vst [vmem:[%s346 + $0x18] sm:$0xff] %v4995
        %s5000 = smul.u32 4, %s22
        %p5001 = scmp.lt.s32.totalorder %s21, 1
        %s5002 = scalar_select %p5001, %s21, 1
        %p5003 = scmp.lt.s32.totalorder %s5000, 3
        %s5004 = scalar_select %p5003, %s5000, 3
        %s5005 = smul.addr %s5002, 4
        %s5006 = sadd.s32 %s5004, %s5005
        %s5007 = smul.addr %s5006, 8
        %s5008 = scalar_lea.vmem %s4, %s5007
        // Predicated region
        $region45: #{uap_forward.1} parent=35 // pred_check
          %p5009 = pneg %p151
        $region46: #{uap_forward.1} parent=35 // pred_check_branch
          %5011 = sbr.rel (%p5009) target = $region48
        $region47: #{uap_forward.1} parent=35 // pred_region
          %s5012 = smul.u32 4, %s22
        $region48: #{uap_forward.1} parent=35 // pred_fallthru
          _
      $region36: #{uap_forward.1} parent=5 // pred_fallthru
        _
      %p5013 = scmp.le.s32.totalorder 2, %s12
      // Predicated region
      $region49: #{uap_forward.1} parent=5 // pred_check
        %p5014 = pneg %p5013
      $region50: #{uap_forward.1} parent=5 // pred_check_branch
        %5016 = sbr.rel (%p5014) target = $region52
      $region51: #{uap_forward.1} parent=5 // pred_region
        %s5017 = ssub.s32 %s12, 2
        // Predicated region
        $region53: #{uap_forward.1} parent=51 // pred_check
          %p5018 = pneg %p157
        $region54: #{uap_forward.1} parent=51 // pred_check_branch
          %5020 = sbr.rel (%p5018) target = $region56
        $region55: #{uap_forward.1} parent=51 // pred_region
          %s5021 = smul.u32 4, %s24
          %p5022 = scmp.lt.s32.totalorder %s23, 1
          %s5023 = scalar_select %p5022, %s23, 1
          %p5024 = scmp.lt.s32.totalorder %s5021, 3
          %s5025 = scalar_select %p5024, %s5021, 3
          %s5026 = smul.addr %s5023, 4
          %s5027 = sadd.s32 %s5025, %s5026
          %s5028 = smul.addr %s5027, 8
          %s5029 = scalar_lea.vmem %s4, %s5028
        $region56: #{uap_forward.1} parent=51 // pred_fallthru
          _
      $region52: #{uap_forward.1} parent=5 // pred_fallthru
        _
    $region6: #{uap_forward.1} parent=1 // loop_footer
      %s16 = sadd.s32 1, %s12
    $region7: #{uap_forward.1} parent=1 // loop_footer_branch
      %11 = sbr.rel target = $region3
    $region8: #{uap_forward.1} parent=1 // loop_exit
      _
    %5030 = vsyncpa [#allocation3], 1
    %s5031 = scalar_lea.sflag [#allocation3], 1
    %5032 = vsyncpa %s5031, 1
    %5033 = vsyncpa [#allocation5], 1

</llo_original>
